<compile_context>
chip_gen: v7x
topology: tpu7x:2x2x1
jax: 0.10.0
libtpu: 0.0.40
codegen_flags: <defaults>
</compile_context>

<pallas_src>
import functools

import jax
import jax.numpy as jnp
from jax.experimental import pallas as pl
from jax.experimental.pallas import tpu as pltpu

SELU_ALPHA = 1.6732632423543772
SELU_SCALE = 1.0507009873554805
BN_EPS = 1e-5


def _round_up(n, m):
    return ((n + m - 1) // m) * m


def _selu(z):
    # exp(min(z,0)) keeps the unselected branch finite for large positive z.
    return SELU_SCALE * jnp.where(
        z > 0.0, z, SELU_ALPHA * (jnp.exp(jnp.minimum(z, 0.0)) - 1.0)
    )


# ----------------------------------------------------------------------------
# Pallas kernel: all six (Linear + folded BN/bias [+ SELU]) layers fused
# ----------------------------------------------------------------------------
def _fused_autoencoder_kernel(*refs, acts):
    # refs = (x_ref, w1, b1, w2, b2, ..., w6, b6, o_ref)
    # x_ref: (tb, F) f32   wi: (Ki, Ni) bf16   bi: (1, Ni) f32   o_ref: (tb, F) f32
    x_ref = refs[0]
    o_ref = refs[-1]
    wb = refs[1:-1]

    h = x_ref[...]                                   # f32 activations, VMEM-resident
    for i, act in enumerate(acts):
        w_ref = wb[2 * i]
        b_ref = wb[2 * i + 1]
        z = jnp.dot(
            h.astype(jnp.bfloat16),                  # bf16 x bf16 on the MXU
            w_ref[...],
            preferred_element_type=jnp.float32,      # f32 accumulation
        )
        z = z + b_ref[...]                           # folded Linear bias + BN shift
        if act:
            z = _selu(z)
        # Dropout is identity in eval mode -> nothing to do.
        h = z
    o_ref[...] = h.astype(o_ref.dtype)


def autoencoder_forward(x, params, in_shape):
    """Fused 6-layer forward. params = [(w_bf16 (K,N), b_f32 (1,N), apply_selu), ...]."""
    B, F = x.shape
    f_pad = _round_up(F, 128)

    # Batch tiling: single step at small batch; 128-row tiles (parallel axis -> the
    # two v7x TensorCores each take half) once the batch is large.
    if B <= 128:
        b_pad = _round_up(B, 16)        # bf16 sublane tile = 16 rows
        tb = b_pad
    else:
        b_pad = _round_up(B, 128)
        tb = 128
    grid = (b_pad // tb,)

    x_pad = jnp.pad(x, ((0, b_pad - B), (0, f_pad - F)))

    flat_params = []
    acts = []
    in_specs = [pl.BlockSpec((tb, f_pad), lambda i: (i, 0))]      # activations (batch-tiled)
    for (w, b, act) in params:
        flat_params += [w, b]
        in_specs += [
            pl.BlockSpec(w.shape, lambda i: (0, 0)),              # weight: VMEM-resident
            pl.BlockSpec(b.shape, lambda i: (0, 0)),              # folded bias/BN shift
        ]
        acts.append(act)
    n_out = params[-1][0].shape[1]                                # padded output width

    kernel = functools.partial(_fused_autoencoder_kernel, acts=tuple(acts))

    out = pl.pallas_call(
        kernel,
        out_shape=jax.ShapeDtypeStruct((b_pad, n_out), jnp.float32),
        grid_spec=pltpu.PrefetchScalarGridSpec(
            num_scalar_prefetch=0,
            grid=grid,
            in_specs=in_specs,
            out_specs=pl.BlockSpec((tb, n_out), lambda i: (i, 0)),
        ),
        compiler_params=pltpu.CompilerParams(
            dimension_semantics=("parallel",),        # batch tiles are independent
            vmem_limit_bytes=16 * 1024 * 1024,        # ~6-7 MB actual footprint
        ),
    )(x_pad, *flat_params)
    return out[:B, :in_shape]


# ----------------------------------------------------------------------------
# Parameter construction: PyTorch-default-style init, BN folded, padded, bf16 weights
# ----------------------------------------------------------------------------
def _init_linear(key, fan_in, fan_out):
    kw, kb = jax.random.split(key)
    bound = 1.0 / float(fan_in) ** 0.5
    # stored as (in_features, out_features) so the kernel computes x @ W
    w = jax.random.uniform(kw, (fan_in, fan_out), jnp.float32, -bound, bound)
    b = jax.random.uniform(kb, (fan_out,), jnp.float32, -bound, bound)
    return w, b


def _init_bn(key, n):
    # Non-trivial (but deterministic) eval-mode BatchNorm1d parameters/buffers,
    # folded into per-feature scale/shift.
    kg, kb, km, kv = jax.random.split(key, 4)
    gamma = jax.random.uniform(kg, (n,), jnp.float32, 0.5, 1.5)
    beta = 0.1 * jax.random.normal(kb, (n,), jnp.float32)
    running_mean = 0.1 * jax.random.normal(km, (n,), jnp.float32)
    running_var = jax.random.uniform(kv, (n,), jnp.float32, 0.5, 1.5)
    scale = gamma * jax.lax.rsqrt(running_var + BN_EPS)
    shift = beta - running_mean * scale
    return scale, shift


def _build_layer(key, fan_in, fan_out, with_bn_selu):
    kl, kbn = jax.random.split(key)
    w, b = _init_linear(kl, fan_in, fan_out)
    if with_bn_selu:
        scale, shift = _init_bn(kbn, fan_out)
        w = w * scale[None, :]          # fold BN affine into the Linear weight
        b = b * scale + shift           # ... and into the bias
    k_pad = _round_up(fan_in, 128)
    n_pad = _round_up(fan_out, 128)
    # zero padding keeps padded features exactly zero through SELU and inert downstream
    w = jnp.pad(w, ((0, k_pad - fan_in), (0, n_pad - fan_out))).astype(jnp.bfloat16)
    b = jnp.pad(b, (0, n_pad - fan_out)).astype(jnp.float32).reshape(1, n_pad)
    return (w, b, with_bn_selu)


def build_autoencoder_params(key, in_shape, enc_shape, h1=1000, h2=500):
    # encoder: in -> 1000 -> 500 -> enc ; decoder: enc -> 1000 -> 500 -> in
    dims = [
        (in_shape, h1, True), (h1, h2, True), (h2, enc_shape, False),
        (enc_shape, h1, True), (h1, h2, True), (h2, in_shape, False),
    ]
    keys = jax.random.split(key, len(dims))
    return [_build_layer(k, fi, fo, act) for k, (fi, fo, act) in zip(keys, dims)]


# ----------------------------------------------------------------------------
# Pure-JAX references
# ----------------------------------------------------------------------------
def reference_forward_matched(x, params, in_shape):
    """Same numerics as the kernel (bf16 x bf16, f32 accumulation)."""
    B, F = x.shape
    f_pad = _round_up(F, 128)
    h = jnp.pad(x, ((0, 0), (0, f_pad - F)))
    for (w, b, act) in params:
        z = jnp.dot(h.astype(jnp.bfloat16), w,
                    preferred_element_type=jnp.float32) + b
        if act:
            z = _selu(z)
        h = z
    return h[:, :in_shape]


def reference_forward_f32(x, params, in_shape):
    """Full f32 / HIGHEST-precision reference (semantic sanity check only)."""
    B, F = x.shape
    f_pad = _round_up(F, 128)
    h = jnp.pad(x, ((0, 0), (0, f_pad - F)))
    for (w, b, act) in params:
        z = jnp.dot(h, w.astype(jnp.float32),
                    precision=jax.lax.Precision.HIGHEST) + b
        if act:
            z = _selu(z)
        h = z
    return h[:, :in_shape]


if __name__ == "__main__":
    # Small, deterministic configuration; hidden widths 1000/500 are the module's
    # hardcoded values (padded internally to 1024/512, enc 32 -> 128).
    batch = 8
    in_shape = 128
    enc_shape = 32

    root = jax.random.PRNGKey(0)
    k_x, k_p = jax.random.split(root)

    x = jax.random.normal(k_x, (batch, in_shape), jnp.float32)
    params = build_autoencoder_params(k_p, in_shape, enc_shape)

    out = jax.block_until_ready(autoencoder_forward(x, params, in_shape))
    assert out.shape == (batch, in_shape), out.shape

    # Tight check vs a pure-JAX reference with identical numerics (bf16 MXU path).
    ref = jax.block_until_ready(reference_forward_matched(x, params, in_shape))
    max_err = float(jnp.max(jnp.abs(out - ref)))
    assert jnp.allclose(out, ref, atol=1e-3, rtol=1e-3), f"mismatch vs matched ref: {max_err}"

    # Loose semantic check vs a full-f32 reference (bf16 activations/weights round-trip).
    ref32 = jax.block_until_ready(reference_forward_f32(x, params, in_shape))
    max_err32 = float(jnp.max(jnp.abs(out - ref32)))
    assert max_err32 < 0.25, f"gross mismatch vs f32 reference: {max_err32}"

    # TODO(synk): training-mode BatchNorm statistic updates and stochastic Dropout are not
    # implemented (eval-mode forward only, matching the inference semantics of the module).
    print("KERNEL_OK")
</pallas_src>

<mosaic_0001>
module attributes {stable_mosaic.version = 11 : i64} {
  func.func @_fused_autoencoder_kernel(%arg0: i32, %arg1: memref<16x128xf32, #tpu.memory_space<vmem>>, %arg2: memref<128x1024xbf16, #tpu.memory_space<vmem>>, %arg3: memref<1x1024xf32, #tpu.memory_space<vmem>>, %arg4: memref<1024x512xbf16, #tpu.memory_space<vmem>>, %arg5: memref<1x512xf32, #tpu.memory_space<vmem>>, %arg6: memref<512x128xbf16, #tpu.memory_space<vmem>>, %arg7: memref<1x128xf32, #tpu.memory_space<vmem>>, %arg8: memref<128x1024xbf16, #tpu.memory_space<vmem>>, %arg9: memref<1x1024xf32, #tpu.memory_space<vmem>>, %arg10: memref<1024x512xbf16, #tpu.memory_space<vmem>>, %arg11: memref<1x512xf32, #tpu.memory_space<vmem>>, %arg12: memref<512x128xbf16, #tpu.memory_space<vmem>>, %arg13: memref<1x128xf32, #tpu.memory_space<vmem>>, %arg14: memref<16x128xf32, #tpu.memory_space<vmem>>) attributes {dimension_semantics = [#tpu.dimension_semantics<parallel>], iteration_bounds = array<i64: 1>, scalar_prefetch = 0 : i64, scratch_operands = 0 : i64, tpu.core_type = #tpu.core_type<tc>, window_params = [{transform_indices = @transform_0, window_bounds = array<i64: 16, 128>}, {pipeline_mode = #tpu.pipeline_mode<synchronous>, transform_indices = @transform_1, window_bounds = array<i64: 128, 1024>}, {pipeline_mode = #tpu.pipeline_mode<synchronous>, transform_indices = @transform_2, window_bounds = array<i64: 1, 1024>}, {pipeline_mode = #tpu.pipeline_mode<synchronous>, transform_indices = @transform_3, window_bounds = array<i64: 1024, 512>}, {pipeline_mode = #tpu.pipeline_mode<synchronous>, transform_indices = @transform_4, window_bounds = array<i64: 1, 512>}, {pipeline_mode = #tpu.pipeline_mode<synchronous>, transform_indices = @transform_5, window_bounds = array<i64: 512, 128>}, {pipeline_mode = #tpu.pipeline_mode<synchronous>, transform_indices = @transform_6, window_bounds = array<i64: 1, 128>}, {pipeline_mode = #tpu.pipeline_mode<synchronous>, transform_indices = @transform_7, window_bounds = array<i64: 128, 1024>}, {pipeline_mode = #tpu.pipeline_mode<synchronous>, transform_indices = @transform_8, window_bounds = array<i64: 1, 1024>}, {pipeline_mode = #tpu.pipeline_mode<synchronous>, transform_indices = @transform_9, window_bounds = array<i64: 1024, 512>}, {pipeline_mode = #tpu.pipeline_mode<synchronous>, transform_indices = @transform_10, window_bounds = array<i64: 1, 512>}, {pipeline_mode = #tpu.pipeline_mode<synchronous>, transform_indices = @transform_11, window_bounds = array<i64: 512, 128>}, {pipeline_mode = #tpu.pipeline_mode<synchronous>, transform_indices = @transform_12, window_bounds = array<i64: 1, 128>}, {transform_indices = @transform_13, window_bounds = array<i64: 16, 128>}]} {
    %c0 = arith.constant 0 : index
    %c0_0 = arith.constant 0 : index
    %0 = vector.load %arg1[%c0, %c0_0] : memref<16x128xf32, #tpu.memory_space<vmem>>, vector<16x128xf32>
    %1 = arith.truncf %0 : vector<16x128xf32> to vector<16x128xbf16>
    %c0_1 = arith.constant 0 : index
    %c0_2 = arith.constant 0 : index
    %2 = vector.load %arg2[%c0_1, %c0_2] : memref<128x1024xbf16, #tpu.memory_space<vmem>>, vector<128x1024xbf16>
    %cst = arith.constant dense<0.000000e+00> : vector<16x1024xf32>
    %3 = tpu.matmul %1, %2, %cst {dimension_numbers = #tpu.dot_dimension_numbers<[1], [0], [0], [1], [0, 0, 1, 1], [], []>} : vector<16x128xbf16>, vector<128x1024xbf16>, vector<16x1024xf32> -> vector<16x1024xf32>
    %c0_3 = arith.constant 0 : index
    %c0_4 = arith.constant 0 : index
    %4 = vector.load %arg3[%c0_3, %c0_4] : memref<1x1024xf32, #tpu.memory_space<vmem>>, vector<1x1024xf32>
    %5 = vector.broadcast %4 : vector<1x1024xf32> to vector<16x1024xf32>
    %6 = arith.addf %3, %5 : vector<16x1024xf32>
    %cst_5 = arith.constant 0.000000e+00 : f32
    %7 = vector.broadcast %cst_5 : f32 to vector<16x1024xf32>
    %8 = arith.cmpf ogt, %6, %7 : vector<16x1024xf32>
    %cst_6 = arith.constant 0.000000e+00 : f32
    %9 = vector.broadcast %cst_6 : f32 to vector<16x1024xf32>
    %10 = arith.minimumf %6, %9 : vector<16x1024xf32>
    %11 = math.exp %10 : vector<16x1024xf32>
    %cst_7 = arith.constant 1.000000e+00 : f32
    %12 = vector.broadcast %cst_7 : f32 to vector<16x1024xf32>
    %13 = arith.subf %11, %12 : vector<16x1024xf32>
    %cst_8 = arith.constant 1.67326319 : f32
    %14 = vector.broadcast %cst_8 : f32 to vector<16x1024xf32>
    %15 = arith.mulf %14, %13 : vector<16x1024xf32>
    %16 = arith.select %8, %6, %15 : vector<16x1024xi1>, vector<16x1024xf32>
    %cst_9 = arith.constant 1.05070102 : f32
    %17 = vector.broadcast %cst_9 : f32 to vector<16x1024xf32>
    %18 = arith.mulf %17, %16 : vector<16x1024xf32>
    %19 = arith.truncf %18 : vector<16x1024xf32> to vector<16x1024xbf16>
    %c0_10 = arith.constant 0 : index
    %c0_11 = arith.constant 0 : index
    %20 = vector.load %arg4[%c0_10, %c0_11] : memref<1024x512xbf16, #tpu.memory_space<vmem>>, vector<1024x512xbf16>
    %cst_12 = arith.constant dense<0.000000e+00> : vector<16x512xf32>
    %21 = tpu.matmul %19, %20, %cst_12 {dimension_numbers = #tpu.dot_dimension_numbers<[1], [0], [0], [1], [0, 0, 1, 1], [], []>} : vector<16x1024xbf16>, vector<1024x512xbf16>, vector<16x512xf32> -> vector<16x512xf32>
    %c0_13 = arith.constant 0 : index
    %c0_14 = arith.constant 0 : index
    %22 = vector.load %arg5[%c0_13, %c0_14] : memref<1x512xf32, #tpu.memory_space<vmem>>, vector<1x512xf32>
    %23 = vector.broadcast %22 : vector<1x512xf32> to vector<16x512xf32>
    %24 = arith.addf %21, %23 : vector<16x512xf32>
    %cst_15 = arith.constant 0.000000e+00 : f32
    %25 = vector.broadcast %cst_15 : f32 to vector<16x512xf32>
    %26 = arith.cmpf ogt, %24, %25 : vector<16x512xf32>
    %cst_16 = arith.constant 0.000000e+00 : f32
    %27 = vector.broadcast %cst_16 : f32 to vector<16x512xf32>
    %28 = arith.minimumf %24, %27 : vector<16x512xf32>
    %29 = math.exp %28 : vector<16x512xf32>
    %cst_17 = arith.constant 1.000000e+00 : f32
    %30 = vector.broadcast %cst_17 : f32 to vector<16x512xf32>
    %31 = arith.subf %29, %30 : vector<16x512xf32>
    %cst_18 = arith.constant 1.67326319 : f32
    %32 = vector.broadcast %cst_18 : f32 to vector<16x512xf32>
    %33 = arith.mulf %32, %31 : vector<16x512xf32>
    %34 = arith.select %26, %24, %33 : vector<16x512xi1>, vector<16x512xf32>
    %cst_19 = arith.constant 1.05070102 : f32
    %35 = vector.broadcast %cst_19 : f32 to vector<16x512xf32>
    %36 = arith.mulf %35, %34 : vector<16x512xf32>
    %37 = arith.truncf %36 : vector<16x512xf32> to vector<16x512xbf16>
    %c0_20 = arith.constant 0 : index
    %c0_21 = arith.constant 0 : index
    %38 = vector.load %arg6[%c0_20, %c0_21] : memref<512x128xbf16, #tpu.memory_space<vmem>>, vector<512x128xbf16>
    %cst_22 = arith.constant dense<0.000000e+00> : vector<16x128xf32>
    %39 = tpu.matmul %37, %38, %cst_22 {dimension_numbers = #tpu.dot_dimension_numbers<[1], [0], [0], [1], [0, 0, 1, 1], [], []>} : vector<16x512xbf16>, vector<512x128xbf16>, vector<16x128xf32> -> vector<16x128xf32>
    %c0_23 = arith.constant 0 : index
    %c0_24 = arith.constant 0 : index
    %40 = vector.load %arg7[%c0_23, %c0_24] : memref<1x128xf32, #tpu.memory_space<vmem>>, vector<1x128xf32>
    %41 = vector.broadcast %40 : vector<1x128xf32> to vector<16x128xf32>
    %42 = arith.addf %39, %41 : vector<16x128xf32>
    %43 = arith.truncf %42 : vector<16x128xf32> to vector<16x128xbf16>
    %c0_25 = arith.constant 0 : index
    %c0_26 = arith.constant 0 : index
    %44 = vector.load %arg8[%c0_25, %c0_26] : memref<128x1024xbf16, #tpu.memory_space<vmem>>, vector<128x1024xbf16>
    %cst_27 = arith.constant dense<0.000000e+00> : vector<16x1024xf32>
    %45 = tpu.matmul %43, %44, %cst_27 {dimension_numbers = #tpu.dot_dimension_numbers<[1], [0], [0], [1], [0, 0, 1, 1], [], []>} : vector<16x128xbf16>, vector<128x1024xbf16>, vector<16x1024xf32> -> vector<16x1024xf32>
    %c0_28 = arith.constant 0 : index
    %c0_29 = arith.constant 0 : index
    %46 = vector.load %arg9[%c0_28, %c0_29] : memref<1x1024xf32, #tpu.memory_space<vmem>>, vector<1x1024xf32>
    %47 = vector.broadcast %46 : vector<1x1024xf32> to vector<16x1024xf32>
    %48 = arith.addf %45, %47 : vector<16x1024xf32>
    %cst_30 = arith.constant 0.000000e+00 : f32
    %49 = vector.broadcast %cst_30 : f32 to vector<16x1024xf32>
    %50 = arith.cmpf ogt, %48, %49 : vector<16x1024xf32>
    %cst_31 = arith.constant 0.000000e+00 : f32
    %51 = vector.broadcast %cst_31 : f32 to vector<16x1024xf32>
    %52 = arith.minimumf %48, %51 : vector<16x1024xf32>
    %53 = math.exp %52 : vector<16x1024xf32>
    %cst_32 = arith.constant 1.000000e+00 : f32
    %54 = vector.broadcast %cst_32 : f32 to vector<16x1024xf32>
    %55 = arith.subf %53, %54 : vector<16x1024xf32>
    %cst_33 = arith.constant 1.67326319 : f32
    %56 = vector.broadcast %cst_33 : f32 to vector<16x1024xf32>
    %57 = arith.mulf %56, %55 : vector<16x1024xf32>
    %58 = arith.select %50, %48, %57 : vector<16x1024xi1>, vector<16x1024xf32>
    %cst_34 = arith.constant 1.05070102 : f32
    %59 = vector.broadcast %cst_34 : f32 to vector<16x1024xf32>
    %60 = arith.mulf %59, %58 : vector<16x1024xf32>
    %61 = arith.truncf %60 : vector<16x1024xf32> to vector<16x1024xbf16>
    %c0_35 = arith.constant 0 : index
    %c0_36 = arith.constant 0 : index
    %62 = vector.load %arg10[%c0_35, %c0_36] : memref<1024x512xbf16, #tpu.memory_space<vmem>>, vector<1024x512xbf16>
    %cst_37 = arith.constant dense<0.000000e+00> : vector<16x512xf32>
    %63 = tpu.matmul %61, %62, %cst_37 {dimension_numbers = #tpu.dot_dimension_numbers<[1], [0], [0], [1], [0, 0, 1, 1], [], []>} : vector<16x1024xbf16>, vector<1024x512xbf16>, vector<16x512xf32> -> vector<16x512xf32>
    %c0_38 = arith.constant 0 : index
    %c0_39 = arith.constant 0 : index
    %64 = vector.load %arg11[%c0_38, %c0_39] : memref<1x512xf32, #tpu.memory_space<vmem>>, vector<1x512xf32>
    %65 = vector.broadcast %64 : vector<1x512xf32> to vector<16x512xf32>
    %66 = arith.addf %63, %65 : vector<16x512xf32>
    %cst_40 = arith.constant 0.000000e+00 : f32
    %67 = vector.broadcast %cst_40 : f32 to vector<16x512xf32>
    %68 = arith.cmpf ogt, %66, %67 : vector<16x512xf32>
    %cst_41 = arith.constant 0.000000e+00 : f32
    %69 = vector.broadcast %cst_41 : f32 to vector<16x512xf32>
    %70 = arith.minimumf %66, %69 : vector<16x512xf32>
    %71 = math.exp %70 : vector<16x512xf32>
    %cst_42 = arith.constant 1.000000e+00 : f32
    %72 = vector.broadcast %cst_42 : f32 to vector<16x512xf32>
    %73 = arith.subf %71, %72 : vector<16x512xf32>
    %cst_43 = arith.constant 1.67326319 : f32
    %74 = vector.broadcast %cst_43 : f32 to vector<16x512xf32>
    %75 = arith.mulf %74, %73 : vector<16x512xf32>
    %76 = arith.select %68, %66, %75 : vector<16x512xi1>, vector<16x512xf32>
    %cst_44 = arith.constant 1.05070102 : f32
    %77 = vector.broadcast %cst_44 : f32 to vector<16x512xf32>
    %78 = arith.mulf %77, %76 : vector<16x512xf32>
    %79 = arith.truncf %78 : vector<16x512xf32> to vector<16x512xbf16>
    %c0_45 = arith.constant 0 : index
    %c0_46 = arith.constant 0 : index
    %80 = vector.load %arg12[%c0_45, %c0_46] : memref<512x128xbf16, #tpu.memory_space<vmem>>, vector<512x128xbf16>
    %cst_47 = arith.constant dense<0.000000e+00> : vector<16x128xf32>
    %81 = tpu.matmul %79, %80, %cst_47 {dimension_numbers = #tpu.dot_dimension_numbers<[1], [0], [0], [1], [0, 0, 1, 1], [], []>} : vector<16x512xbf16>, vector<512x128xbf16>, vector<16x128xf32> -> vector<16x128xf32>
    %c0_48 = arith.constant 0 : index
    %c0_49 = arith.constant 0 : index
    %82 = vector.load %arg13[%c0_48, %c0_49] : memref<1x128xf32, #tpu.memory_space<vmem>>, vector<1x128xf32>
    %83 = vector.broadcast %82 : vector<1x128xf32> to vector<16x128xf32>
    %84 = arith.addf %81, %83 : vector<16x128xf32>
    %c0_50 = arith.constant 0 : index
    %c0_51 = arith.constant 0 : index
    %85 = vector.load %arg14[%c0_50, %c0_51] : memref<16x128xf32, #tpu.memory_space<vmem>>, vector<16x128xf32>
    tpu.vector_store %arg14[%c0_50, %c0_51], %84 {strides = array<i32>} : memref<16x128xf32, #tpu.memory_space<vmem>>, vector<16x128xf32>,
    return
  }
  func.func @transform_0(%arg0: i32) -> (i32, i32) {
    %c0_i32 = arith.constant 0 : i32
    %c0_i32_0 = arith.constant 0 : i32
    return %arg0, %c0_i32 : i32, i32
  }
  func.func @transform_1(%arg0: i32) -> (i32, i32) {
    %c0_i32 = arith.constant 0 : i32
    %c0_i32_0 = arith.constant 0 : i32
    %c0_i32_1 = arith.constant 0 : i32
    return %c0_i32, %c0_i32_0 : i32, i32
  }
  func.func @transform_2(%arg0: i32) -> (i32, i32) {
    %c0_i32 = arith.constant 0 : i32
    %c0_i32_0 = arith.constant 0 : i32
    %c0_i32_1 = arith.constant 0 : i32
    return %c0_i32, %c0_i32_0 : i32, i32
  }
  func.func @transform_3(%arg0: i32) -> (i32, i32) {
    %c0_i32 = arith.constant 0 : i32
    %c0_i32_0 = arith.constant 0 : i32
    %c0_i32_1 = arith.constant 0 : i32
    return %c0_i32, %c0_i32_0 : i32, i32
  }
  func.func @transform_4(%arg0: i32) -> (i32, i32) {
    %c0_i32 = arith.constant 0 : i32
    %c0_i32_0 = arith.constant 0 : i32
    %c0_i32_1 = arith.constant 0 : i32
    return %c0_i32, %c0_i32_0 : i32, i32
  }
  func.func @transform_5(%arg0: i32) -> (i32, i32) {
    %c0_i32 = arith.constant 0 : i32
    %c0_i32_0 = arith.constant 0 : i32
    %c0_i32_1 = arith.constant 0 : i32
    return %c0_i32, %c0_i32_0 : i32, i32
  }
  func.func @transform_6(%arg0: i32) -> (i32, i32) {
    %c0_i32 = arith.constant 0 : i32
    %c0_i32_0 = arith.constant 0 : i32
    %c0_i32_1 = arith.constant 0 : i32
    return %c0_i32, %c0_i32_0 : i32, i32
  }
  func.func @transform_7(%arg0: i32) -> (i32, i32) {
    %c0_i32 = arith.constant 0 : i32
    %c0_i32_0 = arith.constant 0 : i32
    %c0_i32_1 = arith.constant 0 : i32
    return %c0_i32, %c0_i32_0 : i32, i32
  }
  func.func @transform_8(%arg0: i32) -> (i32, i32) {
    %c0_i32 = arith.constant 0 : i32
    %c0_i32_0 = arith.constant 0 : i32
    %c0_i32_1 = arith.constant 0 : i32
    return %c0_i32, %c0_i32_0 : i32, i32
  }
  func.func @transform_9(%arg0: i32) -> (i32, i32) {
    %c0_i32 = arith.constant 0 : i32
    %c0_i32_0 = arith.constant 0 : i32
    %c0_i32_1 = arith.constant 0 : i32
    return %c0_i32, %c0_i32_0 : i32, i32
  }
  func.func @transform_10(%arg0: i32) -> (i32, i32) {
    %c0_i32 = arith.constant 0 : i32
    %c0_i32_0 = arith.constant 0 : i32
    %c0_i32_1 = arith.constant 0 : i32
    return %c0_i32, %c0_i32_0 : i32, i32
  }
  func.func @transform_11(%arg0: i32) -> (i32, i32) {
    %c0_i32 = arith.constant 0 : i32
    %c0_i32_0 = arith.constant 0 : i32
    %c0_i32_1 = arith.constant 0 : i32
    return %c0_i32, %c0_i32_0 : i32, i32
  }
  func.func @transform_12(%arg0: i32) -> (i32, i32) {
    %c0_i32 = arith.constant 0 : i32
    %c0_i32_0 = arith.constant 0 : i32
    %c0_i32_1 = arith.constant 0 : i32
    return %c0_i32, %c0_i32_0 : i32, i32
  }
  func.func @transform_13(%arg0: i32) -> (i32, i32) {
    %c0_i32 = arith.constant 0 : i32
    %c0_i32_0 = arith.constant 0 : i32
    return %arg0, %c0_i32 : i32, i32
  }
}

</mosaic_0001>

<llo_original>
// kernel: tpu_custom_call.1
$region0: #{tpu_custom_call.1}
  #allocation0 [shape = 'u32[]', space=smem, size = 0x4, offset = 0x4, fixed_abs, tag = 'smem constant byte address 0x4 - core index']
  #allocation1 [shape = 'u32[144,128]{1,0:T(1,128)}', space=vmem, size = 0x12000, scoped, tag = 'internal scratch']
  %s0 = inlined_call_operand.hbm [shape: f32[16,128], index: 0, kind: input, shape index: {}]
  %s1 = inlined_call_operand.hbm [shape: bf16[128,1024], index: 1, kind: input, shape index: {}]
  %s2 = inlined_call_operand.hbm [shape: f32[1,1024], index: 2, kind: input, shape index: {}]
  %s3 = inlined_call_operand.hbm [shape: bf16[1024,512], index: 3, kind: input, shape index: {}]
  %s4 = inlined_call_operand.vmem [shape: f32[1,512], index: 4, kind: input, shape index: {}]
  %s5 = inlined_call_operand.hbm [shape: bf16[512,128], index: 5, kind: input, shape index: {}]
  %s6 = inlined_call_operand.vmem [shape: f32[1,128], index: 6, kind: input, shape index: {}]
  %s7 = inlined_call_operand.hbm [shape: bf16[128,1024], index: 7, kind: input, shape index: {}]
  %s8 = inlined_call_operand.vmem [shape: f32[1,1024], index: 8, kind: input, shape index: {}]
  %s9 = inlined_call_operand.hbm [shape: bf16[1024,512], index: 9, kind: input, shape index: {}]
  %s10 = inlined_call_operand.vmem [shape: f32[1,512], index: 10, kind: input, shape index: {}]
  %s11 = inlined_call_operand.hbm [shape: bf16[512,128], index: 11, kind: input, shape index: {}]
  %s12 = inlined_call_operand.vmem [shape: f32[1,128], index: 12, kind: input, shape index: {}]
  %s13 = inlined_call_operand.hbm [shape: f32[16,128], index: 13, kind: output, shape index: {}]
  %s14 = sld [smem:[#allocation0]]
  $region94: #{tpu_custom_call.1} parent=0
    _
  %s16 = ssub.s32 1, %s14
  %s17 = scalar_select 0, %s16, %s14
  $region1: #{tpu_custom_call.1} parent=0
    #allocation2 [shape = 'u8[8192]{0}', space=vmem, size = 0x2000, scoped, tag = 'input window, operand 0, single buffered']
    #allocation3 [shape = 's32[1]{0}', space=sflag, size = 0x4, scoped, tag = 'scoped memory for tpu_custom_call.1']
    #allocation4 [shape = 's32[1]{0}', space=sflag, size = 0x4, scoped, tag = 'scoped memory for tpu_custom_call.1']
    #allocation5 [shape = 'u8[262144]{0}', space=vmem, size = 0x40000, scoped, tag = 'input window, operand 1, single buffered']
    #allocation6 [shape = 's32[1]{0}', space=sflag, size = 0x4, scoped, tag = 'scoped memory for tpu_custom_call.1']
    #allocation7 [shape = 'u8[4096]{0}', space=vmem, size = 0x1000, scoped, tag = 'input window, operand 2, single buffered']
    #allocation8 [shape = 'u8[1048576]{0}', space=vmem, size = 0x100000, scoped, tag = 'input window, operand 3, single buffered']
    #allocation9 [shape = 's32[1]{0}', space=sflag, size = 0x4, scoped, tag = 'scoped memory for tpu_custom_call.1']
    #allocation10 [shape = 'u8[131072]{0}', space=vmem, size = 0x20000, scoped, tag = 'input window, operand 5, single buffered']
    #allocation11 [shape = 'u8[262144]{0}', space=vmem, size = 0x40000, scoped, tag = 'input window, operand 7, single buffered']
    #allocation12 [shape = 's32[1]{0}', space=sflag, size = 0x4, scoped, tag = 'scoped memory for tpu_custom_call.1']
    #allocation13 [shape = 'u8[1048576]{0}', space=vmem, size = 0x100000, scoped, tag = 'input window, operand 9, single buffered']
    #allocation14 [shape = 'u8[131072]{0}', space=vmem, size = 0x20000, scoped, tag = 'input window, operand 11, single buffered']
    #allocation15 [shape = 's32[1]{0}', space=sflag, size = 0x4, scoped, tag = 'scoped memory for tpu_custom_call.1']
    #allocation16 [shape = 'u8[8192]{0}', space=vmem, size = 0x2000, scoped, tag = 'output window, operand 0, single buffered']
    %18 = vsyncpa [#allocation3], 0
    %19 = vsyncpa [#allocation6], 0
    %20 = vsyncpa [#allocation9], 0
    %21 = vsyncpa [#allocation12], 0
    %22 = vsyncpa [#allocation15], 0
    %23 = vsyncpa [#allocation4], 0
    // Predicated region
    $region2: #{tpu_custom_call.1} parent=1 // pred_check
      _
    $region3: #{tpu_custom_call.1} parent=1 // pred_check_branch
      %25 = sbr.rel (0) target = $region5
    $region4: #{tpu_custom_call.1} parent=1 // pred_region
      %s27 = ssub.s32 256, 256
      %28 = vsyncadd [#allocation3], %s27
      %s29 = sshll.u32 [#allocation2], 4
      %s30 = int_to_ptr.vmem [resolvable:$true] %s29
      %35 = dma.hbm_to_vmem [thread:$0]  %s0, 256, %s30, [#allocation3], 128, 128, 8
    $region5: #{tpu_custom_call.1} parent=1 // pred_fallthru
      _
    // Predicated region
    $region6: #{tpu_custom_call.1} parent=1 // pred_check
      _
    $region7: #{tpu_custom_call.1} parent=1 // pred_check_branch
      %37 = sbr.rel (0) target = $region9
    $region8: #{tpu_custom_call.1} parent=1 // pred_region
      %s39 = ssub.s32 8192, 8192
      %40 = vsyncadd [#allocation6], %s39
      %s41 = sshll.u32 [#allocation5], 4
      %s42 = int_to_ptr.vmem [resolvable:$true] %s41
      %47 = dma.hbm_to_vmem [thread:$0]  %s1, 8192, %s42, [#allocation6], 512, 512, 32
    $region9: #{tpu_custom_call.1} parent=1 // pred_fallthru
      _
    // Predicated region
    $region10: #{tpu_custom_call.1} parent=1 // pred_check
      _
    $region11: #{tpu_custom_call.1} parent=1 // pred_check_branch
      %49 = sbr.rel (0) target = $region13
    $region12: #{tpu_custom_call.1} parent=1 // pred_region
      %s51 = ssub.s32 128, 128
      %52 = vsyncadd [#allocation6], %s51
      %s54 = sshll.u32 [#allocation7], 4
      %s55 = int_to_ptr.vmem [resolvable:$true] %s54
      %57 = dma.hbm_to_vmem [thread:$0]  %s2, 128, %s55, [#allocation6]
    $region13: #{tpu_custom_call.1} parent=1 // pred_fallthru
      _
    // Predicated region
    $region14: #{tpu_custom_call.1} parent=1 // pred_check
      _
    $region15: #{tpu_custom_call.1} parent=1 // pred_check_branch
      %59 = sbr.rel (0) target = $region17
    $region16: #{tpu_custom_call.1} parent=1 // pred_region
      %s61 = ssub.s32 32768, 32768
      %62 = vsyncadd [#allocation9], %s61
      %s63 = sshll.u32 [#allocation8], 4
      %s64 = int_to_ptr.vmem [resolvable:$true] %s63
      %69 = dma.hbm_to_vmem [thread:$0]  %s3, 32768, %s64, [#allocation9], 256, 256, 16
    $region17: #{tpu_custom_call.1} parent=1 // pred_fallthru
      _
    // Predicated region
    $region18: #{tpu_custom_call.1} parent=1 // pred_check
      _
    $region19: #{tpu_custom_call.1} parent=1 // pred_check_branch
      %71 = sbr.rel (0) target = $region21
    $region20: #{tpu_custom_call.1} parent=1 // pred_region
      _
    $region21: #{tpu_custom_call.1} parent=1 // pred_fallthru
      _
    // Predicated region
    $region22: #{tpu_custom_call.1} parent=1 // pred_check
      _
    $region23: #{tpu_custom_call.1} parent=1 // pred_check_branch
      %73 = sbr.rel (0) target = $region25
    $region24: #{tpu_custom_call.1} parent=1 // pred_region
      %s75 = ssub.s32 4096, 4096
      %76 = vsyncadd [#allocation9], %s75
      %s77 = sshll.u32 [#allocation10], 4
      %s78 = int_to_ptr.vmem [resolvable:$true] %s77
      %83 = dma.hbm_to_vmem [thread:$0]  %s5, 4096, %s78, [#allocation9], 64, 64, 4
    $region25: #{tpu_custom_call.1} parent=1 // pred_fallthru
      _
    // Predicated region
    $region26: #{tpu_custom_call.1} parent=1 // pred_check
      _
    $region27: #{tpu_custom_call.1} parent=1 // pred_check_branch
      %85 = sbr.rel (0) target = $region29
    $region28: #{tpu_custom_call.1} parent=1 // pred_region
      _
    $region29: #{tpu_custom_call.1} parent=1 // pred_fallthru
      _
    // Predicated region
    $region30: #{tpu_custom_call.1} parent=1 // pred_check
      _
    $region31: #{tpu_custom_call.1} parent=1 // pred_check_branch
      %87 = sbr.rel (0) target = $region33
    $region32: #{tpu_custom_call.1} parent=1 // pred_region
      %s89 = ssub.s32 8192, 8192
      %90 = vsyncadd [#allocation12], %s89
      %s91 = sshll.u32 [#allocation11], 4
      %s92 = int_to_ptr.vmem [resolvable:$true] %s91
      %97 = dma.hbm_to_vmem [thread:$0]  %s7, 8192, %s92, [#allocation12], 512, 512, 32
    $region33: #{tpu_custom_call.1} parent=1 // pred_fallthru
      _
    // Predicated region
    $region34: #{tpu_custom_call.1} parent=1 // pred_check
      _
    $region35: #{tpu_custom_call.1} parent=1 // pred_check_branch
      %99 = sbr.rel (0) target = $region37
    $region36: #{tpu_custom_call.1} parent=1 // pred_region
      _
    $region37: #{tpu_custom_call.1} parent=1 // pred_fallthru
      _
    // Predicated region
    $region38: #{tpu_custom_call.1} parent=1 // pred_check
      _
    $region39: #{tpu_custom_call.1} parent=1 // pred_check_branch
      %101 = sbr.rel (0) target = $region41
    $region40: #{tpu_custom_call.1} parent=1 // pred_region
      %s103 = ssub.s32 32768, 32768
      %104 = vsyncadd [#allocation12], %s103
      %s105 = sshll.u32 [#allocation13], 4
      %s106 = int_to_ptr.vmem [resolvable:$true] %s105
      %111 = dma.hbm_to_vmem [thread:$0]  %s9, 32768, %s106, [#allocation12], 256, 256, 16
    $region41: #{tpu_custom_call.1} parent=1 // pred_fallthru
      _
    // Predicated region
    $region42: #{tpu_custom_call.1} parent=1 // pred_check
      _
    $region43: #{tpu_custom_call.1} parent=1 // pred_check_branch
      %113 = sbr.rel (0) target = $region45
    $region44: #{tpu_custom_call.1} parent=1 // pred_region
      _
    $region45: #{tpu_custom_call.1} parent=1 // pred_fallthru
      _
    // Predicated region
    $region46: #{tpu_custom_call.1} parent=1 // pred_check
      _
    $region47: #{tpu_custom_call.1} parent=1 // pred_check_branch
      %115 = sbr.rel (0) target = $region49
    $region48: #{tpu_custom_call.1} parent=1 // pred_region
      %s117 = ssub.s32 4096, 4096
      %118 = vsyncadd [#allocation15], %s117
      %s119 = sshll.u32 [#allocation14], 4
      %s120 = int_to_ptr.vmem [resolvable:$true] %s119
      %125 = dma.hbm_to_vmem [thread:$0]  %s11, 4096, %s120, [#allocation15], 64, 64, 4
    $region49: #{tpu_custom_call.1} parent=1 // pred_fallthru
      _
    // Predicated region
    $region50: #{tpu_custom_call.1} parent=1 // pred_check
      _
    $region51: #{tpu_custom_call.1} parent=1 // pred_check_branch
      %127 = sbr.rel (0) target = $region53
    $region52: #{tpu_custom_call.1} parent=1 // pred_region
      _
    $region53: #{tpu_custom_call.1} parent=1 // pred_fallthru
      _
    // Predicated region
    $region54: #{tpu_custom_call.1} parent=1 // pred_check
      _
    $region55: #{tpu_custom_call.1} parent=1 // pred_check_branch
      %129 = sbr.rel (0) target = $region57
    $region56: #{tpu_custom_call.1} parent=1 // pred_region
      %130 = dma.done [#allocation3], 256
    $region57: #{tpu_custom_call.1} parent=1 // pred_fallthru
      _
    // Predicated region
    $region58: #{tpu_custom_call.1} parent=1 // pred_check
      _
    $region59: #{tpu_custom_call.1} parent=1 // pred_check_branch
      %132 = sbr.rel (0) target = $region61
    $region60: #{tpu_custom_call.1} parent=1 // pred_region
      %133 = dma.done [#allocation6], 8192
    $region61: #{tpu_custom_call.1} parent=1 // pred_fallthru
      _
    // Predicated region
    $region62: #{tpu_custom_call.1} parent=1 // pred_check
      _
    $region63: #{tpu_custom_call.1} parent=1 // pred_check_branch
      %135 = sbr.rel (0) target = $region65
    $region64: #{tpu_custom_call.1} parent=1 // pred_region
      %136 = dma.done [#allocation6], 128
    $region65: #{tpu_custom_call.1} parent=1 // pred_fallthru
      _
    // Predicated region
    $region66: #{tpu_custom_call.1} parent=1 // pred_check
      _
    $region67: #{tpu_custom_call.1} parent=1 // pred_check_branch
      %138 = sbr.rel (0) target = $region69
    $region68: #{tpu_custom_call.1} parent=1 // pred_region
      %139 = dma.done [#allocation9], 32768
    $region69: #{tpu_custom_call.1} parent=1 // pred_fallthru
      _
    // Predicated region
    $region70: #{tpu_custom_call.1} parent=1 // pred_check
      _
    $region71: #{tpu_custom_call.1} parent=1 // pred_check_branch
      %141 = sbr.rel (0) target = $region73
    $region72: #{tpu_custom_call.1} parent=1 // pred_region
      %142 = dma.done [#allocation9], 4096
    $region73: #{tpu_custom_call.1} parent=1 // pred_fallthru
      _
    // Predicated region
    $region74: #{tpu_custom_call.1} parent=1 // pred_check
      _
    $region75: #{tpu_custom_call.1} parent=1 // pred_check_branch
      %144 = sbr.rel (0) target = $region77
    $region76: #{tpu_custom_call.1} parent=1 // pred_region
      %145 = dma.done [#allocation12], 8192
    $region77: #{tpu_custom_call.1} parent=1 // pred_fallthru
      _
    // Predicated region
    $region78: #{tpu_custom_call.1} parent=1 // pred_check
      _
    $region79: #{tpu_custom_call.1} parent=1 // pred_check_branch
      %147 = sbr.rel (0) target = $region81
    $region80: #{tpu_custom_call.1} parent=1 // pred_region
      %148 = dma.done [#allocation12], 32768
    $region81: #{tpu_custom_call.1} parent=1 // pred_fallthru
      _
    // Predicated region
    $region82: #{tpu_custom_call.1} parent=1 // pred_check
      _
    $region83: #{tpu_custom_call.1} parent=1 // pred_check_branch
      %150 = sbr.rel (0) target = $region85
    $region84: #{tpu_custom_call.1} parent=1 // pred_region
      %151 = dma.done [#allocation15], 4096
    $region85: #{tpu_custom_call.1} parent=1 // pred_fallthru
      _
    %v153 = vld [vmem:[#allocation2] sm:$0xff]
    %v154 = vld [vmem:[#allocation2 + $0x8] sm:$0xff]
    %v155 = vpack.c.bf16 %v154, %v153
    %v156 = vld [vmem:[#allocation5] sm:$0xff]
    %v157 = vld [vmem:[#allocation5 + $0x8] sm:$0xff]
    %v158 = vld [vmem:[#allocation5 + $0x10] sm:$0xff]
    %v159 = vld [vmem:[#allocation5 + $0x18] sm:$0xff]
    %v160 = vld [vmem:[#allocation5 + $0x20] sm:$0xff]
    %v161 = vld [vmem:[#allocation5 + $0x28] sm:$0xff]
    %v162 = vld [vmem:[#allocation5 + $0x30] sm:$0xff]
    %v163 = vld [vmem:[#allocation5 + $0x38] sm:$0xff]
    %v164 = vld [vmem:[#allocation5 + $0x40] sm:$0xff]
    %v165 = vld [vmem:[#allocation5 + $0x48] sm:$0xff]
    %v166 = vld [vmem:[#allocation5 + $0x50] sm:$0xff]
    %v167 = vld [vmem:[#allocation5 + $0x58] sm:$0xff]
    %v168 = vld [vmem:[#allocation5 + $0x60] sm:$0xff]
    %v169 = vld [vmem:[#allocation5 + $0x68] sm:$0xff]
    %v170 = vld [vmem:[#allocation5 + $0x70] sm:$0xff]
    %v171 = vld [vmem:[#allocation5 + $0x78] sm:$0xff]
    %v172 = vld [vmem:[#allocation5 + $0x80] sm:$0xff]
    %v173 = vld [vmem:[#allocation5 + $0x88] sm:$0xff]
    %v174 = vld [vmem:[#allocation5 + $0x90] sm:$0xff]
    %v175 = vld [vmem:[#allocation5 + $0x98] sm:$0xff]
    %v176 = vld [vmem:[#allocation5 + $0xa0] sm:$0xff]
    %v177 = vld [vmem:[#allocation5 + $0xa8] sm:$0xff]
    %v178 = vld [vmem:[#allocation5 + $0xb0] sm:$0xff]
    %v179 = vld [vmem:[#allocation5 + $0xb8] sm:$0xff]
    %v180 = vld [vmem:[#allocation5 + $0xc0] sm:$0xff]
    %v181 = vld [vmem:[#allocation5 + $0xc8] sm:$0xff]
    %v182 = vld [vmem:[#allocation5 + $0xd0] sm:$0xff]
    %v183 = vld [vmem:[#allocation5 + $0xd8] sm:$0xff]
    %v184 = vld [vmem:[#allocation5 + $0xe0] sm:$0xff]
    %v185 = vld [vmem:[#allocation5 + $0xe8] sm:$0xff]
    %v186 = vld [vmem:[#allocation5 + $0xf0] sm:$0xff]
    %v187 = vld [vmem:[#allocation5 + $0xf8] sm:$0xff]
    %v188 = vld [vmem:[#allocation5 + $0x100] sm:$0xff]
    %v189 = vld [vmem:[#allocation5 + $0x108] sm:$0xff]
    %v190 = vld [vmem:[#allocation5 + $0x110] sm:$0xff]
    %v191 = vld [vmem:[#allocation5 + $0x118] sm:$0xff]
    %v192 = vld [vmem:[#allocation5 + $0x120] sm:$0xff]
    %v193 = vld [vmem:[#allocation5 + $0x128] sm:$0xff]
    %v194 = vld [vmem:[#allocation5 + $0x130] sm:$0xff]
    %v195 = vld [vmem:[#allocation5 + $0x138] sm:$0xff]
    %v196 = vld [vmem:[#allocation5 + $0x140] sm:$0xff]
    %v197 = vld [vmem:[#allocation5 + $0x148] sm:$0xff]
    %v198 = vld [vmem:[#allocation5 + $0x150] sm:$0xff]
    %v199 = vld [vmem:[#allocation5 + $0x158] sm:$0xff]
    %v200 = vld [vmem:[#allocation5 + $0x160] sm:$0xff]
    %v201 = vld [vmem:[#allocation5 + $0x168] sm:$0xff]
    %v202 = vld [vmem:[#allocation5 + $0x170] sm:$0xff]
    %v203 = vld [vmem:[#allocation5 + $0x178] sm:$0xff]
    %v204 = vld [vmem:[#allocation5 + $0x180] sm:$0xff]
    %v205 = vld [vmem:[#allocation5 + $0x188] sm:$0xff]
    %v206 = vld [vmem:[#allocation5 + $0x190] sm:$0xff]
    %v207 = vld [vmem:[#allocation5 + $0x198] sm:$0xff]
    %v208 = vld [vmem:[#allocation5 + $0x1a0] sm:$0xff]
    %v209 = vld [vmem:[#allocation5 + $0x1a8] sm:$0xff]
    %v210 = vld [vmem:[#allocation5 + $0x1b0] sm:$0xff]
    %v211 = vld [vmem:[#allocation5 + $0x1b8] sm:$0xff]
    %v212 = vld [vmem:[#allocation5 + $0x1c0] sm:$0xff]
    %v213 = vld [vmem:[#allocation5 + $0x1c8] sm:$0xff]
    %v214 = vld [vmem:[#allocation5 + $0x1d0] sm:$0xff]
    %v215 = vld [vmem:[#allocation5 + $0x1d8] sm:$0xff]
    %v216 = vld [vmem:[#allocation5 + $0x1e0] sm:$0xff]
    %v217 = vld [vmem:[#allocation5 + $0x1e8] sm:$0xff]
    %v218 = vld [vmem:[#allocation5 + $0x1f0] sm:$0xff]
    %v219 = vld [vmem:[#allocation5 + $0x1f8] sm:$0xff]
    %v220 = vld [vmem:[#allocation7] sm:$0xff]
    %v222 = vlaneseq
    %v223 = vshrl.u32 %v222, 7
    %v224 = vsub.s32 0, %v223
    %v225 = vrot.slane %v220, %v224
    %v226 = vlaneseq
    %v227 = vshrl.u32 %v226, 7
    %v228 = vsub.s32 1, %v227
    %v229 = vrot.slane %v220, %v228
    %v230 = vlaneseq
    %v231 = vshrl.u32 %v230, 7
    %v232 = vsub.s32 2, %v231
    %v233 = vrot.slane %v220, %v232
    %v234 = vlaneseq
    %v235 = vshrl.u32 %v234, 7
    %v236 = vsub.s32 3, %v235
    %v237 = vrot.slane %v220, %v236
    %v238 = vlaneseq
    %v239 = vshrl.u32 %v238, 7
    %v240 = vsub.s32 4, %v239
    %v241 = vrot.slane %v220, %v240
    %v242 = vlaneseq
    %v243 = vshrl.u32 %v242, 7
    %v244 = vsub.s32 5, %v243
    %v245 = vrot.slane %v220, %v244
    %v246 = vlaneseq
    %v247 = vshrl.u32 %v246, 7
    %v248 = vsub.s32 6, %v247
    %v249 = vrot.slane %v220, %v248
    %v250 = vlaneseq
    %v251 = vshrl.u32 %v250, 7
    %v252 = vsub.s32 7, %v251
    %v253 = vrot.slane %v220, %v252
    %v326 = vunpack.c.l.b16 %v156
    %v327 = vunpack.c.h.b16 %v156
    %v328 = vunpack.c.l.b16 %v157
    %v329 = vunpack.c.h.b16 %v157
    %v330 = vunpack.c.l.b16 %v158
    %v331 = vunpack.c.h.b16 %v158
    %v332 = vunpack.c.l.b16 %v159
    %v333 = vunpack.c.h.b16 %v159
    %v334 = vunpack.c.l.b16 %v160
    %v335 = vunpack.c.h.b16 %v160
    %v336 = vunpack.c.l.b16 %v161
    %v337 = vunpack.c.h.b16 %v161
    %v338 = vunpack.c.l.b16 %v162
    %v339 = vunpack.c.h.b16 %v162
    %v340 = vunpack.c.l.b16 %v163
    %v341 = vunpack.c.h.b16 %v163
    %v342 = vunpack.c.l.b16 %v164
    %v343 = vunpack.c.h.b16 %v164
    %v344 = vunpack.c.l.b16 %v165
    %v345 = vunpack.c.h.b16 %v165
    %v346 = vunpack.c.l.b16 %v166
    %v347 = vunpack.c.h.b16 %v166
    %v348 = vunpack.c.l.b16 %v167
    %v349 = vunpack.c.h.b16 %v167
    %v350 = vunpack.c.l.b16 %v168
    %v351 = vunpack.c.h.b16 %v168
    %v352 = vunpack.c.l.b16 %v169
    %v353 = vunpack.c.h.b16 %v169
    %v354 = vunpack.c.l.b16 %v170
    %v355 = vunpack.c.h.b16 %v170
    %v356 = vunpack.c.l.b16 %v171
    %v357 = vunpack.c.h.b16 %v171
    %v358 = vunpack.c.l.b16 %v172
    %v359 = vunpack.c.h.b16 %v172
    %v360 = vunpack.c.l.b16 %v173
    %v361 = vunpack.c.h.b16 %v173
    %v362 = vunpack.c.l.b16 %v174
    %v363 = vunpack.c.h.b16 %v174
    %v364 = vunpack.c.l.b16 %v175
    %v365 = vunpack.c.h.b16 %v175
    %v366 = vunpack.c.l.b16 %v176
    %v367 = vunpack.c.h.b16 %v176
    %v368 = vunpack.c.l.b16 %v177
    %v369 = vunpack.c.h.b16 %v177
    %v370 = vunpack.c.l.b16 %v178
    %v371 = vunpack.c.h.b16 %v178
    %v372 = vunpack.c.l.b16 %v179
    %v373 = vunpack.c.h.b16 %v179
    %v374 = vunpack.c.l.b16 %v180
    %v375 = vunpack.c.h.b16 %v180
    %v376 = vunpack.c.l.b16 %v181
    %v377 = vunpack.c.h.b16 %v181
    %v378 = vunpack.c.l.b16 %v182
    %v379 = vunpack.c.h.b16 %v182
    %v380 = vunpack.c.l.b16 %v183
    %v381 = vunpack.c.h.b16 %v183
    %v382 = vunpack.c.l.b16 %v184
    %v383 = vunpack.c.h.b16 %v184
    %v384 = vunpack.c.l.b16 %v185
    %v385 = vunpack.c.h.b16 %v185
    %v386 = vunpack.c.l.b16 %v186
    %v387 = vunpack.c.h.b16 %v186
    %v388 = vunpack.c.l.b16 %v187
    %v389 = vunpack.c.h.b16 %v187
    %v390 = vunpack.c.l.b16 %v188
    %v391 = vunpack.c.h.b16 %v188
    %v392 = vunpack.c.l.b16 %v189
    %v393 = vunpack.c.h.b16 %v189
    %v394 = vunpack.c.l.b16 %v190
    %v395 = vunpack.c.h.b16 %v190
    %v396 = vunpack.c.l.b16 %v191
    %v397 = vunpack.c.h.b16 %v191
    %v398 = vunpack.c.l.b16 %v192
    %v399 = vunpack.c.h.b16 %v192
    %v400 = vunpack.c.l.b16 %v193
    %v401 = vunpack.c.h.b16 %v193
    %v402 = vunpack.c.l.b16 %v194
    %v403 = vunpack.c.h.b16 %v194
    %v404 = vunpack.c.l.b16 %v195
    %v405 = vunpack.c.h.b16 %v195
    %v406 = vunpack.c.l.b16 %v196
    %v407 = vunpack.c.h.b16 %v196
    %v408 = vunpack.c.l.b16 %v197
    %v409 = vunpack.c.h.b16 %v197
    %v410 = vunpack.c.l.b16 %v198
    %v411 = vunpack.c.h.b16 %v198
    %v412 = vunpack.c.l.b16 %v199
    %v413 = vunpack.c.h.b16 %v199
    %v414 = vunpack.c.l.b16 %v200
    %v415 = vunpack.c.h.b16 %v200
    %v416 = vunpack.c.l.b16 %v201
    %v417 = vunpack.c.h.b16 %v201
    %v418 = vunpack.c.l.b16 %v202
    %v419 = vunpack.c.h.b16 %v202
    %v420 = vunpack.c.l.b16 %v203
    %v421 = vunpack.c.h.b16 %v203
    %v422 = vunpack.c.l.b16 %v204
    %v423 = vunpack.c.h.b16 %v204
    %v424 = vunpack.c.l.b16 %v205
    %v425 = vunpack.c.h.b16 %v205
    %v426 = vunpack.c.l.b16 %v206
    %v427 = vunpack.c.h.b16 %v206
    %v428 = vunpack.c.l.b16 %v207
    %v429 = vunpack.c.h.b16 %v207
    %v430 = vunpack.c.l.b16 %v208
    %v431 = vunpack.c.h.b16 %v208
    %v432 = vunpack.c.l.b16 %v209
    %v433 = vunpack.c.h.b16 %v209
    %v434 = vunpack.c.l.b16 %v210
    %v435 = vunpack.c.h.b16 %v210
    %v436 = vunpack.c.l.b16 %v211
    %v437 = vunpack.c.h.b16 %v211
    %v438 = vunpack.c.l.b16 %v212
    %v439 = vunpack.c.h.b16 %v212
    %v440 = vunpack.c.l.b16 %v213
    %v441 = vunpack.c.h.b16 %v213
    %v442 = vunpack.c.l.b16 %v214
    %v443 = vunpack.c.h.b16 %v214
    %v444 = vunpack.c.l.b16 %v215
    %v445 = vunpack.c.h.b16 %v215
    %v446 = vunpack.c.l.b16 %v216
    %v447 = vunpack.c.h.b16 %v216
    %v448 = vunpack.c.l.b16 %v217
    %v449 = vunpack.c.h.b16 %v217
    %v450 = vunpack.c.l.b16 %v218
    %v451 = vunpack.c.h.b16 %v218
    %v452 = vunpack.c.l.b16 %v219
    %v453 = vunpack.c.h.b16 %v219
    %v454 = vpack.c.b16 %v334, %v326
    %v455 = vpack.c.b16 %v335, %v327
    %v456 = vpack.c.b16 %v336, %v328
    %v457 = vpack.c.b16 %v337, %v329
    %v458 = vpack.c.b16 %v338, %v330
    %v459 = vpack.c.b16 %v339, %v331
    %v460 = vpack.c.b16 %v340, %v332
    %v461 = vpack.c.b16 %v341, %v333
    %v462 = vpack.c.b16 %v350, %v342
    %v463 = vpack.c.b16 %v351, %v343
    %v464 = vpack.c.b16 %v352, %v344
    %v465 = vpack.c.b16 %v353, %v345
    %v466 = vpack.c.b16 %v354, %v346
    %v467 = vpack.c.b16 %v355, %v347
    %v468 = vpack.c.b16 %v356, %v348
    %v469 = vpack.c.b16 %v357, %v349
    %v470 = vpack.c.b16 %v366, %v358
    %v471 = vpack.c.b16 %v367, %v359
    %v472 = vpack.c.b16 %v368, %v360
    %v473 = vpack.c.b16 %v369, %v361
    %v474 = vpack.c.b16 %v370, %v362
    %v475 = vpack.c.b16 %v371, %v363
    %v476 = vpack.c.b16 %v372, %v364
    %v477 = vpack.c.b16 %v373, %v365
    %v478 = vpack.c.b16 %v382, %v374
    %v479 = vpack.c.b16 %v383, %v375
    %v480 = vpack.c.b16 %v384, %v376
    %v481 = vpack.c.b16 %v385, %v377
    %v482 = vpack.c.b16 %v386, %v378
    %v483 = vpack.c.b16 %v387, %v379
    %v484 = vpack.c.b16 %v388, %v380
    %v485 = vpack.c.b16 %v389, %v381
    %v486 = vpack.c.b16 %v398, %v390
    %v487 = vpack.c.b16 %v399, %v391
    %v488 = vpack.c.b16 %v400, %v392
    %v489 = vpack.c.b16 %v401, %v393
    %v490 = vpack.c.b16 %v402, %v394
    %v491 = vpack.c.b16 %v403, %v395
    %v492 = vpack.c.b16 %v404, %v396
    %v493 = vpack.c.b16 %v405, %v397
    %v494 = vpack.c.b16 %v414, %v406
    %v495 = vpack.c.b16 %v415, %v407
    %v496 = vpack.c.b16 %v416, %v408
    %v497 = vpack.c.b16 %v417, %v409
    %v498 = vpack.c.b16 %v418, %v410
    %v499 = vpack.c.b16 %v419, %v411
    %v500 = vpack.c.b16 %v420, %v412
    %v501 = vpack.c.b16 %v421, %v413
    %v502 = vpack.c.b16 %v430, %v422
    %v503 = vpack.c.b16 %v431, %v423
    %v504 = vpack.c.b16 %v432, %v424
    %v505 = vpack.c.b16 %v433, %v425
    %v506 = vpack.c.b16 %v434, %v426
    %v507 = vpack.c.b16 %v435, %v427
    %v508 = vpack.c.b16 %v436, %v428
    %v509 = vpack.c.b16 %v437, %v429
    %v510 = vpack.c.b16 %v446, %v438
    %v511 = vpack.c.b16 %v447, %v439
    %v512 = vpack.c.b16 %v448, %v440
    %v513 = vpack.c.b16 %v449, %v441
    %v514 = vpack.c.b16 %v450, %v442
    %v515 = vpack.c.b16 %v451, %v443
    %v516 = vpack.c.b16 %v452, %v444
    %v517 = vpack.c.b16 %v453, %v445
    %582 = vmatprep.subr.bf16.mxu0 %v455
    %583 = vmatpush1.bf16.msra.mxu0 %v454
    %584 = vmatprep.subr.bf16.mxu0 %v463
    %585 = vmatpush1.bf16.msra.mxu0 %v462
    %586 = vmatprep.subr.bf16.mxu0 %v471
    %587 = vmatpush1.bf16.msra.mxu0 %v470
    %588 = vmatprep.subr.bf16.mxu0 %v479
    %589 = vmatpush1.bf16.msra.mxu0 %v478
    %590 = vmatprep.subr.bf16.mxu0 %v487
    %591 = vmatpush1.bf16.msra.mxu0 %v486
    %592 = vmatprep.subr.bf16.mxu0 %v495
    %593 = vmatpush1.bf16.msra.mxu0 %v494
    %594 = vmatprep.subr.bf16.mxu0 %v503
    %595 = vmatpush1.bf16.msra.mxu0 %v502
    %596 = vmatprep.subr.bf16.mxu0 %v511
    %597 = vmatpush1.bf16.msra.mxu0 %v510
    %598 = vmatprep.subr.bf16.mxu0 0
    %599 = vmatpush1.bf16.msra.mxu0 0
    %600 = vmatprep.subr.bf16.mxu0 0
    %601 = vmatpush1.bf16.msra.mxu0 0
    %602 = vmatprep.subr.bf16.mxu0 0
    %603 = vmatpush1.bf16.msra.mxu0 0
    %604 = vmatprep.subr.bf16.mxu0 0
    %605 = vmatpush1.bf16.msra.mxu0 0
    %606 = vmatprep.subr.bf16.mxu0 0
    %607 = vmatpush1.bf16.msra.mxu0 0
    %608 = vmatprep.subr.bf16.mxu0 0
    %609 = vmatpush1.bf16.msra.mxu0 0
    %610 = vmatprep.subr.bf16.mxu0 0
    %611 = vmatpush1.bf16.msra.mxu0 0
    %612 = vmatprep.subr.bf16.mxu0 0
    %613 = vmatpush1.bf16.msra.mxu0 0
    %614 = vmatprep.mubr.bf16.mxu0 0
    %615 = vmatmul.mubr.bf16.gmra.mrb[0].mxu0 %v155
    %v616 = vpop.f32.mrb[0].mxu0
    %v617 = vadd.f32 %v225, %v616
    %v618 = vpop.f32.mrb[0].mxu0
    %v619 = vadd.f32 %v229, %v618
    %v620 = vpop.f32.mrb[0].mxu0
    %v621 = vadd.f32 %v225, %v620
    %v622 = vpop.f32.mrb[0].mxu0
    %v623 = vadd.f32 %v229, %v622
    %624 = vdwg.mxu0
    %625 = vmatprep.subr.bf16.mxu0 %v457
    %626 = vmatpush1.bf16.msra.mxu0 %v456
    %627 = vmatprep.subr.bf16.mxu0 %v465
    %628 = vmatpush1.bf16.msra.mxu0 %v464
    %629 = vmatprep.subr.bf16.mxu0 %v473
    %630 = vmatpush1.bf16.msra.mxu0 %v472
    %631 = vmatprep.subr.bf16.mxu0 %v481
    %632 = vmatpush1.bf16.msra.mxu0 %v480
    %633 = vmatprep.subr.bf16.mxu0 %v489
    %634 = vmatpush1.bf16.msra.mxu0 %v488
    %635 = vmatprep.subr.bf16.mxu0 %v497
    %636 = vmatpush1.bf16.msra.mxu0 %v496
    %637 = vmatprep.subr.bf16.mxu0 %v505
    %638 = vmatpush1.bf16.msra.mxu0 %v504
    %639 = vmatprep.subr.bf16.mxu0 %v513
    %640 = vmatpush1.bf16.msra.mxu0 %v512
    %641 = vmatprep.subr.bf16.mxu0 0
    %642 = vmatpush1.bf16.msra.mxu0 0
    %643 = vmatprep.subr.bf16.mxu0 0
    %644 = vmatpush1.bf16.msra.mxu0 0
    %645 = vmatprep.subr.bf16.mxu0 0
    %646 = vmatpush1.bf16.msra.mxu0 0
    %647 = vmatprep.subr.bf16.mxu0 0
    %648 = vmatpush1.bf16.msra.mxu0 0
    %649 = vmatprep.subr.bf16.mxu0 0
    %650 = vmatpush1.bf16.msra.mxu0 0
    %651 = vmatprep.subr.bf16.mxu0 0
    %652 = vmatpush1.bf16.msra.mxu0 0
    %653 = vmatprep.subr.bf16.mxu0 0
    %654 = vmatpush1.bf16.msra.mxu0 0
    %655 = vmatprep.subr.bf16.mxu0 0
    %656 = vmatpush1.bf16.msra.mxu0 0
    %657 = vmatprep.mubr.bf16.mxu0 0
    %658 = vmatmul.mubr.bf16.gmra.mrb[0].mxu0 %v155
    %v659 = vpop.f32.mrb[0].mxu0
    %v660 = vadd.f32 %v233, %v659
    %v661 = vpop.f32.mrb[0].mxu0
    %v662 = vadd.f32 %v237, %v661
    %v663 = vpop.f32.mrb[0].mxu0
    %v664 = vadd.f32 %v233, %v663
    %v665 = vpop.f32.mrb[0].mxu0
    %v666 = vadd.f32 %v237, %v665
    %667 = vdwg.mxu0
    %668 = vmatprep.subr.bf16.mxu0 %v459
    %669 = vmatpush1.bf16.msra.mxu0 %v458
    %670 = vmatprep.subr.bf16.mxu0 %v467
    %671 = vmatpush1.bf16.msra.mxu0 %v466
    %672 = vmatprep.subr.bf16.mxu0 %v475
    %673 = vmatpush1.bf16.msra.mxu0 %v474
    %674 = vmatprep.subr.bf16.mxu0 %v483
    %675 = vmatpush1.bf16.msra.mxu0 %v482
    %676 = vmatprep.subr.bf16.mxu0 %v491
    %677 = vmatpush1.bf16.msra.mxu0 %v490
    %678 = vmatprep.subr.bf16.mxu0 %v499
    %679 = vmatpush1.bf16.msra.mxu0 %v498
    %680 = vmatprep.subr.bf16.mxu0 %v507
    %681 = vmatpush1.bf16.msra.mxu0 %v506
    %682 = vmatprep.subr.bf16.mxu0 %v515
    %683 = vmatpush1.bf16.msra.mxu0 %v514
    %684 = vmatprep.subr.bf16.mxu0 0
    %685 = vmatpush1.bf16.msra.mxu0 0
    %686 = vmatprep.subr.bf16.mxu0 0
    %687 = vmatpush1.bf16.msra.mxu0 0
    %688 = vmatprep.subr.bf16.mxu0 0
    %689 = vmatpush1.bf16.msra.mxu0 0
    %690 = vmatprep.subr.bf16.mxu0 0
    %691 = vmatpush1.bf16.msra.mxu0 0
    %692 = vmatprep.subr.bf16.mxu0 0
    %693 = vmatpush1.bf16.msra.mxu0 0
    %694 = vmatprep.subr.bf16.mxu0 0
    %695 = vmatpush1.bf16.msra.mxu0 0
    %696 = vmatprep.subr.bf16.mxu0 0
    %697 = vmatpush1.bf16.msra.mxu0 0
    %698 = vmatprep.subr.bf16.mxu0 0
    %699 = vmatpush1.bf16.msra.mxu0 0
    %700 = vmatprep.mubr.bf16.mxu0 0
    %701 = vmatmul.mubr.bf16.gmra.mrb[0].mxu0 %v155
    %v702 = vpop.f32.mrb[0].mxu0
    %v703 = vadd.f32 %v241, %v702
    %v704 = vpop.f32.mrb[0].mxu0
    %v705 = vadd.f32 %v245, %v704
    %v706 = vpop.f32.mrb[0].mxu0
    %v707 = vadd.f32 %v241, %v706
    %v708 = vpop.f32.mrb[0].mxu0
    %v709 = vadd.f32 %v245, %v708
    %710 = vdwg.mxu0
    %711 = vmatprep.subr.bf16.mxu0 %v461
    %712 = vmatpush1.bf16.msra.mxu0 %v460
    %713 = vmatprep.subr.bf16.mxu0 %v469
    %714 = vmatpush1.bf16.msra.mxu0 %v468
    %715 = vmatprep.subr.bf16.mxu0 %v477
    %716 = vmatpush1.bf16.msra.mxu0 %v476
    %717 = vmatprep.subr.bf16.mxu0 %v485
    %718 = vmatpush1.bf16.msra.mxu0 %v484
    %719 = vmatprep.subr.bf16.mxu0 %v493
    %720 = vmatpush1.bf16.msra.mxu0 %v492
    %721 = vmatprep.subr.bf16.mxu0 %v501
    %722 = vmatpush1.bf16.msra.mxu0 %v500
    %723 = vmatprep.subr.bf16.mxu0 %v509
    %724 = vmatpush1.bf16.msra.mxu0 %v508
    %725 = vmatprep.subr.bf16.mxu0 %v517
    %726 = vmatpush1.bf16.msra.mxu0 %v516
    %727 = vmatprep.subr.bf16.mxu0 0
    %728 = vmatpush1.bf16.msra.mxu0 0
    %729 = vmatprep.subr.bf16.mxu0 0
    %730 = vmatpush1.bf16.msra.mxu0 0
    %731 = vmatprep.subr.bf16.mxu0 0
    %732 = vmatpush1.bf16.msra.mxu0 0
    %733 = vmatprep.subr.bf16.mxu0 0
    %734 = vmatpush1.bf16.msra.mxu0 0
    %735 = vmatprep.subr.bf16.mxu0 0
    %736 = vmatpush1.bf16.msra.mxu0 0
    %737 = vmatprep.subr.bf16.mxu0 0
    %738 = vmatpush1.bf16.msra.mxu0 0
    %739 = vmatprep.subr.bf16.mxu0 0
    %740 = vmatpush1.bf16.msra.mxu0 0
    %741 = vmatprep.subr.bf16.mxu0 0
    %742 = vmatpush1.bf16.msra.mxu0 0
    %743 = vmatprep.mubr.bf16.mxu0 0
    %744 = vmatmul.mubr.bf16.gmra.mrb[0].mxu0 %v155
    %v745 = vpop.f32.mrb[0].mxu0
    %v746 = vadd.f32 %v249, %v745
    %v747 = vpop.f32.mrb[0].mxu0
    %v748 = vadd.f32 %v253, %v747
    %v749 = vpop.f32.mrb[0].mxu0
    %v750 = vadd.f32 %v249, %v749
    %v751 = vpop.f32.mrb[0].mxu0
    %v752 = vadd.f32 %v253, %v751
    %753 = vdwg.mxu0
    %vm754 = vcmp.gt.f32.partialorder %v617, 0.0
    %vm755 = vcmp.gt.f32.partialorder %v619, 0.0
    %vm756 = vcmp.gt.f32.partialorder %v660, 0.0
    %vm757 = vcmp.gt.f32.partialorder %v662, 0.0
    %vm758 = vcmp.gt.f32.partialorder %v703, 0.0
    %vm759 = vcmp.gt.f32.partialorder %v705, 0.0
    %vm760 = vcmp.gt.f32.partialorder %v746, 0.0
    %vm761 = vcmp.gt.f32.partialorder %v748, 0.0
    %vm762 = vcmp.gt.f32.partialorder %v621, 0.0
    %vm763 = vcmp.gt.f32.partialorder %v623, 0.0
    %vm764 = vcmp.gt.f32.partialorder %v664, 0.0
    %vm765 = vcmp.gt.f32.partialorder %v666, 0.0
    %vm766 = vcmp.gt.f32.partialorder %v707, 0.0
    %vm767 = vcmp.gt.f32.partialorder %v709, 0.0
    %vm768 = vcmp.gt.f32.partialorder %v750, 0.0
    %vm769 = vcmp.gt.f32.partialorder %v752, 0.0
    %v770 = vmin.f32 %v617, 0.0
    %v771 = vmin.f32 %v619, 0.0
    %v772 = vmin.f32 %v660, 0.0
    %v773 = vmin.f32 %v662, 0.0
    %v774 = vmin.f32 %v703, 0.0
    %v775 = vmin.f32 %v705, 0.0
    %v776 = vmin.f32 %v746, 0.0
    %v777 = vmin.f32 %v748, 0.0
    %v778 = vmin.f32 %v621, 0.0
    %v779 = vmin.f32 %v623, 0.0
    %v780 = vmin.f32 %v664, 0.0
    %v781 = vmin.f32 %v666, 0.0
    %v782 = vmin.f32 %v707, 0.0
    %v783 = vmin.f32 %v709, 0.0
    %v784 = vmin.f32 %v750, 0.0
    %v785 = vmin.f32 %v752, 0.0
    %v786 = vmul.f32 %v770, 1.442695
    %v787 = vpow.pop %v786
    %v788 = vmul.f32 %v771, 1.442695
    %v789 = vpow.pop %v788
    %v790 = vmul.f32 %v772, 1.442695
    %v791 = vpow.pop %v790
    %v792 = vmul.f32 %v773, 1.442695
    %v793 = vpow.pop %v792
    %v794 = vmul.f32 %v774, 1.442695
    %v795 = vpow.pop %v794
    %v796 = vmul.f32 %v775, 1.442695
    %v797 = vpow.pop %v796
    %v798 = vmul.f32 %v776, 1.442695
    %v799 = vpow.pop %v798
    %v800 = vmul.f32 %v777, 1.442695
    %v801 = vpow.pop %v800
    %v802 = vmul.f32 %v778, 1.442695
    %v803 = vpow.pop %v802
    %v804 = vmul.f32 %v779, 1.442695
    %v805 = vpow.pop %v804
    %v806 = vmul.f32 %v780, 1.442695
    %v807 = vpow.pop %v806
    %v808 = vmul.f32 %v781, 1.442695
    %v809 = vpow.pop %v808
    %v810 = vmul.f32 %v782, 1.442695
    %v811 = vpow.pop %v810
    %v812 = vmul.f32 %v783, 1.442695
    %v813 = vpow.pop %v812
    %v814 = vmul.f32 %v784, 1.442695
    %v815 = vpow.pop %v814
    %v816 = vmul.f32 %v785, 1.442695
    %v817 = vpow.pop %v816
    %v818 = vsub.f32 %v787, 1.0
    %v819 = vsub.f32 %v789, 1.0
    %v820 = vsub.f32 %v791, 1.0
    %v821 = vsub.f32 %v793, 1.0
    %v822 = vsub.f32 %v795, 1.0
    %v823 = vsub.f32 %v797, 1.0
    %v824 = vsub.f32 %v799, 1.0
    %v825 = vsub.f32 %v801, 1.0
    %v826 = vsub.f32 %v803, 1.0
    %v827 = vsub.f32 %v805, 1.0
    %v828 = vsub.f32 %v807, 1.0
    %v829 = vsub.f32 %v809, 1.0
    %v830 = vsub.f32 %v811, 1.0
    %v831 = vsub.f32 %v813, 1.0
    %v832 = vsub.f32 %v815, 1.0
    %v833 = vsub.f32 %v817, 1.0
    %v834 = vmul.f32 %v818, 1.6732632
    %v835 = vmul.f32 %v819, 1.6732632
    %v836 = vmul.f32 %v820, 1.6732632
    %v837 = vmul.f32 %v821, 1.6732632
    %v838 = vmul.f32 %v822, 1.6732632
    %v839 = vmul.f32 %v823, 1.6732632
    %v840 = vmul.f32 %v824, 1.6732632
    %v841 = vmul.f32 %v825, 1.6732632
    %v842 = vmul.f32 %v826, 1.6732632
    %v843 = vmul.f32 %v827, 1.6732632
    %v844 = vmul.f32 %v828, 1.6732632
    %v845 = vmul.f32 %v829, 1.6732632
    %v846 = vmul.f32 %v830, 1.6732632
    %v847 = vmul.f32 %v831, 1.6732632
    %v848 = vmul.f32 %v832, 1.6732632
    %v849 = vmul.f32 %v833, 1.6732632
    %v850 = vsel %vm754, %v617, %v834
    %v851 = vsel %vm755, %v619, %v835
    %v852 = vsel %vm756, %v660, %v836
    %v853 = vsel %vm757, %v662, %v837
    %v854 = vsel %vm758, %v703, %v838
    %v855 = vsel %vm759, %v705, %v839
    %v856 = vsel %vm760, %v746, %v840
    %v857 = vsel %vm761, %v748, %v841
    %v858 = vsel %vm762, %v621, %v842
    %v859 = vsel %vm763, %v623, %v843
    %v860 = vsel %vm764, %v664, %v844
    %v861 = vsel %vm765, %v666, %v845
    %v862 = vsel %vm766, %v707, %v846
    %v863 = vsel %vm767, %v709, %v847
    %v864 = vsel %vm768, %v750, %v848
    %v865 = vsel %vm769, %v752, %v849
    %v866 = vmul.f32 %v850, 1.050701
    %v867 = vmul.f32 %v851, 1.050701
    %v868 = vmul.f32 %v852, 1.050701
    %v869 = vmul.f32 %v853, 1.050701
    %v870 = vmul.f32 %v854, 1.050701
    %v871 = vmul.f32 %v855, 1.050701
    %v872 = vmul.f32 %v856, 1.050701
    %v873 = vmul.f32 %v857, 1.050701
    %v874 = vmul.f32 %v858, 1.050701
    %v875 = vmul.f32 %v859, 1.050701
    %v876 = vmul.f32 %v860, 1.050701
    %v877 = vmul.f32 %v861, 1.050701
    %v878 = vmul.f32 %v862, 1.050701
    %v879 = vmul.f32 %v863, 1.050701
    %v880 = vmul.f32 %v864, 1.050701
    %v881 = vmul.f32 %v865, 1.050701
    %v882 = vpack.c.bf16 %v874, %v866
    %v883 = vpack.c.bf16 %v875, %v867
    %v884 = vpack.c.bf16 %v876, %v868
    %v885 = vpack.c.bf16 %v877, %v869
    %v886 = vpack.c.bf16 %v878, %v870
    %v887 = vpack.c.bf16 %v879, %v871
    %v888 = vpack.c.bf16 %v880, %v872
    %v889 = vpack.c.bf16 %v881, %v873
    %v890 = vld [vmem:[#allocation8] sm:$0xff]
    %v891 = vld [vmem:[#allocation8 + $0x8] sm:$0xff]
    %v892 = vld [vmem:[#allocation8 + $0x10] sm:$0xff]
    %v893 = vld [vmem:[#allocation8 + $0x18] sm:$0xff]
    %v894 = vld [vmem:[#allocation8 + $0x20] sm:$0xff]
    %v895 = vld [vmem:[#allocation8 + $0x28] sm:$0xff]
    %v896 = vld [vmem:[#allocation8 + $0x30] sm:$0xff]
    %v897 = vld [vmem:[#allocation8 + $0x38] sm:$0xff]
    %v898 = vld [vmem:[#allocation8 + $0x40] sm:$0xff]
    %v899 = vld [vmem:[#allocation8 + $0x48] sm:$0xff]
    %v900 = vld [vmem:[#allocation8 + $0x50] sm:$0xff]
    %v901 = vld [vmem:[#allocation8 + $0x58] sm:$0xff]
    %v902 = vld [vmem:[#allocation8 + $0x60] sm:$0xff]
    %v903 = vld [vmem:[#allocation8 + $0x68] sm:$0xff]
    %v904 = vld [vmem:[#allocation8 + $0x70] sm:$0xff]
    %v905 = vld [vmem:[#allocation8 + $0x78] sm:$0xff]
    %v906 = vld [vmem:[#allocation8 + $0x80] sm:$0xff]
    %v907 = vld [vmem:[#allocation8 + $0x88] sm:$0xff]
    %v908 = vld [vmem:[#allocation8 + $0x90] sm:$0xff]
    %v909 = vld [vmem:[#allocation8 + $0x98] sm:$0xff]
    %v910 = vld [vmem:[#allocation8 + $0xa0] sm:$0xff]
    %v911 = vld [vmem:[#allocation8 + $0xa8] sm:$0xff]
    %v912 = vld [vmem:[#allocation8 + $0xb0] sm:$0xff]
    %v913 = vld [vmem:[#allocation8 + $0xb8] sm:$0xff]
    %v914 = vld [vmem:[#allocation8 + $0xc0] sm:$0xff]
    %v915 = vld [vmem:[#allocation8 + $0xc8] sm:$0xff]
    %v916 = vld [vmem:[#allocation8 + $0xd0] sm:$0xff]
    %v917 = vld [vmem:[#allocation8 + $0xd8] sm:$0xff]
    %v918 = vld [vmem:[#allocation8 + $0xe0] sm:$0xff]
    %v919 = vld [vmem:[#allocation8 + $0xe8] sm:$0xff]
    %v920 = vld [vmem:[#allocation8 + $0xf0] sm:$0xff]
    %v921 = vld [vmem:[#allocation8 + $0xf8] sm:$0xff]
    %v922 = vld [vmem:[#allocation8 + $0x100] sm:$0xff]
    %v923 = vld [vmem:[#allocation8 + $0x108] sm:$0xff]
    %v924 = vld [vmem:[#allocation8 + $0x110] sm:$0xff]
    %v925 = vld [vmem:[#allocation8 + $0x118] sm:$0xff]
    %v926 = vld [vmem:[#allocation8 + $0x120] sm:$0xff]
    %v927 = vld [vmem:[#allocation8 + $0x128] sm:$0xff]
    %v928 = vld [vmem:[#allocation8 + $0x130] sm:$0xff]
    %v929 = vld [vmem:[#allocation8 + $0x138] sm:$0xff]
    %v930 = vld [vmem:[#allocation8 + $0x140] sm:$0xff]
    %v931 = vld [vmem:[#allocation8 + $0x148] sm:$0xff]
    %v932 = vld [vmem:[#allocation8 + $0x150] sm:$0xff]
    %v933 = vld [vmem:[#allocation8 + $0x158] sm:$0xff]
    %v934 = vld [vmem:[#allocation8 + $0x160] sm:$0xff]
    %v935 = vld [vmem:[#allocation8 + $0x168] sm:$0xff]
    %v936 = vld [vmem:[#allocation8 + $0x170] sm:$0xff]
    %v937 = vld [vmem:[#allocation8 + $0x178] sm:$0xff]
    %v938 = vld [vmem:[#allocation8 + $0x180] sm:$0xff]
    %v939 = vld [vmem:[#allocation8 + $0x188] sm:$0xff]
    %v940 = vld [vmem:[#allocation8 + $0x190] sm:$0xff]
    %v941 = vld [vmem:[#allocation8 + $0x198] sm:$0xff]
    %v942 = vld [vmem:[#allocation8 + $0x1a0] sm:$0xff]
    %v943 = vld [vmem:[#allocation8 + $0x1a8] sm:$0xff]
    %v944 = vld [vmem:[#allocation8 + $0x1b0] sm:$0xff]
    %v945 = vld [vmem:[#allocation8 + $0x1b8] sm:$0xff]
    %v946 = vld [vmem:[#allocation8 + $0x1c0] sm:$0xff]
    %v947 = vld [vmem:[#allocation8 + $0x1c8] sm:$0xff]
    %v948 = vld [vmem:[#allocation8 + $0x1d0] sm:$0xff]
    %v949 = vld [vmem:[#allocation8 + $0x1d8] sm:$0xff]
    %v950 = vld [vmem:[#allocation8 + $0x1e0] sm:$0xff]
    %v951 = vld [vmem:[#allocation8 + $0x1e8] sm:$0xff]
    %v952 = vld [vmem:[#allocation8 + $0x1f0] sm:$0xff]
    %v953 = vld [vmem:[#allocation8 + $0x1f8] sm:$0xff]
    %v954 = vld [vmem:[#allocation8 + $0x200] sm:$0xff]
    %v955 = vld [vmem:[#allocation8 + $0x208] sm:$0xff]
    %v956 = vld [vmem:[#allocation8 + $0x210] sm:$0xff]
    %v957 = vld [vmem:[#allocation8 + $0x218] sm:$0xff]
    %v958 = vld [vmem:[#allocation8 + $0x220] sm:$0xff]
    %v959 = vld [vmem:[#allocation8 + $0x228] sm:$0xff]
    %v960 = vld [vmem:[#allocation8 + $0x230] sm:$0xff]
    %v961 = vld [vmem:[#allocation8 + $0x238] sm:$0xff]
    %v962 = vld [vmem:[#allocation8 + $0x240] sm:$0xff]
    %v963 = vld [vmem:[#allocation8 + $0x248] sm:$0xff]
    %v964 = vld [vmem:[#allocation8 + $0x250] sm:$0xff]
    %v965 = vld [vmem:[#allocation8 + $0x258] sm:$0xff]
    %v966 = vld [vmem:[#allocation8 + $0x260] sm:$0xff]
    %v967 = vld [vmem:[#allocation8 + $0x268] sm:$0xff]
    %v968 = vld [vmem:[#allocation8 + $0x270] sm:$0xff]
    %v969 = vld [vmem:[#allocation8 + $0x278] sm:$0xff]
    %v970 = vld [vmem:[#allocation8 + $0x280] sm:$0xff]
    %v971 = vld [vmem:[#allocation8 + $0x288] sm:$0xff]
    %v972 = vld [vmem:[#allocation8 + $0x290] sm:$0xff]
    %v973 = vld [vmem:[#allocation8 + $0x298] sm:$0xff]
    %v974 = vld [vmem:[#allocation8 + $0x2a0] sm:$0xff]
    %v975 = vld [vmem:[#allocation8 + $0x2a8] sm:$0xff]
    %v976 = vld [vmem:[#allocation8 + $0x2b0] sm:$0xff]
    %v977 = vld [vmem:[#allocation8 + $0x2b8] sm:$0xff]
    %v978 = vld [vmem:[#allocation8 + $0x2c0] sm:$0xff]
    %v979 = vld [vmem:[#allocation8 + $0x2c8] sm:$0xff]
    %v980 = vld [vmem:[#allocation8 + $0x2d0] sm:$0xff]
    %v981 = vld [vmem:[#allocation8 + $0x2d8] sm:$0xff]
    %v982 = vld [vmem:[#allocation8 + $0x2e0] sm:$0xff]
    %v983 = vld [vmem:[#allocation8 + $0x2e8] sm:$0xff]
    %v984 = vld [vmem:[#allocation8 + $0x2f0] sm:$0xff]
    %v985 = vld [vmem:[#allocation8 + $0x2f8] sm:$0xff]
    %v986 = vld [vmem:[#allocation8 + $0x300] sm:$0xff]
    %v987 = vld [vmem:[#allocation8 + $0x308] sm:$0xff]
    %v988 = vld [vmem:[#allocation8 + $0x310] sm:$0xff]
    %v989 = vld [vmem:[#allocation8 + $0x318] sm:$0xff]
    %v990 = vld [vmem:[#allocation8 + $0x320] sm:$0xff]
    %v991 = vld [vmem:[#allocation8 + $0x328] sm:$0xff]
    %v992 = vld [vmem:[#allocation8 + $0x330] sm:$0xff]
    %v993 = vld [vmem:[#allocation8 + $0x338] sm:$0xff]
    %v994 = vld [vmem:[#allocation8 + $0x340] sm:$0xff]
    %v995 = vld [vmem:[#allocation8 + $0x348] sm:$0xff]
    %v996 = vld [vmem:[#allocation8 + $0x350] sm:$0xff]
    %v997 = vld [vmem:[#allocation8 + $0x358] sm:$0xff]
    %v998 = vld [vmem:[#allocation8 + $0x360] sm:$0xff]
    %v999 = vld [vmem:[#allocation8 + $0x368] sm:$0xff]
    %v1000 = vld [vmem:[#allocation8 + $0x370] sm:$0xff]
    %v1001 = vld [vmem:[#allocation8 + $0x378] sm:$0xff]
    %v1002 = vld [vmem:[#allocation8 + $0x380] sm:$0xff]
    %v1003 = vld [vmem:[#allocation8 + $0x388] sm:$0xff]
    %v1004 = vld [vmem:[#allocation8 + $0x390] sm:$0xff]
    %v1005 = vld [vmem:[#allocation8 + $0x398] sm:$0xff]
    %v1006 = vld [vmem:[#allocation8 + $0x3a0] sm:$0xff]
    %v1007 = vld [vmem:[#allocation8 + $0x3a8] sm:$0xff]
    %v1008 = vld [vmem:[#allocation8 + $0x3b0] sm:$0xff]
    %v1009 = vld [vmem:[#allocation8 + $0x3b8] sm:$0xff]
    %v1010 = vld [vmem:[#allocation8 + $0x3c0] sm:$0xff]
    %v1011 = vld [vmem:[#allocation8 + $0x3c8] sm:$0xff]
    %v1012 = vld [vmem:[#allocation8 + $0x3d0] sm:$0xff]
    %v1013 = vld [vmem:[#allocation8 + $0x3d8] sm:$0xff]
    %v1014 = vld [vmem:[#allocation8 + $0x3e0] sm:$0xff]
    %v1015 = vld [vmem:[#allocation8 + $0x3e8] sm:$0xff]
    %v1016 = vld [vmem:[#allocation8 + $0x3f0] sm:$0xff]
    %v1017 = vld [vmem:[#allocation8 + $0x3f8] sm:$0xff]
    %v1018 = vld [vmem:[#allocation8 + $0x400] sm:$0xff]
    %v1019 = vld [vmem:[#allocation8 + $0x408] sm:$0xff]
    %v1020 = vld [vmem:[#allocation8 + $0x410] sm:$0xff]
    %v1021 = vld [vmem:[#allocation8 + $0x418] sm:$0xff]
    %v1022 = vld [vmem:[#allocation8 + $0x420] sm:$0xff]
    %v1023 = vld [vmem:[#allocation8 + $0x428] sm:$0xff]
    %v1024 = vld [vmem:[#allocation8 + $0x430] sm:$0xff]
    %v1025 = vld [vmem:[#allocation8 + $0x438] sm:$0xff]
    %v1026 = vld [vmem:[#allocation8 + $0x440] sm:$0xff]
    %v1027 = vld [vmem:[#allocation8 + $0x448] sm:$0xff]
    %v1028 = vld [vmem:[#allocation8 + $0x450] sm:$0xff]
    %v1029 = vld [vmem:[#allocation8 + $0x458] sm:$0xff]
    %v1030 = vld [vmem:[#allocation8 + $0x460] sm:$0xff]
    %v1031 = vld [vmem:[#allocation8 + $0x468] sm:$0xff]
    %v1032 = vld [vmem:[#allocation8 + $0x470] sm:$0xff]
    %v1033 = vld [vmem:[#allocation8 + $0x478] sm:$0xff]
    %v1034 = vld [vmem:[#allocation8 + $0x480] sm:$0xff]
    %v1035 = vld [vmem:[#allocation8 + $0x488] sm:$0xff]
    %v1036 = vld [vmem:[#allocation8 + $0x490] sm:$0xff]
    %v1037 = vld [vmem:[#allocation8 + $0x498] sm:$0xff]
    %v1038 = vld [vmem:[#allocation8 + $0x4a0] sm:$0xff]
    %v1039 = vld [vmem:[#allocation8 + $0x4a8] sm:$0xff]
    %v1040 = vld [vmem:[#allocation8 + $0x4b0] sm:$0xff]
    %v1041 = vld [vmem:[#allocation8 + $0x4b8] sm:$0xff]
    %v1042 = vld [vmem:[#allocation8 + $0x4c0] sm:$0xff]
    %v1043 = vld [vmem:[#allocation8 + $0x4c8] sm:$0xff]
    %v1044 = vld [vmem:[#allocation8 + $0x4d0] sm:$0xff]
    %v1045 = vld [vmem:[#allocation8 + $0x4d8] sm:$0xff]
    %v1046 = vld [vmem:[#allocation8 + $0x4e0] sm:$0xff]
    %v1047 = vld [vmem:[#allocation8 + $0x4e8] sm:$0xff]
    %v1048 = vld [vmem:[#allocation8 + $0x4f0] sm:$0xff]
    %v1049 = vld [vmem:[#allocation8 + $0x4f8] sm:$0xff]
    %v1050 = vld [vmem:[#allocation8 + $0x500] sm:$0xff]
    %v1051 = vld [vmem:[#allocation8 + $0x508] sm:$0xff]
    %v1052 = vld [vmem:[#allocation8 + $0x510] sm:$0xff]
    %v1053 = vld [vmem:[#allocation8 + $0x518] sm:$0xff]
    %v1054 = vld [vmem:[#allocation8 + $0x520] sm:$0xff]
    %v1055 = vld [vmem:[#allocation8 + $0x528] sm:$0xff]
    %v1056 = vld [vmem:[#allocation8 + $0x530] sm:$0xff]
    %v1057 = vld [vmem:[#allocation8 + $0x538] sm:$0xff]
    %v1058 = vld [vmem:[#allocation8 + $0x540] sm:$0xff]
    %v1059 = vld [vmem:[#allocation8 + $0x548] sm:$0xff]
    %v1060 = vld [vmem:[#allocation8 + $0x550] sm:$0xff]
    %v1061 = vld [vmem:[#allocation8 + $0x558] sm:$0xff]
    %v1062 = vld [vmem:[#allocation8 + $0x560] sm:$0xff]
    %v1063 = vld [vmem:[#allocation8 + $0x568] sm:$0xff]
    %v1064 = vld [vmem:[#allocation8 + $0x570] sm:$0xff]
    %v1065 = vld [vmem:[#allocation8 + $0x578] sm:$0xff]
    %v1066 = vld [vmem:[#allocation8 + $0x580] sm:$0xff]
    %v1067 = vld [vmem:[#allocation8 + $0x588] sm:$0xff]
    %v1068 = vld [vmem:[#allocation8 + $0x590] sm:$0xff]
    %v1069 = vld [vmem:[#allocation8 + $0x598] sm:$0xff]
    %v1070 = vld [vmem:[#allocation8 + $0x5a0] sm:$0xff]
    %v1071 = vld [vmem:[#allocation8 + $0x5a8] sm:$0xff]
    %v1072 = vld [vmem:[#allocation8 + $0x5b0] sm:$0xff]
    %v1073 = vld [vmem:[#allocation8 + $0x5b8] sm:$0xff]
    %v1074 = vld [vmem:[#allocation8 + $0x5c0] sm:$0xff]
    %v1075 = vld [vmem:[#allocation8 + $0x5c8] sm:$0xff]
    %v1076 = vld [vmem:[#allocation8 + $0x5d0] sm:$0xff]
    %v1077 = vld [vmem:[#allocation8 + $0x5d8] sm:$0xff]
    %v1078 = vld [vmem:[#allocation8 + $0x5e0] sm:$0xff]
    %v1079 = vld [vmem:[#allocation8 + $0x5e8] sm:$0xff]
    %v1080 = vld [vmem:[#allocation8 + $0x5f0] sm:$0xff]
    %v1081 = vld [vmem:[#allocation8 + $0x5f8] sm:$0xff]
    %v1082 = vld [vmem:[#allocation8 + $0x600] sm:$0xff]
    %v1083 = vld [vmem:[#allocation8 + $0x608] sm:$0xff]
    %v1084 = vld [vmem:[#allocation8 + $0x610] sm:$0xff]
    %v1085 = vld [vmem:[#allocation8 + $0x618] sm:$0xff]
    %v1086 = vld [vmem:[#allocation8 + $0x620] sm:$0xff]
    %v1087 = vld [vmem:[#allocation8 + $0x628] sm:$0xff]
    %v1088 = vld [vmem:[#allocation8 + $0x630] sm:$0xff]
    %v1089 = vld [vmem:[#allocation8 + $0x638] sm:$0xff]
    %v1090 = vld [vmem:[#allocation8 + $0x640] sm:$0xff]
    %v1091 = vld [vmem:[#allocation8 + $0x648] sm:$0xff]
    %v1092 = vld [vmem:[#allocation8 + $0x650] sm:$0xff]
    %v1093 = vld [vmem:[#allocation8 + $0x658] sm:$0xff]
    %v1094 = vld [vmem:[#allocation8 + $0x660] sm:$0xff]
    %v1095 = vld [vmem:[#allocation8 + $0x668] sm:$0xff]
    %v1096 = vld [vmem:[#allocation8 + $0x670] sm:$0xff]
    %v1097 = vld [vmem:[#allocation8 + $0x678] sm:$0xff]
    %v1098 = vld [vmem:[#allocation8 + $0x680] sm:$0xff]
    %v1099 = vld [vmem:[#allocation8 + $0x688] sm:$0xff]
    %v1100 = vld [vmem:[#allocation8 + $0x690] sm:$0xff]
    %v1101 = vld [vmem:[#allocation8 + $0x698] sm:$0xff]
    %v1102 = vld [vmem:[#allocation8 + $0x6a0] sm:$0xff]
    %v1103 = vld [vmem:[#allocation8 + $0x6a8] sm:$0xff]
    %v1104 = vld [vmem:[#allocation8 + $0x6b0] sm:$0xff]
    %v1105 = vld [vmem:[#allocation8 + $0x6b8] sm:$0xff]
    %v1106 = vld [vmem:[#allocation8 + $0x6c0] sm:$0xff]
    %v1107 = vld [vmem:[#allocation8 + $0x6c8] sm:$0xff]
    %v1108 = vld [vmem:[#allocation8 + $0x6d0] sm:$0xff]
    %v1109 = vld [vmem:[#allocation8 + $0x6d8] sm:$0xff]
    %v1110 = vld [vmem:[#allocation8 + $0x6e0] sm:$0xff]
    %v1111 = vld [vmem:[#allocation8 + $0x6e8] sm:$0xff]
    %v1112 = vld [vmem:[#allocation8 + $0x6f0] sm:$0xff]
    %v1113 = vld [vmem:[#allocation8 + $0x6f8] sm:$0xff]
    %v1114 = vld [vmem:[#allocation8 + $0x700] sm:$0xff]
    %v1115 = vld [vmem:[#allocation8 + $0x708] sm:$0xff]
    %v1116 = vld [vmem:[#allocation8 + $0x710] sm:$0xff]
    %v1117 = vld [vmem:[#allocation8 + $0x718] sm:$0xff]
    %v1118 = vld [vmem:[#allocation8 + $0x720] sm:$0xff]
    %v1119 = vld [vmem:[#allocation8 + $0x728] sm:$0xff]
    %v1120 = vld [vmem:[#allocation8 + $0x730] sm:$0xff]
    %v1121 = vld [vmem:[#allocation8 + $0x738] sm:$0xff]
    %v1122 = vld [vmem:[#allocation8 + $0x740] sm:$0xff]
    %v1123 = vld [vmem:[#allocation8 + $0x748] sm:$0xff]
    %v1124 = vld [vmem:[#allocation8 + $0x750] sm:$0xff]
    %v1125 = vld [vmem:[#allocation8 + $0x758] sm:$0xff]
    %v1126 = vld [vmem:[#allocation8 + $0x760] sm:$0xff]
    %v1127 = vld [vmem:[#allocation8 + $0x768] sm:$0xff]
    %v1128 = vld [vmem:[#allocation8 + $0x770] sm:$0xff]
    %v1129 = vld [vmem:[#allocation8 + $0x778] sm:$0xff]
    %v1130 = vld [vmem:[#allocation8 + $0x780] sm:$0xff]
    %v1131 = vld [vmem:[#allocation8 + $0x788] sm:$0xff]
    %v1132 = vld [vmem:[#allocation8 + $0x790] sm:$0xff]
    %v1133 = vld [vmem:[#allocation8 + $0x798] sm:$0xff]
    %v1134 = vld [vmem:[#allocation8 + $0x7a0] sm:$0xff]
    %v1135 = vld [vmem:[#allocation8 + $0x7a8] sm:$0xff]
    %v1136 = vld [vmem:[#allocation8 + $0x7b0] sm:$0xff]
    %v1137 = vld [vmem:[#allocation8 + $0x7b8] sm:$0xff]
    %v1138 = vld [vmem:[#allocation8 + $0x7c0] sm:$0xff]
    %v1139 = vld [vmem:[#allocation8 + $0x7c8] sm:$0xff]
    %v1140 = vld [vmem:[#allocation8 + $0x7d0] sm:$0xff]
    %v1141 = vld [vmem:[#allocation8 + $0x7d8] sm:$0xff]
    %v1142 = vld [vmem:[#allocation8 + $0x7e0] sm:$0xff]
    %v1143 = vld [vmem:[#allocation8 + $0x7e8] sm:$0xff]
    %v1144 = vld [vmem:[#allocation8 + $0x7f0] sm:$0xff]
    %v1145 = vld [vmem:[#allocation8 + $0x7f8] sm:$0xff]
    %v1146 = vld [vmem:[%s4] sm:$0xf]
    %v1148 = vlaneseq
    %v1149 = vshrl.u32 %v1148, 7
    %v1150 = vsub.s32 0, %v1149
    %v1151 = vrot.slane %v1146, %v1150
    %v1152 = vlaneseq
    %v1153 = vshrl.u32 %v1152, 7
    %v1154 = vsub.s32 1, %v1153
    %v1155 = vrot.slane %v1146, %v1154
    %v1156 = vlaneseq
    %v1157 = vshrl.u32 %v1156, 7
    %v1158 = vsub.s32 2, %v1157
    %v1159 = vrot.slane %v1146, %v1158
    %v1160 = vlaneseq
    %v1161 = vshrl.u32 %v1160, 7
    %v1162 = vsub.s32 3, %v1161
    %v1163 = vrot.slane %v1146, %v1162
    %v1424 = vunpack.c.l.b16 %v890
    %v1425 = vunpack.c.h.b16 %v890
    %v1426 = vunpack.c.l.b16 %v891
    %v1427 = vunpack.c.h.b16 %v891
    %v1428 = vunpack.c.l.b16 %v892
    %v1429 = vunpack.c.h.b16 %v892
    %v1430 = vunpack.c.l.b16 %v893
    %v1431 = vunpack.c.h.b16 %v893
    %v1432 = vunpack.c.l.b16 %v894
    %v1433 = vunpack.c.h.b16 %v894
    %v1434 = vunpack.c.l.b16 %v895
    %v1435 = vunpack.c.h.b16 %v895
    %v1436 = vunpack.c.l.b16 %v896
    %v1437 = vunpack.c.h.b16 %v896
    %v1438 = vunpack.c.l.b16 %v897
    %v1439 = vunpack.c.h.b16 %v897
    %v1440 = vunpack.c.l.b16 %v898
    %v1441 = vunpack.c.h.b16 %v898
    %v1442 = vunpack.c.l.b16 %v899
    %v1443 = vunpack.c.h.b16 %v899
    %v1444 = vunpack.c.l.b16 %v900
    %v1445 = vunpack.c.h.b16 %v900
    %v1446 = vunpack.c.l.b16 %v901
    %v1447 = vunpack.c.h.b16 %v901
    %v1448 = vunpack.c.l.b16 %v902
    %v1449 = vunpack.c.h.b16 %v902
    %v1450 = vunpack.c.l.b16 %v903
    %v1451 = vunpack.c.h.b16 %v903
    %v1452 = vunpack.c.l.b16 %v904
    %v1453 = vunpack.c.h.b16 %v904
    %v1454 = vunpack.c.l.b16 %v905
    %v1455 = vunpack.c.h.b16 %v905
    %v1456 = vunpack.c.l.b16 %v906
    %v1457 = vunpack.c.h.b16 %v906
    %v1458 = vunpack.c.l.b16 %v907
    %v1459 = vunpack.c.h.b16 %v907
    %v1460 = vunpack.c.l.b16 %v908
    %v1461 = vunpack.c.h.b16 %v908
    %v1462 = vunpack.c.l.b16 %v909
    %v1463 = vunpack.c.h.b16 %v909
    %v1464 = vunpack.c.l.b16 %v910
    %v1465 = vunpack.c.h.b16 %v910
    %v1466 = vunpack.c.l.b16 %v911
    %v1467 = vunpack.c.h.b16 %v911
    %v1468 = vunpack.c.l.b16 %v912
    %v1469 = vunpack.c.h.b16 %v912
    %v1470 = vunpack.c.l.b16 %v913
    %v1471 = vunpack.c.h.b16 %v913
    %v1472 = vunpack.c.l.b16 %v914
    %v1473 = vunpack.c.h.b16 %v914
    %v1474 = vunpack.c.l.b16 %v915
    %v1475 = vunpack.c.h.b16 %v915
    %v1476 = vunpack.c.l.b16 %v916
    %v1477 = vunpack.c.h.b16 %v916
    %v1478 = vunpack.c.l.b16 %v917
    %v1479 = vunpack.c.h.b16 %v917
    %v1480 = vunpack.c.l.b16 %v918
    %v1481 = vunpack.c.h.b16 %v918
    %v1482 = vunpack.c.l.b16 %v919
    %v1483 = vunpack.c.h.b16 %v919
    %v1484 = vunpack.c.l.b16 %v920
    %v1485 = vunpack.c.h.b16 %v920
    %v1486 = vunpack.c.l.b16 %v921
    %v1487 = vunpack.c.h.b16 %v921
    %v1488 = vunpack.c.l.b16 %v922
    %v1489 = vunpack.c.h.b16 %v922
    %v1490 = vunpack.c.l.b16 %v923
    %v1491 = vunpack.c.h.b16 %v923
    %v1492 = vunpack.c.l.b16 %v924
    %v1493 = vunpack.c.h.b16 %v924
    %v1494 = vunpack.c.l.b16 %v925
    %v1495 = vunpack.c.h.b16 %v925
    %v1496 = vunpack.c.l.b16 %v926
    %v1497 = vunpack.c.h.b16 %v926
    %v1498 = vunpack.c.l.b16 %v927
    %v1499 = vunpack.c.h.b16 %v927
    %v1500 = vunpack.c.l.b16 %v928
    %v1501 = vunpack.c.h.b16 %v928
    %v1502 = vunpack.c.l.b16 %v929
    %v1503 = vunpack.c.h.b16 %v929
    %v1504 = vunpack.c.l.b16 %v930
    %v1505 = vunpack.c.h.b16 %v930
    %v1506 = vunpack.c.l.b16 %v931
    %v1507 = vunpack.c.h.b16 %v931
    %v1508 = vunpack.c.l.b16 %v932
    %v1509 = vunpack.c.h.b16 %v932
    %v1510 = vunpack.c.l.b16 %v933
    %v1511 = vunpack.c.h.b16 %v933
    %v1512 = vunpack.c.l.b16 %v934
    %v1513 = vunpack.c.h.b16 %v934
    %v1514 = vunpack.c.l.b16 %v935
    %v1515 = vunpack.c.h.b16 %v935
    %v1516 = vunpack.c.l.b16 %v936
    %v1517 = vunpack.c.h.b16 %v936
    %v1518 = vunpack.c.l.b16 %v937
    %v1519 = vunpack.c.h.b16 %v937
    %v1520 = vunpack.c.l.b16 %v938
    %v1521 = vunpack.c.h.b16 %v938
    %v1522 = vunpack.c.l.b16 %v939
    %v1523 = vunpack.c.h.b16 %v939
    %v1524 = vunpack.c.l.b16 %v940
    %v1525 = vunpack.c.h.b16 %v940
    %v1526 = vunpack.c.l.b16 %v941
    %v1527 = vunpack.c.h.b16 %v941
    %v1528 = vunpack.c.l.b16 %v942
    %v1529 = vunpack.c.h.b16 %v942
    %v1530 = vunpack.c.l.b16 %v943
    %v1531 = vunpack.c.h.b16 %v943
    %v1532 = vunpack.c.l.b16 %v944
    %v1533 = vunpack.c.h.b16 %v944
    %v1534 = vunpack.c.l.b16 %v945
    %v1535 = vunpack.c.h.b16 %v945
    %v1536 = vunpack.c.l.b16 %v946
    %v1537 = vunpack.c.h.b16 %v946
    %v1538 = vunpack.c.l.b16 %v947
    %v1539 = vunpack.c.h.b16 %v947
    %v1540 = vunpack.c.l.b16 %v948
    %v1541 = vunpack.c.h.b16 %v948
    %v1542 = vunpack.c.l.b16 %v949
    %v1543 = vunpack.c.h.b16 %v949
    %v1544 = vunpack.c.l.b16 %v950
    %v1545 = vunpack.c.h.b16 %v950
    %v1546 = vunpack.c.l.b16 %v951
    %v1547 = vunpack.c.h.b16 %v951
    %v1548 = vunpack.c.l.b16 %v952
    %v1549 = vunpack.c.h.b16 %v952
    %v1550 = vunpack.c.l.b16 %v953
    %v1551 = vunpack.c.h.b16 %v953
    %v1552 = vunpack.c.l.b16 %v954
    %v1553 = vunpack.c.h.b16 %v954
    %v1554 = vunpack.c.l.b16 %v955
    %v1555 = vunpack.c.h.b16 %v955
    %v1556 = vunpack.c.l.b16 %v956
    %v1557 = vunpack.c.h.b16 %v956
    %v1558 = vunpack.c.l.b16 %v957
    %v1559 = vunpack.c.h.b16 %v957
    %v1560 = vunpack.c.l.b16 %v958
    %v1561 = vunpack.c.h.b16 %v958
    %v1562 = vunpack.c.l.b16 %v959
    %v1563 = vunpack.c.h.b16 %v959
    %v1564 = vunpack.c.l.b16 %v960
    %v1565 = vunpack.c.h.b16 %v960
    %v1566 = vunpack.c.l.b16 %v961
    %v1567 = vunpack.c.h.b16 %v961
    %v1568 = vunpack.c.l.b16 %v962
    %v1569 = vunpack.c.h.b16 %v962
    %v1570 = vunpack.c.l.b16 %v963
    %v1571 = vunpack.c.h.b16 %v963
    %v1572 = vunpack.c.l.b16 %v964
    %v1573 = vunpack.c.h.b16 %v964
    %v1574 = vunpack.c.l.b16 %v965
    %v1575 = vunpack.c.h.b16 %v965
    %v1576 = vunpack.c.l.b16 %v966
    %v1577 = vunpack.c.h.b16 %v966
    %v1578 = vunpack.c.l.b16 %v967
    %v1579 = vunpack.c.h.b16 %v967
    %v1580 = vunpack.c.l.b16 %v968
    %v1581 = vunpack.c.h.b16 %v968
    %v1582 = vunpack.c.l.b16 %v969
    %v1583 = vunpack.c.h.b16 %v969
    %v1584 = vunpack.c.l.b16 %v970
    %v1585 = vunpack.c.h.b16 %v970
    %v1586 = vunpack.c.l.b16 %v971
    %v1587 = vunpack.c.h.b16 %v971
    %v1588 = vunpack.c.l.b16 %v972
    %v1589 = vunpack.c.h.b16 %v972
    %v1590 = vunpack.c.l.b16 %v973
    %v1591 = vunpack.c.h.b16 %v973
    %v1592 = vunpack.c.l.b16 %v974
    %v1593 = vunpack.c.h.b16 %v974
    %v1594 = vunpack.c.l.b16 %v975
    %v1595 = vunpack.c.h.b16 %v975
    %v1596 = vunpack.c.l.b16 %v976
    %v1597 = vunpack.c.h.b16 %v976
    %v1598 = vunpack.c.l.b16 %v977
    %v1599 = vunpack.c.h.b16 %v977
    %v1600 = vunpack.c.l.b16 %v978
    %v1601 = vunpack.c.h.b16 %v978
    %v1602 = vunpack.c.l.b16 %v979
    %v1603 = vunpack.c.h.b16 %v979
    %v1604 = vunpack.c.l.b16 %v980
    %v1605 = vunpack.c.h.b16 %v980
    %v1606 = vunpack.c.l.b16 %v981
    %v1607 = vunpack.c.h.b16 %v981
    %v1608 = vunpack.c.l.b16 %v982
    %v1609 = vunpack.c.h.b16 %v982
    %v1610 = vunpack.c.l.b16 %v983
    %v1611 = vunpack.c.h.b16 %v983
    %v1612 = vunpack.c.l.b16 %v984
    %v1613 = vunpack.c.h.b16 %v984
    %v1614 = vunpack.c.l.b16 %v985
    %v1615 = vunpack.c.h.b16 %v985
    %v1616 = vunpack.c.l.b16 %v986
    %v1617 = vunpack.c.h.b16 %v986
    %v1618 = vunpack.c.l.b16 %v987
    %v1619 = vunpack.c.h.b16 %v987
    %v1620 = vunpack.c.l.b16 %v988
    %v1621 = vunpack.c.h.b16 %v988
    %v1622 = vunpack.c.l.b16 %v989
    %v1623 = vunpack.c.h.b16 %v989
    %v1624 = vunpack.c.l.b16 %v990
    %v1625 = vunpack.c.h.b16 %v990
    %v1626 = vunpack.c.l.b16 %v991
    %v1627 = vunpack.c.h.b16 %v991
    %v1628 = vunpack.c.l.b16 %v992
    %v1629 = vunpack.c.h.b16 %v992
    %v1630 = vunpack.c.l.b16 %v993
    %v1631 = vunpack.c.h.b16 %v993
    %v1632 = vunpack.c.l.b16 %v994
    %v1633 = vunpack.c.h.b16 %v994
    %v1634 = vunpack.c.l.b16 %v995
    %v1635 = vunpack.c.h.b16 %v995
    %v1636 = vunpack.c.l.b16 %v996
    %v1637 = vunpack.c.h.b16 %v996
    %v1638 = vunpack.c.l.b16 %v997
    %v1639 = vunpack.c.h.b16 %v997
    %v1640 = vunpack.c.l.b16 %v998
    %v1641 = vunpack.c.h.b16 %v998
    %v1642 = vunpack.c.l.b16 %v999
    %v1643 = vunpack.c.h.b16 %v999
    %v1644 = vunpack.c.l.b16 %v1000
    %v1645 = vunpack.c.h.b16 %v1000
    %v1646 = vunpack.c.l.b16 %v1001
    %v1647 = vunpack.c.h.b16 %v1001
    %v1648 = vunpack.c.l.b16 %v1002
    %v1649 = vunpack.c.h.b16 %v1002
    %v1650 = vunpack.c.l.b16 %v1003
    %v1651 = vunpack.c.h.b16 %v1003
    %v1652 = vunpack.c.l.b16 %v1004
    %v1653 = vunpack.c.h.b16 %v1004
    %v1654 = vunpack.c.l.b16 %v1005
    %v1655 = vunpack.c.h.b16 %v1005
    %v1656 = vunpack.c.l.b16 %v1006
    %v1657 = vunpack.c.h.b16 %v1006
    %v1658 = vunpack.c.l.b16 %v1007
    %v1659 = vunpack.c.h.b16 %v1007
    %v1660 = vunpack.c.l.b16 %v1008
    %v1661 = vunpack.c.h.b16 %v1008
    %v1662 = vunpack.c.l.b16 %v1009
    %v1663 = vunpack.c.h.b16 %v1009
    %v1664 = vunpack.c.l.b16 %v1010
    %v1665 = vunpack.c.h.b16 %v1010
    %v1666 = vunpack.c.l.b16 %v1011
    %v1667 = vunpack.c.h.b16 %v1011
    %v1668 = vunpack.c.l.b16 %v1012
    %v1669 = vunpack.c.h.b16 %v1012
    %v1670 = vunpack.c.l.b16 %v1013
    %v1671 = vunpack.c.h.b16 %v1013
    %v1672 = vunpack.c.l.b16 %v1014
    %v1673 = vunpack.c.h.b16 %v1014
    %v1674 = vunpack.c.l.b16 %v1015
    %v1675 = vunpack.c.h.b16 %v1015
    %v1676 = vunpack.c.l.b16 %v1016
    %v1677 = vunpack.c.h.b16 %v1016
    %v1678 = vunpack.c.l.b16 %v1017
    %v1679 = vunpack.c.h.b16 %v1017
    %v1680 = vunpack.c.l.b16 %v1018
    %v1681 = vunpack.c.h.b16 %v1018
    %v1682 = vunpack.c.l.b16 %v1019
    %v1683 = vunpack.c.h.b16 %v1019
    %v1684 = vunpack.c.l.b16 %v1020
    %v1685 = vunpack.c.h.b16 %v1020
    %v1686 = vunpack.c.l.b16 %v1021
    %v1687 = vunpack.c.h.b16 %v1021
    %v1688 = vunpack.c.l.b16 %v1022
    %v1689 = vunpack.c.h.b16 %v1022
    %v1690 = vunpack.c.l.b16 %v1023
    %v1691 = vunpack.c.h.b16 %v1023
    %v1692 = vunpack.c.l.b16 %v1024
    %v1693 = vunpack.c.h.b16 %v1024
    %v1694 = vunpack.c.l.b16 %v1025
    %v1695 = vunpack.c.h.b16 %v1025
    %v1696 = vunpack.c.l.b16 %v1026
    %v1697 = vunpack.c.h.b16 %v1026
    %v1698 = vunpack.c.l.b16 %v1027
    %v1699 = vunpack.c.h.b16 %v1027
    %v1700 = vunpack.c.l.b16 %v1028
    %v1701 = vunpack.c.h.b16 %v1028
    %v1702 = vunpack.c.l.b16 %v1029
    %v1703 = vunpack.c.h.b16 %v1029
    %v1704 = vunpack.c.l.b16 %v1030
    %v1705 = vunpack.c.h.b16 %v1030
    %v1706 = vunpack.c.l.b16 %v1031
    %v1707 = vunpack.c.h.b16 %v1031
    %v1708 = vunpack.c.l.b16 %v1032
    %v1709 = vunpack.c.h.b16 %v1032
    %v1710 = vunpack.c.l.b16 %v1033
    %v1711 = vunpack.c.h.b16 %v1033
    %v1712 = vunpack.c.l.b16 %v1034
    %v1713 = vunpack.c.h.b16 %v1034
    %v1714 = vunpack.c.l.b16 %v1035
    %v1715 = vunpack.c.h.b16 %v1035
    %v1716 = vunpack.c.l.b16 %v1036
    %v1717 = vunpack.c.h.b16 %v1036
    %v1718 = vunpack.c.l.b16 %v1037
    %v1719 = vunpack.c.h.b16 %v1037
    %v1720 = vunpack.c.l.b16 %v1038
    %v1721 = vunpack.c.h.b16 %v1038
    %v1722 = vunpack.c.l.b16 %v1039
    %v1723 = vunpack.c.h.b16 %v1039
    %v1724 = vunpack.c.l.b16 %v1040
    %v1725 = vunpack.c.h.b16 %v1040
    %v1726 = vunpack.c.l.b16 %v1041
    %v1727 = vunpack.c.h.b16 %v1041
    %v1728 = vunpack.c.l.b16 %v1042
    %v1729 = vunpack.c.h.b16 %v1042
    %v1730 = vunpack.c.l.b16 %v1043
    %v1731 = vunpack.c.h.b16 %v1043
    %v1732 = vunpack.c.l.b16 %v1044
    %v1733 = vunpack.c.h.b16 %v1044
    %v1734 = vunpack.c.l.b16 %v1045
    %v1735 = vunpack.c.h.b16 %v1045
    %v1736 = vunpack.c.l.b16 %v1046
    %v1737 = vunpack.c.h.b16 %v1046
    %v1738 = vunpack.c.l.b16 %v1047
    %v1739 = vunpack.c.h.b16 %v1047
    %v1740 = vunpack.c.l.b16 %v1048
    %v1741 = vunpack.c.h.b16 %v1048
    %v1742 = vunpack.c.l.b16 %v1049
    %v1743 = vunpack.c.h.b16 %v1049
    %v1744 = vunpack.c.l.b16 %v1050
    %v1745 = vunpack.c.h.b16 %v1050
    %v1746 = vunpack.c.l.b16 %v1051
    %v1747 = vunpack.c.h.b16 %v1051
    %v1748 = vunpack.c.l.b16 %v1052
    %v1749 = vunpack.c.h.b16 %v1052
    %v1750 = vunpack.c.l.b16 %v1053
    %v1751 = vunpack.c.h.b16 %v1053
    %v1752 = vunpack.c.l.b16 %v1054
    %v1753 = vunpack.c.h.b16 %v1054
    %v1754 = vunpack.c.l.b16 %v1055
    %v1755 = vunpack.c.h.b16 %v1055
    %v1756 = vunpack.c.l.b16 %v1056
    %v1757 = vunpack.c.h.b16 %v1056
    %v1758 = vunpack.c.l.b16 %v1057
    %v1759 = vunpack.c.h.b16 %v1057
    %v1760 = vunpack.c.l.b16 %v1058
    %v1761 = vunpack.c.h.b16 %v1058
    %v1762 = vunpack.c.l.b16 %v1059
    %v1763 = vunpack.c.h.b16 %v1059
    %v1764 = vunpack.c.l.b16 %v1060
    %v1765 = vunpack.c.h.b16 %v1060
    %v1766 = vunpack.c.l.b16 %v1061
    %v1767 = vunpack.c.h.b16 %v1061
    %v1768 = vunpack.c.l.b16 %v1062
    %v1769 = vunpack.c.h.b16 %v1062
    %v1770 = vunpack.c.l.b16 %v1063
    %v1771 = vunpack.c.h.b16 %v1063
    %v1772 = vunpack.c.l.b16 %v1064
    %v1773 = vunpack.c.h.b16 %v1064
    %v1774 = vunpack.c.l.b16 %v1065
    %v1775 = vunpack.c.h.b16 %v1065
    %v1776 = vunpack.c.l.b16 %v1066
    %v1777 = vunpack.c.h.b16 %v1066
    %v1778 = vunpack.c.l.b16 %v1067
    %v1779 = vunpack.c.h.b16 %v1067
    %v1780 = vunpack.c.l.b16 %v1068
    %v1781 = vunpack.c.h.b16 %v1068
    %v1782 = vunpack.c.l.b16 %v1069
    %v1783 = vunpack.c.h.b16 %v1069
    %v1784 = vunpack.c.l.b16 %v1070
    %v1785 = vunpack.c.h.b16 %v1070
    %v1786 = vunpack.c.l.b16 %v1071
    %v1787 = vunpack.c.h.b16 %v1071
    %v1788 = vunpack.c.l.b16 %v1072
    %v1789 = vunpack.c.h.b16 %v1072
    %v1790 = vunpack.c.l.b16 %v1073
    %v1791 = vunpack.c.h.b16 %v1073
    %v1792 = vunpack.c.l.b16 %v1074
    %v1793 = vunpack.c.h.b16 %v1074
    %v1794 = vunpack.c.l.b16 %v1075
    %v1795 = vunpack.c.h.b16 %v1075
    %v1796 = vunpack.c.l.b16 %v1076
    %v1797 = vunpack.c.h.b16 %v1076
    %v1798 = vunpack.c.l.b16 %v1077
    %v1799 = vunpack.c.h.b16 %v1077
    %v1800 = vunpack.c.l.b16 %v1078
    %v1801 = vunpack.c.h.b16 %v1078
    %v1802 = vunpack.c.l.b16 %v1079
    %v1803 = vunpack.c.h.b16 %v1079
    %v1804 = vunpack.c.l.b16 %v1080
    %v1805 = vunpack.c.h.b16 %v1080
    %v1806 = vunpack.c.l.b16 %v1081
    %v1807 = vunpack.c.h.b16 %v1081
    %v1808 = vunpack.c.l.b16 %v1082
    %v1809 = vunpack.c.h.b16 %v1082
    %v1810 = vunpack.c.l.b16 %v1083
    %v1811 = vunpack.c.h.b16 %v1083
    %v1812 = vunpack.c.l.b16 %v1084
    %v1813 = vunpack.c.h.b16 %v1084
    %v1814 = vunpack.c.l.b16 %v1085
    %v1815 = vunpack.c.h.b16 %v1085
    %v1816 = vunpack.c.l.b16 %v1086
    %v1817 = vunpack.c.h.b16 %v1086
    %v1818 = vunpack.c.l.b16 %v1087
    %v1819 = vunpack.c.h.b16 %v1087
    %v1820 = vunpack.c.l.b16 %v1088
    %v1821 = vunpack.c.h.b16 %v1088
    %v1822 = vunpack.c.l.b16 %v1089
    %v1823 = vunpack.c.h.b16 %v1089
    %v1824 = vunpack.c.l.b16 %v1090
    %v1825 = vunpack.c.h.b16 %v1090
    %v1826 = vunpack.c.l.b16 %v1091
    %v1827 = vunpack.c.h.b16 %v1091
    %v1828 = vunpack.c.l.b16 %v1092
    %v1829 = vunpack.c.h.b16 %v1092
    %v1830 = vunpack.c.l.b16 %v1093
    %v1831 = vunpack.c.h.b16 %v1093
    %v1832 = vunpack.c.l.b16 %v1094
    %v1833 = vunpack.c.h.b16 %v1094
    %v1834 = vunpack.c.l.b16 %v1095
    %v1835 = vunpack.c.h.b16 %v1095
    %v1836 = vunpack.c.l.b16 %v1096
    %v1837 = vunpack.c.h.b16 %v1096
    %v1838 = vunpack.c.l.b16 %v1097
    %v1839 = vunpack.c.h.b16 %v1097
    %v1840 = vunpack.c.l.b16 %v1098
    %v1841 = vunpack.c.h.b16 %v1098
    %v1842 = vunpack.c.l.b16 %v1099
    %v1843 = vunpack.c.h.b16 %v1099
    %v1844 = vunpack.c.l.b16 %v1100
    %v1845 = vunpack.c.h.b16 %v1100
    %v1846 = vunpack.c.l.b16 %v1101
    %v1847 = vunpack.c.h.b16 %v1101
    %v1848 = vunpack.c.l.b16 %v1102
    %v1849 = vunpack.c.h.b16 %v1102
    %v1850 = vunpack.c.l.b16 %v1103
    %v1851 = vunpack.c.h.b16 %v1103
    %v1852 = vunpack.c.l.b16 %v1104
    %v1853 = vunpack.c.h.b16 %v1104
    %v1854 = vunpack.c.l.b16 %v1105
    %v1855 = vunpack.c.h.b16 %v1105
    %v1856 = vunpack.c.l.b16 %v1106
    %v1857 = vunpack.c.h.b16 %v1106
    %v1858 = vunpack.c.l.b16 %v1107
    %v1859 = vunpack.c.h.b16 %v1107
    %v1860 = vunpack.c.l.b16 %v1108
    %v1861 = vunpack.c.h.b16 %v1108
    %v1862 = vunpack.c.l.b16 %v1109
    %v1863 = vunpack.c.h.b16 %v1109
    %v1864 = vunpack.c.l.b16 %v1110
    %v1865 = vunpack.c.h.b16 %v1110
    %v1866 = vunpack.c.l.b16 %v1111
    %v1867 = vunpack.c.h.b16 %v1111
    %v1868 = vunpack.c.l.b16 %v1112
    %v1869 = vunpack.c.h.b16 %v1112
    %v1870 = vunpack.c.l.b16 %v1113
    %v1871 = vunpack.c.h.b16 %v1113
    %v1872 = vunpack.c.l.b16 %v1114
    %v1873 = vunpack.c.h.b16 %v1114
    %v1874 = vunpack.c.l.b16 %v1115
    %v1875 = vunpack.c.h.b16 %v1115
    %v1876 = vunpack.c.l.b16 %v1116
    %v1877 = vunpack.c.h.b16 %v1116
    %v1878 = vunpack.c.l.b16 %v1117
    %v1879 = vunpack.c.h.b16 %v1117
    %v1880 = vunpack.c.l.b16 %v1118
    %v1881 = vunpack.c.h.b16 %v1118
    %v1882 = vunpack.c.l.b16 %v1119
    %v1883 = vunpack.c.h.b16 %v1119
    %v1884 = vunpack.c.l.b16 %v1120
    %v1885 = vunpack.c.h.b16 %v1120
    %v1886 = vunpack.c.l.b16 %v1121
    %v1887 = vunpack.c.h.b16 %v1121
    %v1888 = vunpack.c.l.b16 %v1122
    %v1889 = vunpack.c.h.b16 %v1122
    %v1890 = vunpack.c.l.b16 %v1123
    %v1891 = vunpack.c.h.b16 %v1123
    %v1892 = vunpack.c.l.b16 %v1124
    %v1893 = vunpack.c.h.b16 %v1124
    %v1894 = vunpack.c.l.b16 %v1125
    %v1895 = vunpack.c.h.b16 %v1125
    %v1896 = vunpack.c.l.b16 %v1126
    %v1897 = vunpack.c.h.b16 %v1126
    %v1898 = vunpack.c.l.b16 %v1127
    %v1899 = vunpack.c.h.b16 %v1127
    %v1900 = vunpack.c.l.b16 %v1128
    %v1901 = vunpack.c.h.b16 %v1128
    %v1902 = vunpack.c.l.b16 %v1129
    %v1903 = vunpack.c.h.b16 %v1129
    %v1904 = vunpack.c.l.b16 %v1130
    %v1905 = vunpack.c.h.b16 %v1130
    %v1906 = vunpack.c.l.b16 %v1131
    %v1907 = vunpack.c.h.b16 %v1131
    %v1908 = vunpack.c.l.b16 %v1132
    %v1909 = vunpack.c.h.b16 %v1132
    %v1910 = vunpack.c.l.b16 %v1133
    %v1911 = vunpack.c.h.b16 %v1133
    %v1912 = vunpack.c.l.b16 %v1134
    %v1913 = vunpack.c.h.b16 %v1134
    %v1914 = vunpack.c.l.b16 %v1135
    %v1915 = vunpack.c.h.b16 %v1135
    %v1916 = vunpack.c.l.b16 %v1136
    %v1917 = vunpack.c.h.b16 %v1136
    %v1918 = vunpack.c.l.b16 %v1137
    %v1919 = vunpack.c.h.b16 %v1137
    %v1920 = vunpack.c.l.b16 %v1138
    %v1921 = vunpack.c.h.b16 %v1138
    %v1922 = vunpack.c.l.b16 %v1139
    %v1923 = vunpack.c.h.b16 %v1139
    %v1924 = vunpack.c.l.b16 %v1140
    %v1925 = vunpack.c.h.b16 %v1140
    %v1926 = vunpack.c.l.b16 %v1141
    %v1927 = vunpack.c.h.b16 %v1141
    %v1928 = vunpack.c.l.b16 %v1142
    %v1929 = vunpack.c.h.b16 %v1142
    %v1930 = vunpack.c.l.b16 %v1143
    %v1931 = vunpack.c.h.b16 %v1143
    %v1932 = vunpack.c.l.b16 %v1144
    %v1933 = vunpack.c.h.b16 %v1144
    %v1934 = vunpack.c.l.b16 %v1145
    %v1935 = vunpack.c.h.b16 %v1145
    %v1936 = vpack.c.b16 %v1428, %v1424
    %v1937 = vpack.c.b16 %v1429, %v1425
    %v1938 = vpack.c.b16 %v1430, %v1426
    %v1939 = vpack.c.b16 %v1431, %v1427
    %v1940 = vpack.c.b16 %v1436, %v1432
    %v1941 = vpack.c.b16 %v1437, %v1433
    %v1942 = vpack.c.b16 %v1438, %v1434
    %v1943 = vpack.c.b16 %v1439, %v1435
    %v1944 = vpack.c.b16 %v1444, %v1440
    %v1945 = vpack.c.b16 %v1445, %v1441
    %v1946 = vpack.c.b16 %v1446, %v1442
    %v1947 = vpack.c.b16 %v1447, %v1443
    %v1948 = vpack.c.b16 %v1452, %v1448
    %v1949 = vpack.c.b16 %v1453, %v1449
    %v1950 = vpack.c.b16 %v1454, %v1450
    %v1951 = vpack.c.b16 %v1455, %v1451
    %v1952 = vpack.c.b16 %v1460, %v1456
    %v1953 = vpack.c.b16 %v1461, %v1457
    %v1954 = vpack.c.b16 %v1462, %v1458
    %v1955 = vpack.c.b16 %v1463, %v1459
    %v1956 = vpack.c.b16 %v1468, %v1464
    %v1957 = vpack.c.b16 %v1469, %v1465
    %v1958 = vpack.c.b16 %v1470, %v1466
    %v1959 = vpack.c.b16 %v1471, %v1467
    %v1960 = vpack.c.b16 %v1476, %v1472
    %v1961 = vpack.c.b16 %v1477, %v1473
    %v1962 = vpack.c.b16 %v1478, %v1474
    %v1963 = vpack.c.b16 %v1479, %v1475
    %v1964 = vpack.c.b16 %v1484, %v1480
    %v1965 = vpack.c.b16 %v1485, %v1481
    %v1966 = vpack.c.b16 %v1486, %v1482
    %v1967 = vpack.c.b16 %v1487, %v1483
    %v1968 = vpack.c.b16 %v1492, %v1488
    %v1969 = vpack.c.b16 %v1493, %v1489
    %v1970 = vpack.c.b16 %v1494, %v1490
    %v1971 = vpack.c.b16 %v1495, %v1491
    %v1972 = vpack.c.b16 %v1500, %v1496
    %v1973 = vpack.c.b16 %v1501, %v1497
    %v1974 = vpack.c.b16 %v1502, %v1498
    %v1975 = vpack.c.b16 %v1503, %v1499
    %v1976 = vpack.c.b16 %v1508, %v1504
    %v1977 = vpack.c.b16 %v1509, %v1505
    %v1978 = vpack.c.b16 %v1510, %v1506
    %v1979 = vpack.c.b16 %v1511, %v1507
    %v1980 = vpack.c.b16 %v1516, %v1512
    %v1981 = vpack.c.b16 %v1517, %v1513
    %v1982 = vpack.c.b16 %v1518, %v1514
    %v1983 = vpack.c.b16 %v1519, %v1515
    %v1984 = vpack.c.b16 %v1524, %v1520
    %v1985 = vpack.c.b16 %v1525, %v1521
    %v1986 = vpack.c.b16 %v1526, %v1522
    %v1987 = vpack.c.b16 %v1527, %v1523
    %v1988 = vpack.c.b16 %v1532, %v1528
    %v1989 = vpack.c.b16 %v1533, %v1529
    %v1990 = vpack.c.b16 %v1534, %v1530
    %v1991 = vpack.c.b16 %v1535, %v1531
    %v1992 = vpack.c.b16 %v1540, %v1536
    %v1993 = vpack.c.b16 %v1541, %v1537
    %v1994 = vpack.c.b16 %v1542, %v1538
    %v1995 = vpack.c.b16 %v1543, %v1539
    %v1996 = vpack.c.b16 %v1548, %v1544
    %v1997 = vpack.c.b16 %v1549, %v1545
    %v1998 = vpack.c.b16 %v1550, %v1546
    %v1999 = vpack.c.b16 %v1551, %v1547
    %v2000 = vpack.c.b16 %v1556, %v1552
    %v2001 = vpack.c.b16 %v1557, %v1553
    %v2002 = vpack.c.b16 %v1558, %v1554
    %v2003 = vpack.c.b16 %v1559, %v1555
    %v2004 = vpack.c.b16 %v1564, %v1560
    %v2005 = vpack.c.b16 %v1565, %v1561
    %v2006 = vpack.c.b16 %v1566, %v1562
    %v2007 = vpack.c.b16 %v1567, %v1563
    %v2008 = vpack.c.b16 %v1572, %v1568
    %v2009 = vpack.c.b16 %v1573, %v1569
    %v2010 = vpack.c.b16 %v1574, %v1570
    %v2011 = vpack.c.b16 %v1575, %v1571
    %v2012 = vpack.c.b16 %v1580, %v1576
    %v2013 = vpack.c.b16 %v1581, %v1577
    %v2014 = vpack.c.b16 %v1582, %v1578
    %v2015 = vpack.c.b16 %v1583, %v1579
    %v2016 = vpack.c.b16 %v1588, %v1584
    %v2017 = vpack.c.b16 %v1589, %v1585
    %v2018 = vpack.c.b16 %v1590, %v1586
    %v2019 = vpack.c.b16 %v1591, %v1587
    %v2020 = vpack.c.b16 %v1596, %v1592
    %v2021 = vpack.c.b16 %v1597, %v1593
    %v2022 = vpack.c.b16 %v1598, %v1594
    %v2023 = vpack.c.b16 %v1599, %v1595
    %v2024 = vpack.c.b16 %v1604, %v1600
    %v2025 = vpack.c.b16 %v1605, %v1601
    %v2026 = vpack.c.b16 %v1606, %v1602
    %v2027 = vpack.c.b16 %v1607, %v1603
    %v2028 = vpack.c.b16 %v1612, %v1608
    %v2029 = vpack.c.b16 %v1613, %v1609
    %v2030 = vpack.c.b16 %v1614, %v1610
    %v2031 = vpack.c.b16 %v1615, %v1611
    %v2032 = vpack.c.b16 %v1620, %v1616
    %v2033 = vpack.c.b16 %v1621, %v1617
    %v2034 = vpack.c.b16 %v1622, %v1618
    %v2035 = vpack.c.b16 %v1623, %v1619
    %v2036 = vpack.c.b16 %v1628, %v1624
    %v2037 = vpack.c.b16 %v1629, %v1625
    %v2038 = vpack.c.b16 %v1630, %v1626
    %v2039 = vpack.c.b16 %v1631, %v1627
    %v2040 = vpack.c.b16 %v1636, %v1632
    %v2041 = vpack.c.b16 %v1637, %v1633
    %v2042 = vpack.c.b16 %v1638, %v1634
    %v2043 = vpack.c.b16 %v1639, %v1635
    %v2044 = vpack.c.b16 %v1644, %v1640
    %v2045 = vpack.c.b16 %v1645, %v1641
    %v2046 = vpack.c.b16 %v1646, %v1642
    %v2047 = vpack.c.b16 %v1647, %v1643
    %v2048 = vpack.c.b16 %v1652, %v1648
    %v2049 = vpack.c.b16 %v1653, %v1649
    %v2050 = vpack.c.b16 %v1654, %v1650
    %v2051 = vpack.c.b16 %v1655, %v1651
    %v2052 = vpack.c.b16 %v1660, %v1656
    %v2053 = vpack.c.b16 %v1661, %v1657
    %v2054 = vpack.c.b16 %v1662, %v1658
    %v2055 = vpack.c.b16 %v1663, %v1659
    %v2056 = vpack.c.b16 %v1668, %v1664
    %v2057 = vpack.c.b16 %v1669, %v1665
    %v2058 = vpack.c.b16 %v1670, %v1666
    %v2059 = vpack.c.b16 %v1671, %v1667
    %v2060 = vpack.c.b16 %v1676, %v1672
    %v2061 = vpack.c.b16 %v1677, %v1673
    %v2062 = vpack.c.b16 %v1678, %v1674
    %v2063 = vpack.c.b16 %v1679, %v1675
    %v2064 = vpack.c.b16 %v1684, %v1680
    %v2065 = vpack.c.b16 %v1685, %v1681
    %v2066 = vpack.c.b16 %v1686, %v1682
    %v2067 = vpack.c.b16 %v1687, %v1683
    %v2068 = vpack.c.b16 %v1692, %v1688
    %v2069 = vpack.c.b16 %v1693, %v1689
    %v2070 = vpack.c.b16 %v1694, %v1690
    %v2071 = vpack.c.b16 %v1695, %v1691
    %v2072 = vpack.c.b16 %v1700, %v1696
    %v2073 = vpack.c.b16 %v1701, %v1697
    %v2074 = vpack.c.b16 %v1702, %v1698
    %v2075 = vpack.c.b16 %v1703, %v1699
    %v2076 = vpack.c.b16 %v1708, %v1704
    %v2077 = vpack.c.b16 %v1709, %v1705
    %v2078 = vpack.c.b16 %v1710, %v1706
    %v2079 = vpack.c.b16 %v1711, %v1707
    %v2080 = vpack.c.b16 %v1716, %v1712
    %v2081 = vpack.c.b16 %v1717, %v1713
    %v2082 = vpack.c.b16 %v1718, %v1714
    %v2083 = vpack.c.b16 %v1719, %v1715
    %v2084 = vpack.c.b16 %v1724, %v1720
    %v2085 = vpack.c.b16 %v1725, %v1721
    %v2086 = vpack.c.b16 %v1726, %v1722
    %v2087 = vpack.c.b16 %v1727, %v1723
    %v2088 = vpack.c.b16 %v1732, %v1728
    %v2089 = vpack.c.b16 %v1733, %v1729
    %v2090 = vpack.c.b16 %v1734, %v1730
    %v2091 = vpack.c.b16 %v1735, %v1731
    %v2092 = vpack.c.b16 %v1740, %v1736
    %v2093 = vpack.c.b16 %v1741, %v1737
    %v2094 = vpack.c.b16 %v1742, %v1738
    %v2095 = vpack.c.b16 %v1743, %v1739
    %v2096 = vpack.c.b16 %v1748, %v1744
    %v2097 = vpack.c.b16 %v1749, %v1745
    %v2098 = vpack.c.b16 %v1750, %v1746
    %v2099 = vpack.c.b16 %v1751, %v1747
    %v2100 = vpack.c.b16 %v1756, %v1752
    %v2101 = vpack.c.b16 %v1757, %v1753
    %v2102 = vpack.c.b16 %v1758, %v1754
    %v2103 = vpack.c.b16 %v1759, %v1755
    %v2104 = vpack.c.b16 %v1764, %v1760
    %v2105 = vpack.c.b16 %v1765, %v1761
    %v2106 = vpack.c.b16 %v1766, %v1762
    %v2107 = vpack.c.b16 %v1767, %v1763
    %v2108 = vpack.c.b16 %v1772, %v1768
    %v2109 = vpack.c.b16 %v1773, %v1769
    %v2110 = vpack.c.b16 %v1774, %v1770
    %v2111 = vpack.c.b16 %v1775, %v1771
    %v2112 = vpack.c.b16 %v1780, %v1776
    %v2113 = vpack.c.b16 %v1781, %v1777
    %v2114 = vpack.c.b16 %v1782, %v1778
    %v2115 = vpack.c.b16 %v1783, %v1779
    %v2116 = vpack.c.b16 %v1788, %v1784
    %v2117 = vpack.c.b16 %v1789, %v1785
    %v2118 = vpack.c.b16 %v1790, %v1786
    %v2119 = vpack.c.b16 %v1791, %v1787
    %v2120 = vpack.c.b16 %v1796, %v1792
    %v2121 = vpack.c.b16 %v1797, %v1793
    %v2122 = vpack.c.b16 %v1798, %v1794
    %v2123 = vpack.c.b16 %v1799, %v1795
    %v2124 = vpack.c.b16 %v1804, %v1800
    %v2125 = vpack.c.b16 %v1805, %v1801
    %v2126 = vpack.c.b16 %v1806, %v1802
    %v2127 = vpack.c.b16 %v1807, %v1803
    %v2128 = vpack.c.b16 %v1812, %v1808
    %v2129 = vpack.c.b16 %v1813, %v1809
    %v2130 = vpack.c.b16 %v1814, %v1810
    %v2131 = vpack.c.b16 %v1815, %v1811
    %v2132 = vpack.c.b16 %v1820, %v1816
    %v2133 = vpack.c.b16 %v1821, %v1817
    %v2134 = vpack.c.b16 %v1822, %v1818
    %v2135 = vpack.c.b16 %v1823, %v1819
    %v2136 = vpack.c.b16 %v1828, %v1824
    %v2137 = vpack.c.b16 %v1829, %v1825
    %v2138 = vpack.c.b16 %v1830, %v1826
    %v2139 = vpack.c.b16 %v1831, %v1827
    %v2140 = vpack.c.b16 %v1836, %v1832
    %v2141 = vpack.c.b16 %v1837, %v1833
    %v2142 = vpack.c.b16 %v1838, %v1834
    %v2143 = vpack.c.b16 %v1839, %v1835
    %v2144 = vpack.c.b16 %v1844, %v1840
    %v2145 = vpack.c.b16 %v1845, %v1841
    %v2146 = vpack.c.b16 %v1846, %v1842
    %v2147 = vpack.c.b16 %v1847, %v1843
    %v2148 = vpack.c.b16 %v1852, %v1848
    %v2149 = vpack.c.b16 %v1853, %v1849
    %v2150 = vpack.c.b16 %v1854, %v1850
    %v2151 = vpack.c.b16 %v1855, %v1851
    %v2152 = vpack.c.b16 %v1860, %v1856
    %v2153 = vpack.c.b16 %v1861, %v1857
    %v2154 = vpack.c.b16 %v1862, %v1858
    %v2155 = vpack.c.b16 %v1863, %v1859
    %v2156 = vpack.c.b16 %v1868, %v1864
    %v2157 = vpack.c.b16 %v1869, %v1865
    %v2158 = vpack.c.b16 %v1870, %v1866
    %v2159 = vpack.c.b16 %v1871, %v1867
    %v2160 = vpack.c.b16 %v1876, %v1872
    %v2161 = vpack.c.b16 %v1877, %v1873
    %v2162 = vpack.c.b16 %v1878, %v1874
    %v2163 = vpack.c.b16 %v1879, %v1875
    %v2164 = vpack.c.b16 %v1884, %v1880
    %v2165 = vpack.c.b16 %v1885, %v1881
    %v2166 = vpack.c.b16 %v1886, %v1882
    %v2167 = vpack.c.b16 %v1887, %v1883
    %v2168 = vpack.c.b16 %v1892, %v1888
    %v2169 = vpack.c.b16 %v1893, %v1889
    %v2170 = vpack.c.b16 %v1894, %v1890
    %v2171 = vpack.c.b16 %v1895, %v1891
    %v2172 = vpack.c.b16 %v1900, %v1896
    %v2173 = vpack.c.b16 %v1901, %v1897
    %v2174 = vpack.c.b16 %v1902, %v1898
    %v2175 = vpack.c.b16 %v1903, %v1899
    %v2176 = vpack.c.b16 %v1908, %v1904
    %v2177 = vpack.c.b16 %v1909, %v1905
    %v2178 = vpack.c.b16 %v1910, %v1906
    %v2179 = vpack.c.b16 %v1911, %v1907
    %v2180 = vpack.c.b16 %v1916, %v1912
    %v2181 = vpack.c.b16 %v1917, %v1913
    %v2182 = vpack.c.b16 %v1918, %v1914
    %v2183 = vpack.c.b16 %v1919, %v1915
    %v2184 = vpack.c.b16 %v1924, %v1920
    %v2185 = vpack.c.b16 %v1925, %v1921
    %v2186 = vpack.c.b16 %v1926, %v1922
    %v2187 = vpack.c.b16 %v1927, %v1923
    %v2188 = vpack.c.b16 %v1932, %v1928
    %v2189 = vpack.c.b16 %v1933, %v1929
    %v2190 = vpack.c.b16 %v1934, %v1930
    %v2191 = vpack.c.b16 %v1935, %v1931
    %2448 = vmatprep.subr.bf16.mxu0 %v1937
    %2449 = vmatpush1.bf16.msra.mxu0 %v1936
    %2450 = vmatprep.subr.bf16.mxu0 %v1941
    %2451 = vmatpush1.bf16.msra.mxu0 %v1940
    %2452 = vmatprep.subr.bf16.mxu0 %v1945
    %2453 = vmatpush1.bf16.msra.mxu0 %v1944
    %2454 = vmatprep.subr.bf16.mxu0 %v1949
    %2455 = vmatpush1.bf16.msra.mxu0 %v1948
    %2456 = vmatprep.subr.bf16.mxu0 %v1953
    %2457 = vmatpush1.bf16.msra.mxu0 %v1952
    %2458 = vmatprep.subr.bf16.mxu0 %v1957
    %2459 = vmatpush1.bf16.msra.mxu0 %v1956
    %2460 = vmatprep.subr.bf16.mxu0 %v1961
    %2461 = vmatpush1.bf16.msra.mxu0 %v1960
    %2462 = vmatprep.subr.bf16.mxu0 %v1965
    %2463 = vmatpush1.bf16.msra.mxu0 %v1964
    %2464 = vmatprep.subr.bf16.mxu0 %v1969
    %2465 = vmatpush1.bf16.msra.mxu0 %v1968
    %2466 = vmatprep.subr.bf16.mxu0 %v1973
    %2467 = vmatpush1.bf16.msra.mxu0 %v1972
    %2468 = vmatprep.subr.bf16.mxu0 %v1977
    %2469 = vmatpush1.bf16.msra.mxu0 %v1976
    %2470 = vmatprep.subr.bf16.mxu0 %v1981
    %2471 = vmatpush1.bf16.msra.mxu0 %v1980
    %2472 = vmatprep.subr.bf16.mxu0 %v1985
    %2473 = vmatpush1.bf16.msra.mxu0 %v1984
    %2474 = vmatprep.subr.bf16.mxu0 %v1989
    %2475 = vmatpush1.bf16.msra.mxu0 %v1988
    %2476 = vmatprep.subr.bf16.mxu0 %v1993
    %2477 = vmatpush1.bf16.msra.mxu0 %v1992
    %2478 = vmatprep.subr.bf16.mxu0 %v1997
    %2479 = vmatpush1.bf16.msra.mxu0 %v1996
    %2480 = vmatprep.mubr.bf16.mxu0 %v883
    %2481 = vmatmul.mubr.bf16.gmra.mrb[0].mxu0 %v882
    %v2482 = vpop.f32.mrb[0].mxu0
    %v2483 = vadd.f32 %v1151, %v2482
    %v2484 = vpop.f32.mrb[0].mxu0
    %v2485 = vadd.f32 %v1155, %v2484
    %v2486 = vpop.f32.mrb[0].mxu0
    %v2487 = vadd.f32 %v1151, %v2486
    %v2488 = vpop.f32.mrb[0].mxu0
    %v2489 = vadd.f32 %v1155, %v2488
    %2490 = vdwg.mxu0
    %2491 = vmatprep.subr.bf16.mxu0 %v2001
    %2492 = vmatpush1.bf16.msra.mxu0 %v2000
    %2493 = vmatprep.subr.bf16.mxu0 %v2005
    %2494 = vmatpush1.bf16.msra.mxu0 %v2004
    %2495 = vmatprep.subr.bf16.mxu0 %v2009
    %2496 = vmatpush1.bf16.msra.mxu0 %v2008
    %2497 = vmatprep.subr.bf16.mxu0 %v2013
    %2498 = vmatpush1.bf16.msra.mxu0 %v2012
    %2499 = vmatprep.subr.bf16.mxu0 %v2017
    %2500 = vmatpush1.bf16.msra.mxu0 %v2016
    %2501 = vmatprep.subr.bf16.mxu0 %v2021
    %2502 = vmatpush1.bf16.msra.mxu0 %v2020
    %2503 = vmatprep.subr.bf16.mxu0 %v2025
    %2504 = vmatpush1.bf16.msra.mxu0 %v2024
    %2505 = vmatprep.subr.bf16.mxu0 %v2029
    %2506 = vmatpush1.bf16.msra.mxu0 %v2028
    %2507 = vmatprep.subr.bf16.mxu0 %v2033
    %2508 = vmatpush1.bf16.msra.mxu0 %v2032
    %2509 = vmatprep.subr.bf16.mxu0 %v2037
    %2510 = vmatpush1.bf16.msra.mxu0 %v2036
    %2511 = vmatprep.subr.bf16.mxu0 %v2041
    %2512 = vmatpush1.bf16.msra.mxu0 %v2040
    %2513 = vmatprep.subr.bf16.mxu0 %v2045
    %2514 = vmatpush1.bf16.msra.mxu0 %v2044
    %2515 = vmatprep.subr.bf16.mxu0 %v2049
    %2516 = vmatpush1.bf16.msra.mxu0 %v2048
    %2517 = vmatprep.subr.bf16.mxu0 %v2053
    %2518 = vmatpush1.bf16.msra.mxu0 %v2052
    %2519 = vmatprep.subr.bf16.mxu0 %v2057
    %2520 = vmatpush1.bf16.msra.mxu0 %v2056
    %2521 = vmatprep.subr.bf16.mxu0 %v2061
    %2522 = vmatpush1.bf16.msra.mxu0 %v2060
    %2523 = vmatprep.mubr.bf16.mxu0 %v885
    %2524 = vmatmul.mubr.bf16.gmra.mrb[0].mxu0 %v884
    %v2525 = vpop.f32.mrb[0].mxu0
    %v2526 = vadd.f32 %v2483, %v2525
    %v2527 = vpop.f32.mrb[0].mxu0
    %v2528 = vadd.f32 %v2485, %v2527
    %v2529 = vpop.f32.mrb[0].mxu0
    %v2530 = vadd.f32 %v2487, %v2529
    %v2531 = vpop.f32.mrb[0].mxu0
    %v2532 = vadd.f32 %v2489, %v2531
    %2533 = vdwg.mxu0
    %2534 = vmatprep.subr.bf16.mxu0 %v2065
    %2535 = vmatpush1.bf16.msra.mxu0 %v2064
    %2536 = vmatprep.subr.bf16.mxu0 %v2069
    %2537 = vmatpush1.bf16.msra.mxu0 %v2068
    %2538 = vmatprep.subr.bf16.mxu0 %v2073
    %2539 = vmatpush1.bf16.msra.mxu0 %v2072
    %2540 = vmatprep.subr.bf16.mxu0 %v2077
    %2541 = vmatpush1.bf16.msra.mxu0 %v2076
    %2542 = vmatprep.subr.bf16.mxu0 %v2081
    %2543 = vmatpush1.bf16.msra.mxu0 %v2080
    %2544 = vmatprep.subr.bf16.mxu0 %v2085
    %2545 = vmatpush1.bf16.msra.mxu0 %v2084
    %2546 = vmatprep.subr.bf16.mxu0 %v2089
    %2547 = vmatpush1.bf16.msra.mxu0 %v2088
    %2548 = vmatprep.subr.bf16.mxu0 %v2093
    %2549 = vmatpush1.bf16.msra.mxu0 %v2092
    %2550 = vmatprep.subr.bf16.mxu0 %v2097
    %2551 = vmatpush1.bf16.msra.mxu0 %v2096
    %2552 = vmatprep.subr.bf16.mxu0 %v2101
    %2553 = vmatpush1.bf16.msra.mxu0 %v2100
    %2554 = vmatprep.subr.bf16.mxu0 %v2105
    %2555 = vmatpush1.bf16.msra.mxu0 %v2104
    %2556 = vmatprep.subr.bf16.mxu0 %v2109
    %2557 = vmatpush1.bf16.msra.mxu0 %v2108
    %2558 = vmatprep.subr.bf16.mxu0 %v2113
    %2559 = vmatpush1.bf16.msra.mxu0 %v2112
    %2560 = vmatprep.subr.bf16.mxu0 %v2117
    %2561 = vmatpush1.bf16.msra.mxu0 %v2116
    %2562 = vmatprep.subr.bf16.mxu0 %v2121
    %2563 = vmatpush1.bf16.msra.mxu0 %v2120
    %2564 = vmatprep.subr.bf16.mxu0 %v2125
    %2565 = vmatpush1.bf16.msra.mxu0 %v2124
    %2566 = vmatprep.mubr.bf16.mxu0 %v887
    %2567 = vmatmul.mubr.bf16.gmra.mrb[0].mxu0 %v886
    %v2568 = vpop.f32.mrb[0].mxu0
    %v2569 = vadd.f32 %v2526, %v2568
    %v2570 = vpop.f32.mrb[0].mxu0
    %v2571 = vadd.f32 %v2528, %v2570
    %v2572 = vpop.f32.mrb[0].mxu0
    %v2573 = vadd.f32 %v2530, %v2572
    %v2574 = vpop.f32.mrb[0].mxu0
    %v2575 = vadd.f32 %v2532, %v2574
    %2576 = vdwg.mxu0
    %2577 = vmatprep.subr.bf16.mxu0 %v2129
    %2578 = vmatpush1.bf16.msra.mxu0 %v2128
    %2579 = vmatprep.subr.bf16.mxu0 %v2133
    %2580 = vmatpush1.bf16.msra.mxu0 %v2132
    %2581 = vmatprep.subr.bf16.mxu0 %v2137
    %2582 = vmatpush1.bf16.msra.mxu0 %v2136
    %2583 = vmatprep.subr.bf16.mxu0 %v2141
    %2584 = vmatpush1.bf16.msra.mxu0 %v2140
    %2585 = vmatprep.subr.bf16.mxu0 %v2145
    %2586 = vmatpush1.bf16.msra.mxu0 %v2144
    %2587 = vmatprep.subr.bf16.mxu0 %v2149
    %2588 = vmatpush1.bf16.msra.mxu0 %v2148
    %2589 = vmatprep.subr.bf16.mxu0 %v2153
    %2590 = vmatpush1.bf16.msra.mxu0 %v2152
    %2591 = vmatprep.subr.bf16.mxu0 %v2157
    %2592 = vmatpush1.bf16.msra.mxu0 %v2156
    %2593 = vmatprep.subr.bf16.mxu0 %v2161
    %2594 = vmatpush1.bf16.msra.mxu0 %v2160
    %2595 = vmatprep.subr.bf16.mxu0 %v2165
    %2596 = vmatpush1.bf16.msra.mxu0 %v2164
    %2597 = vmatprep.subr.bf16.mxu0 %v2169
    %2598 = vmatpush1.bf16.msra.mxu0 %v2168
    %2599 = vmatprep.subr.bf16.mxu0 %v2173
    %2600 = vmatpush1.bf16.msra.mxu0 %v2172
    %2601 = vmatprep.subr.bf16.mxu0 %v2177
    %2602 = vmatpush1.bf16.msra.mxu0 %v2176
    %2603 = vmatprep.subr.bf16.mxu0 %v2181
    %2604 = vmatpush1.bf16.msra.mxu0 %v2180
    %2605 = vmatprep.subr.bf16.mxu0 %v2185
    %2606 = vmatpush1.bf16.msra.mxu0 %v2184
    %2607 = vmatprep.subr.bf16.mxu0 %v2189
    %2608 = vmatpush1.bf16.msra.mxu0 %v2188
    %2609 = vmatprep.mubr.bf16.mxu0 %v889
    %2610 = vmatmul.mubr.bf16.gmra.mrb[0].mxu0 %v888
    %v2611 = vpop.f32.mrb[0].mxu0
    %v2612 = vadd.f32 %v2569, %v2611
    %v2613 = vpop.f32.mrb[0].mxu0
    %v2614 = vadd.f32 %v2571, %v2613
    %v2615 = vpop.f32.mrb[0].mxu0
    %v2616 = vadd.f32 %v2573, %v2615
    %v2617 = vpop.f32.mrb[0].mxu0
    %v2618 = vadd.f32 %v2575, %v2617
    %2619 = vdwg.mxu0
    %2620 = vmatprep.subr.bf16.mxu0 %v1939
    %2621 = vmatpush1.bf16.msra.mxu0 %v1938
    %2622 = vmatprep.subr.bf16.mxu0 %v1943
    %2623 = vmatpush1.bf16.msra.mxu0 %v1942
    %2624 = vmatprep.subr.bf16.mxu0 %v1947
    %2625 = vmatpush1.bf16.msra.mxu0 %v1946
    %2626 = vmatprep.subr.bf16.mxu0 %v1951
    %2627 = vmatpush1.bf16.msra.mxu0 %v1950
    %2628 = vmatprep.subr.bf16.mxu0 %v1955
    %2629 = vmatpush1.bf16.msra.mxu0 %v1954
    %2630 = vmatprep.subr.bf16.mxu0 %v1959
    %2631 = vmatpush1.bf16.msra.mxu0 %v1958
    %2632 = vmatprep.subr.bf16.mxu0 %v1963
    %2633 = vmatpush1.bf16.msra.mxu0 %v1962
    %2634 = vmatprep.subr.bf16.mxu0 %v1967
    %2635 = vmatpush1.bf16.msra.mxu0 %v1966
    %2636 = vmatprep.subr.bf16.mxu0 %v1971
    %2637 = vmatpush1.bf16.msra.mxu0 %v1970
    %2638 = vmatprep.subr.bf16.mxu0 %v1975
    %2639 = vmatpush1.bf16.msra.mxu0 %v1974
    %2640 = vmatprep.subr.bf16.mxu0 %v1979
    %2641 = vmatpush1.bf16.msra.mxu0 %v1978
    %2642 = vmatprep.subr.bf16.mxu0 %v1983
    %2643 = vmatpush1.bf16.msra.mxu0 %v1982
    %2644 = vmatprep.subr.bf16.mxu0 %v1987
    %2645 = vmatpush1.bf16.msra.mxu0 %v1986
    %2646 = vmatprep.subr.bf16.mxu0 %v1991
    %2647 = vmatpush1.bf16.msra.mxu0 %v1990
    %2648 = vmatprep.subr.bf16.mxu0 %v1995
    %2649 = vmatpush1.bf16.msra.mxu0 %v1994
    %2650 = vmatprep.subr.bf16.mxu0 %v1999
    %2651 = vmatpush1.bf16.msra.mxu0 %v1998
    %2652 = vmatprep.mubr.bf16.mxu0 %v883
    %2653 = vmatmul.mubr.bf16.gmra.mrb[0].mxu0 %v882
    %v2654 = vpop.f32.mrb[0].mxu0
    %v2655 = vadd.f32 %v1159, %v2654
    %v2656 = vpop.f32.mrb[0].mxu0
    %v2657 = vadd.f32 %v1163, %v2656
    %v2658 = vpop.f32.mrb[0].mxu0
    %v2659 = vadd.f32 %v1159, %v2658
    %v2660 = vpop.f32.mrb[0].mxu0
    %v2661 = vadd.f32 %v1163, %v2660
    %2662 = vdwg.mxu0
    %2663 = vmatprep.subr.bf16.mxu0 %v2003
    %2664 = vmatpush1.bf16.msra.mxu0 %v2002
    %2665 = vmatprep.subr.bf16.mxu0 %v2007
    %2666 = vmatpush1.bf16.msra.mxu0 %v2006
    %2667 = vmatprep.subr.bf16.mxu0 %v2011
    %2668 = vmatpush1.bf16.msra.mxu0 %v2010
    %2669 = vmatprep.subr.bf16.mxu0 %v2015
    %2670 = vmatpush1.bf16.msra.mxu0 %v2014
    %2671 = vmatprep.subr.bf16.mxu0 %v2019
    %2672 = vmatpush1.bf16.msra.mxu0 %v2018
    %2673 = vmatprep.subr.bf16.mxu0 %v2023
    %2674 = vmatpush1.bf16.msra.mxu0 %v2022
    %2675 = vmatprep.subr.bf16.mxu0 %v2027
    %2676 = vmatpush1.bf16.msra.mxu0 %v2026
    %2677 = vmatprep.subr.bf16.mxu0 %v2031
    %2678 = vmatpush1.bf16.msra.mxu0 %v2030
    %2679 = vmatprep.subr.bf16.mxu0 %v2035
    %2680 = vmatpush1.bf16.msra.mxu0 %v2034
    %2681 = vmatprep.subr.bf16.mxu0 %v2039
    %2682 = vmatpush1.bf16.msra.mxu0 %v2038
    %2683 = vmatprep.subr.bf16.mxu0 %v2043
    %2684 = vmatpush1.bf16.msra.mxu0 %v2042
    %2685 = vmatprep.subr.bf16.mxu0 %v2047
    %2686 = vmatpush1.bf16.msra.mxu0 %v2046
    %2687 = vmatprep.subr.bf16.mxu0 %v2051
    %2688 = vmatpush1.bf16.msra.mxu0 %v2050
    %2689 = vmatprep.subr.bf16.mxu0 %v2055
    %2690 = vmatpush1.bf16.msra.mxu0 %v2054
    %2691 = vmatprep.subr.bf16.mxu0 %v2059
    %2692 = vmatpush1.bf16.msra.mxu0 %v2058
    %2693 = vmatprep.subr.bf16.mxu0 %v2063
    %2694 = vmatpush1.bf16.msra.mxu0 %v2062
    %2695 = vmatprep.mubr.bf16.mxu0 %v885
    %2696 = vmatmul.mubr.bf16.gmra.mrb[0].mxu0 %v884
    %v2697 = vpop.f32.mrb[0].mxu0
    %v2698 = vadd.f32 %v2655, %v2697
    %v2699 = vpop.f32.mrb[0].mxu0
    %v2700 = vadd.f32 %v2657, %v2699
    %v2701 = vpop.f32.mrb[0].mxu0
    %v2702 = vadd.f32 %v2659, %v2701
    %v2703 = vpop.f32.mrb[0].mxu0
    %v2704 = vadd.f32 %v2661, %v2703
    %2705 = vdwg.mxu0
    %2706 = vmatprep.subr.bf16.mxu0 %v2067
    %2707 = vmatpush1.bf16.msra.mxu0 %v2066
    %2708 = vmatprep.subr.bf16.mxu0 %v2071
    %2709 = vmatpush1.bf16.msra.mxu0 %v2070
    %2710 = vmatprep.subr.bf16.mxu0 %v2075
    %2711 = vmatpush1.bf16.msra.mxu0 %v2074
    %2712 = vmatprep.subr.bf16.mxu0 %v2079
    %2713 = vmatpush1.bf16.msra.mxu0 %v2078
    %2714 = vmatprep.subr.bf16.mxu0 %v2083
    %2715 = vmatpush1.bf16.msra.mxu0 %v2082
    %2716 = vmatprep.subr.bf16.mxu0 %v2087
    %2717 = vmatpush1.bf16.msra.mxu0 %v2086
    %2718 = vmatprep.subr.bf16.mxu0 %v2091
    %2719 = vmatpush1.bf16.msra.mxu0 %v2090
    %2720 = vmatprep.subr.bf16.mxu0 %v2095
    %2721 = vmatpush1.bf16.msra.mxu0 %v2094
    %2722 = vmatprep.subr.bf16.mxu0 %v2099
    %2723 = vmatpush1.bf16.msra.mxu0 %v2098
    %2724 = vmatprep.subr.bf16.mxu0 %v2103
    %2725 = vmatpush1.bf16.msra.mxu0 %v2102
    %2726 = vmatprep.subr.bf16.mxu0 %v2107
    %2727 = vmatpush1.bf16.msra.mxu0 %v2106
    %2728 = vmatprep.subr.bf16.mxu0 %v2111
    %2729 = vmatpush1.bf16.msra.mxu0 %v2110
    %2730 = vmatprep.subr.bf16.mxu0 %v2115
    %2731 = vmatpush1.bf16.msra.mxu0 %v2114
    %2732 = vmatprep.subr.bf16.mxu0 %v2119
    %2733 = vmatpush1.bf16.msra.mxu0 %v2118
    %2734 = vmatprep.subr.bf16.mxu0 %v2123
    %2735 = vmatpush1.bf16.msra.mxu0 %v2122
    %2736 = vmatprep.subr.bf16.mxu0 %v2127
    %2737 = vmatpush1.bf16.msra.mxu0 %v2126
    %2738 = vmatprep.mubr.bf16.mxu0 %v887
    %2739 = vmatmul.mubr.bf16.gmra.mrb[0].mxu0 %v886
    %v2740 = vpop.f32.mrb[0].mxu0
    %v2741 = vadd.f32 %v2698, %v2740
    %v2742 = vpop.f32.mrb[0].mxu0
    %v2743 = vadd.f32 %v2700, %v2742
    %v2744 = vpop.f32.mrb[0].mxu0
    %v2745 = vadd.f32 %v2702, %v2744
    %v2746 = vpop.f32.mrb[0].mxu0
    %v2747 = vadd.f32 %v2704, %v2746
    %2748 = vdwg.mxu0
    %2749 = vmatprep.subr.bf16.mxu0 %v2131
    %2750 = vmatpush1.bf16.msra.mxu0 %v2130
    %2751 = vmatprep.subr.bf16.mxu0 %v2135
    %2752 = vmatpush1.bf16.msra.mxu0 %v2134
    %2753 = vmatprep.subr.bf16.mxu0 %v2139
    %2754 = vmatpush1.bf16.msra.mxu0 %v2138
    %2755 = vmatprep.subr.bf16.mxu0 %v2143
    %2756 = vmatpush1.bf16.msra.mxu0 %v2142
    %2757 = vmatprep.subr.bf16.mxu0 %v2147
    %2758 = vmatpush1.bf16.msra.mxu0 %v2146
    %2759 = vmatprep.subr.bf16.mxu0 %v2151
    %2760 = vmatpush1.bf16.msra.mxu0 %v2150
    %2761 = vmatprep.subr.bf16.mxu0 %v2155
    %2762 = vmatpush1.bf16.msra.mxu0 %v2154
    %2763 = vmatprep.subr.bf16.mxu0 %v2159
    %2764 = vmatpush1.bf16.msra.mxu0 %v2158
    %2765 = vmatprep.subr.bf16.mxu0 %v2163
    %2766 = vmatpush1.bf16.msra.mxu0 %v2162
    %2767 = vmatprep.subr.bf16.mxu0 %v2167
    %2768 = vmatpush1.bf16.msra.mxu0 %v2166
    %2769 = vmatprep.subr.bf16.mxu0 %v2171
    %2770 = vmatpush1.bf16.msra.mxu0 %v2170
    %2771 = vmatprep.subr.bf16.mxu0 %v2175
    %2772 = vmatpush1.bf16.msra.mxu0 %v2174
    %2773 = vmatprep.subr.bf16.mxu0 %v2179
    %2774 = vmatpush1.bf16.msra.mxu0 %v2178
    %2775 = vmatprep.subr.bf16.mxu0 %v2183
    %2776 = vmatpush1.bf16.msra.mxu0 %v2182
    %2777 = vmatprep.subr.bf16.mxu0 %v2187
    %2778 = vmatpush1.bf16.msra.mxu0 %v2186
    %2779 = vmatprep.subr.bf16.mxu0 %v2191
    %2780 = vmatpush1.bf16.msra.mxu0 %v2190
    %2781 = vmatprep.mubr.bf16.mxu0 %v889
    %2782 = vmatmul.mubr.bf16.gmra.mrb[0].mxu0 %v888
    %v2783 = vpop.f32.mrb[0].mxu0
    %v2784 = vadd.f32 %v2741, %v2783
    %v2785 = vpop.f32.mrb[0].mxu0
    %v2786 = vadd.f32 %v2743, %v2785
    %v2787 = vpop.f32.mrb[0].mxu0
    %v2788 = vadd.f32 %v2745, %v2787
    %v2789 = vpop.f32.mrb[0].mxu0
    %v2790 = vadd.f32 %v2747, %v2789
    %2791 = vdwg.mxu0
    %vm2792 = vcmp.gt.f32.partialorder %v2612, 0.0
    %vm2793 = vcmp.gt.f32.partialorder %v2614, 0.0
    %vm2794 = vcmp.gt.f32.partialorder %v2784, 0.0
    %vm2795 = vcmp.gt.f32.partialorder %v2786, 0.0
    %vm2796 = vcmp.gt.f32.partialorder %v2616, 0.0
    %vm2797 = vcmp.gt.f32.partialorder %v2618, 0.0
    %vm2798 = vcmp.gt.f32.partialorder %v2788, 0.0
    %vm2799 = vcmp.gt.f32.partialorder %v2790, 0.0
    %v2800 = vmin.f32 %v2612, 0.0
    %v2801 = vmin.f32 %v2614, 0.0
    %v2802 = vmin.f32 %v2784, 0.0
    %v2803 = vmin.f32 %v2786, 0.0
    %v2804 = vmin.f32 %v2616, 0.0
    %v2805 = vmin.f32 %v2618, 0.0
    %v2806 = vmin.f32 %v2788, 0.0
    %v2807 = vmin.f32 %v2790, 0.0
    %v2808 = vmul.f32 %v2800, 1.442695
    %v2809 = vpow.pop %v2808
    %v2810 = vmul.f32 %v2801, 1.442695
    %v2811 = vpow.pop %v2810
    %v2812 = vmul.f32 %v2802, 1.442695
    %v2813 = vpow.pop %v2812
    %v2814 = vmul.f32 %v2803, 1.442695
    %v2815 = vpow.pop %v2814
    %v2816 = vmul.f32 %v2804, 1.442695
    %v2817 = vpow.pop %v2816
    %v2818 = vmul.f32 %v2805, 1.442695
    %v2819 = vpow.pop %v2818
    %v2820 = vmul.f32 %v2806, 1.442695
    %v2821 = vpow.pop %v2820
    %v2822 = vmul.f32 %v2807, 1.442695
    %v2823 = vpow.pop %v2822
    %v2824 = vsub.f32 %v2809, 1.0
    %v2825 = vsub.f32 %v2811, 1.0
    %v2826 = vsub.f32 %v2813, 1.0
    %v2827 = vsub.f32 %v2815, 1.0
    %v2828 = vsub.f32 %v2817, 1.0
    %v2829 = vsub.f32 %v2819, 1.0
    %v2830 = vsub.f32 %v2821, 1.0
    %v2831 = vsub.f32 %v2823, 1.0
    %v2832 = vmul.f32 %v2824, 1.6732632
    %v2833 = vmul.f32 %v2825, 1.6732632
    %v2834 = vmul.f32 %v2826, 1.6732632
    %v2835 = vmul.f32 %v2827, 1.6732632
    %v2836 = vmul.f32 %v2828, 1.6732632
    %v2837 = vmul.f32 %v2829, 1.6732632
    %v2838 = vmul.f32 %v2830, 1.6732632
    %v2839 = vmul.f32 %v2831, 1.6732632
    %v2840 = vsel %vm2792, %v2612, %v2832
    %v2841 = vsel %vm2793, %v2614, %v2833
    %v2842 = vsel %vm2794, %v2784, %v2834
    %v2843 = vsel %vm2795, %v2786, %v2835
    %v2844 = vsel %vm2796, %v2616, %v2836
    %v2845 = vsel %vm2797, %v2618, %v2837
    %v2846 = vsel %vm2798, %v2788, %v2838
    %v2847 = vsel %vm2799, %v2790, %v2839
    %v2848 = vmul.f32 %v2840, 1.050701
    %v2849 = vmul.f32 %v2841, 1.050701
    %v2850 = vmul.f32 %v2842, 1.050701
    %v2851 = vmul.f32 %v2843, 1.050701
    %v2852 = vmul.f32 %v2844, 1.050701
    %v2853 = vmul.f32 %v2845, 1.050701
    %v2854 = vmul.f32 %v2846, 1.050701
    %v2855 = vmul.f32 %v2847, 1.050701
    %v2856 = vpack.c.bf16 %v2852, %v2848
    %v2857 = vpack.c.bf16 %v2853, %v2849
    %v2858 = vpack.c.bf16 %v2854, %v2850
    %v2859 = vpack.c.bf16 %v2855, %v2851
    %v2860 = vld [vmem:[#allocation10] sm:$0xf]
    %v2861 = vld [vmem:[#allocation10 + $0x4] sm:$0xf]
    %v2862 = vld [vmem:[#allocation10 + $0x8] sm:$0xf]
    %v2863 = vld [vmem:[#allocation10 + $0xc] sm:$0xf]
    %v2864 = vld [vmem:[#allocation10 + $0x10] sm:$0xf]
    %v2865 = vld [vmem:[#allocation10 + $0x14] sm:$0xf]
    %v2866 = vld [vmem:[#allocation10 + $0x18] sm:$0xf]
    %v2867 = vld [vmem:[#allocation10 + $0x1c] sm:$0xf]
    %v2868 = vld [vmem:[#allocation10 + $0x20] sm:$0xf]
    %v2869 = vld [vmem:[#allocation10 + $0x24] sm:$0xf]
    %v2870 = vld [vmem:[#allocation10 + $0x28] sm:$0xf]
    %v2871 = vld [vmem:[#allocation10 + $0x2c] sm:$0xf]
    %v2872 = vld [vmem:[#allocation10 + $0x30] sm:$0xf]
    %v2873 = vld [vmem:[#allocation10 + $0x34] sm:$0xf]
    %v2874 = vld [vmem:[#allocation10 + $0x38] sm:$0xf]
    %v2875 = vld [vmem:[#allocation10 + $0x3c] sm:$0xf]
    %v2876 = vld [vmem:[#allocation10 + $0x40] sm:$0xf]
    %v2877 = vld [vmem:[#allocation10 + $0x44] sm:$0xf]
    %v2878 = vld [vmem:[#allocation10 + $0x48] sm:$0xf]
    %v2879 = vld [vmem:[#allocation10 + $0x4c] sm:$0xf]
    %v2880 = vld [vmem:[#allocation10 + $0x50] sm:$0xf]
    %v2881 = vld [vmem:[#allocation10 + $0x54] sm:$0xf]
    %v2882 = vld [vmem:[#allocation10 + $0x58] sm:$0xf]
    %v2883 = vld [vmem:[#allocation10 + $0x5c] sm:$0xf]
    %v2884 = vld [vmem:[#allocation10 + $0x60] sm:$0xf]
    %v2885 = vld [vmem:[#allocation10 + $0x64] sm:$0xf]
    %v2886 = vld [vmem:[#allocation10 + $0x68] sm:$0xf]
    %v2887 = vld [vmem:[#allocation10 + $0x6c] sm:$0xf]
    %v2888 = vld [vmem:[#allocation10 + $0x70] sm:$0xf]
    %v2889 = vld [vmem:[#allocation10 + $0x74] sm:$0xf]
    %v2890 = vld [vmem:[#allocation10 + $0x78] sm:$0xf]
    %v2891 = vld [vmem:[#allocation10 + $0x7c] sm:$0xf]
    %v2892 = vld [vmem:[#allocation10 + $0x80] sm:$0xf]
    %v2893 = vld [vmem:[#allocation10 + $0x84] sm:$0xf]
    %v2894 = vld [vmem:[#allocation10 + $0x88] sm:$0xf]
    %v2895 = vld [vmem:[#allocation10 + $0x8c] sm:$0xf]
    %v2896 = vld [vmem:[#allocation10 + $0x90] sm:$0xf]
    %v2897 = vld [vmem:[#allocation10 + $0x94] sm:$0xf]
    %v2898 = vld [vmem:[#allocation10 + $0x98] sm:$0xf]
    %v2899 = vld [vmem:[#allocation10 + $0x9c] sm:$0xf]
    %v2900 = vld [vmem:[#allocation10 + $0xa0] sm:$0xf]
    %v2901 = vld [vmem:[#allocation10 + $0xa4] sm:$0xf]
    %v2902 = vld [vmem:[#allocation10 + $0xa8] sm:$0xf]
    %v2903 = vld [vmem:[#allocation10 + $0xac] sm:$0xf]
    %v2904 = vld [vmem:[#allocation10 + $0xb0] sm:$0xf]
    %v2905 = vld [vmem:[#allocation10 + $0xb4] sm:$0xf]
    %v2906 = vld [vmem:[#allocation10 + $0xb8] sm:$0xf]
    %v2907 = vld [vmem:[#allocation10 + $0xbc] sm:$0xf]
    %v2908 = vld [vmem:[#allocation10 + $0xc0] sm:$0xf]
    %v2909 = vld [vmem:[#allocation10 + $0xc4] sm:$0xf]
    %v2910 = vld [vmem:[#allocation10 + $0xc8] sm:$0xf]
    %v2911 = vld [vmem:[#allocation10 + $0xcc] sm:$0xf]
    %v2912 = vld [vmem:[#allocation10 + $0xd0] sm:$0xf]
    %v2913 = vld [vmem:[#allocation10 + $0xd4] sm:$0xf]
    %v2914 = vld [vmem:[#allocation10 + $0xd8] sm:$0xf]
    %v2915 = vld [vmem:[#allocation10 + $0xdc] sm:$0xf]
    %v2916 = vld [vmem:[#allocation10 + $0xe0] sm:$0xf]
    %v2917 = vld [vmem:[#allocation10 + $0xe4] sm:$0xf]
    %v2918 = vld [vmem:[#allocation10 + $0xe8] sm:$0xf]
    %v2919 = vld [vmem:[#allocation10 + $0xec] sm:$0xf]
    %v2920 = vld [vmem:[#allocation10 + $0xf0] sm:$0xf]
    %v2921 = vld [vmem:[#allocation10 + $0xf4] sm:$0xf]
    %v2922 = vld [vmem:[#allocation10 + $0xf8] sm:$0xf]
    %v2923 = vld [vmem:[#allocation10 + $0xfc] sm:$0xf]
    %v2924 = vld [vmem:[%s6] sm:$0x1]
    %v2926 = vlaneseq
    %v2927 = vshrl.u32 %v2926, 7
    %v2928 = vsub.s32 0, %v2927
    %v2929 = vrot.slane %v2924, %v2928
    %v2995 = vunpack.c.l.b16 %v2860
    %v2996 = vunpack.c.l.b16 %v2861
    %v2997 = vunpack.c.l.b16 %v2862
    %v2998 = vunpack.c.l.b16 %v2863
    %v2999 = vunpack.c.l.b16 %v2864
    %v3000 = vunpack.c.l.b16 %v2865
    %v3001 = vunpack.c.l.b16 %v2866
    %v3002 = vunpack.c.l.b16 %v2867
    %v3003 = vunpack.c.l.b16 %v2868
    %v3004 = vunpack.c.l.b16 %v2869
    %v3005 = vunpack.c.l.b16 %v2870
    %v3006 = vunpack.c.l.b16 %v2871
    %v3007 = vunpack.c.l.b16 %v2872
    %v3008 = vunpack.c.l.b16 %v2873
    %v3009 = vunpack.c.l.b16 %v2874
    %v3010 = vunpack.c.l.b16 %v2875
    %v3011 = vunpack.c.l.b16 %v2876
    %v3012 = vunpack.c.l.b16 %v2877
    %v3013 = vunpack.c.l.b16 %v2878
    %v3014 = vunpack.c.l.b16 %v2879
    %v3015 = vunpack.c.l.b16 %v2880
    %v3016 = vunpack.c.l.b16 %v2881
    %v3017 = vunpack.c.l.b16 %v2882
    %v3018 = vunpack.c.l.b16 %v2883
    %v3019 = vunpack.c.l.b16 %v2884
    %v3020 = vunpack.c.l.b16 %v2885
    %v3021 = vunpack.c.l.b16 %v2886
    %v3022 = vunpack.c.l.b16 %v2887
    %v3023 = vunpack.c.l.b16 %v2888
    %v3024 = vunpack.c.l.b16 %v2889
    %v3025 = vunpack.c.l.b16 %v2890
    %v3026 = vunpack.c.l.b16 %v2891
    %v3027 = vunpack.c.l.b16 %v2892
    %v3028 = vunpack.c.l.b16 %v2893
    %v3029 = vunpack.c.l.b16 %v2894
    %v3030 = vunpack.c.l.b16 %v2895
    %v3031 = vunpack.c.l.b16 %v2896
    %v3032 = vunpack.c.l.b16 %v2897
    %v3033 = vunpack.c.l.b16 %v2898
    %v3034 = vunpack.c.l.b16 %v2899
    %v3035 = vunpack.c.l.b16 %v2900
    %v3036 = vunpack.c.l.b16 %v2901
    %v3037 = vunpack.c.l.b16 %v2902
    %v3038 = vunpack.c.l.b16 %v2903
    %v3039 = vunpack.c.l.b16 %v2904
    %v3040 = vunpack.c.l.b16 %v2905
    %v3041 = vunpack.c.l.b16 %v2906
    %v3042 = vunpack.c.l.b16 %v2907
    %v3043 = vunpack.c.l.b16 %v2908
    %v3044 = vunpack.c.l.b16 %v2909
    %v3045 = vunpack.c.l.b16 %v2910
    %v3046 = vunpack.c.l.b16 %v2911
    %v3047 = vunpack.c.l.b16 %v2912
    %v3048 = vunpack.c.l.b16 %v2913
    %v3049 = vunpack.c.l.b16 %v2914
    %v3050 = vunpack.c.l.b16 %v2915
    %v3051 = vunpack.c.l.b16 %v2916
    %v3052 = vunpack.c.l.b16 %v2917
    %v3053 = vunpack.c.l.b16 %v2918
    %v3054 = vunpack.c.l.b16 %v2919
    %v3055 = vunpack.c.l.b16 %v2920
    %v3056 = vunpack.c.l.b16 %v2921
    %v3057 = vunpack.c.l.b16 %v2922
    %v3058 = vunpack.c.l.b16 %v2923
    %v3059 = vpack.c.b16 %v2996, %v2995
    %v3060 = vpack.c.b16 %v2998, %v2997
    %v3061 = vpack.c.b16 %v3000, %v2999
    %v3062 = vpack.c.b16 %v3002, %v3001
    %v3063 = vpack.c.b16 %v3004, %v3003
    %v3064 = vpack.c.b16 %v3006, %v3005
    %v3065 = vpack.c.b16 %v3008, %v3007
    %v3066 = vpack.c.b16 %v3010, %v3009
    %v3067 = vpack.c.b16 %v3012, %v3011
    %v3068 = vpack.c.b16 %v3014, %v3013
    %v3069 = vpack.c.b16 %v3016, %v3015
    %v3070 = vpack.c.b16 %v3018, %v3017
    %v3071 = vpack.c.b16 %v3020, %v3019
    %v3072 = vpack.c.b16 %v3022, %v3021
    %v3073 = vpack.c.b16 %v3024, %v3023
    %v3074 = vpack.c.b16 %v3026, %v3025
    %v3075 = vpack.c.b16 %v3028, %v3027
    %v3076 = vpack.c.b16 %v3030, %v3029
    %v3077 = vpack.c.b16 %v3032, %v3031
    %v3078 = vpack.c.b16 %v3034, %v3033
    %v3079 = vpack.c.b16 %v3036, %v3035
    %v3080 = vpack.c.b16 %v3038, %v3037
    %v3081 = vpack.c.b16 %v3040, %v3039
    %v3082 = vpack.c.b16 %v3042, %v3041
    %v3083 = vpack.c.b16 %v3044, %v3043
    %v3084 = vpack.c.b16 %v3046, %v3045
    %v3085 = vpack.c.b16 %v3048, %v3047
    %v3086 = vpack.c.b16 %v3050, %v3049
    %v3087 = vpack.c.b16 %v3052, %v3051
    %v3088 = vpack.c.b16 %v3054, %v3053
    %v3089 = vpack.c.b16 %v3056, %v3055
    %v3090 = vpack.c.b16 %v3058, %v3057
    %3123 = vmatprep.subr.bf16.mxu0 0
    %3124 = vmatpush1.bf16.msra.mxu0 %v3059
    %3125 = vmatprep.subr.bf16.mxu0 0
    %3126 = vmatpush1.bf16.msra.mxu0 %v3060
    %3127 = vmatprep.subr.bf16.mxu0 0
    %3128 = vmatpush1.bf16.msra.mxu0 %v3061
    %3129 = vmatprep.subr.bf16.mxu0 0
    %3130 = vmatpush1.bf16.msra.mxu0 %v3062
    %3131 = vmatprep.subr.bf16.mxu0 0
    %3132 = vmatpush1.bf16.msra.mxu0 %v3063
    %3133 = vmatprep.subr.bf16.mxu0 0
    %3134 = vmatpush1.bf16.msra.mxu0 %v3064
    %3135 = vmatprep.subr.bf16.mxu0 0
    %3136 = vmatpush1.bf16.msra.mxu0 %v3065
    %3137 = vmatprep.subr.bf16.mxu0 0
    %3138 = vmatpush1.bf16.msra.mxu0 %v3066
    %3139 = vmatprep.subr.bf16.mxu0 0
    %3140 = vmatpush1.bf16.msra.mxu0 %v3067
    %3141 = vmatprep.subr.bf16.mxu0 0
    %3142 = vmatpush1.bf16.msra.mxu0 %v3068
    %3143 = vmatprep.subr.bf16.mxu0 0
    %3144 = vmatpush1.bf16.msra.mxu0 %v3069
    %3145 = vmatprep.subr.bf16.mxu0 0
    %3146 = vmatpush1.bf16.msra.mxu0 %v3070
    %3147 = vmatprep.subr.bf16.mxu0 0
    %3148 = vmatpush1.bf16.msra.mxu0 %v3071
    %3149 = vmatprep.subr.bf16.mxu0 0
    %3150 = vmatpush1.bf16.msra.mxu0 %v3072
    %3151 = vmatprep.subr.bf16.mxu0 0
    %3152 = vmatpush1.bf16.msra.mxu0 %v3073
    %3153 = vmatprep.subr.bf16.mxu0 0
    %3154 = vmatpush1.bf16.msra.mxu0 %v3074
    %3155 = vmatprep.mubr.bf16.mxu0 %v2857
    %3156 = vmatmul.mubr.bf16.gmra.mrb[0].mxu0 %v2856
    %v3157 = vpop.f32.mrb[0].mxu0
    %v3158 = vadd.f32 %v2929, %v3157
    %v3159 = vpop.f32.mrb[0].mxu0
    %v3160 = vpop.f32.mrb[0].mxu0
    %v3161 = vadd.f32 %v2929, %v3160
    %v3162 = vpop.f32.mrb[0].mxu0
    %3163 = vdwg.mxu0
    %3164 = vmatprep.subr.bf16.mxu0 0
    %3165 = vmatpush1.bf16.msra.mxu0 %v3075
    %3166 = vmatprep.subr.bf16.mxu0 0
    %3167 = vmatpush1.bf16.msra.mxu0 %v3076
    %3168 = vmatprep.subr.bf16.mxu0 0
    %3169 = vmatpush1.bf16.msra.mxu0 %v3077
    %3170 = vmatprep.subr.bf16.mxu0 0
    %3171 = vmatpush1.bf16.msra.mxu0 %v3078
    %3172 = vmatprep.subr.bf16.mxu0 0
    %3173 = vmatpush1.bf16.msra.mxu0 %v3079
    %3174 = vmatprep.subr.bf16.mxu0 0
    %3175 = vmatpush1.bf16.msra.mxu0 %v3080
    %3176 = vmatprep.subr.bf16.mxu0 0
    %3177 = vmatpush1.bf16.msra.mxu0 %v3081
    %3178 = vmatprep.subr.bf16.mxu0 0
    %3179 = vmatpush1.bf16.msra.mxu0 %v3082
    %3180 = vmatprep.subr.bf16.mxu0 0
    %3181 = vmatpush1.bf16.msra.mxu0 %v3083
    %3182 = vmatprep.subr.bf16.mxu0 0
    %3183 = vmatpush1.bf16.msra.mxu0 %v3084
    %3184 = vmatprep.subr.bf16.mxu0 0
    %3185 = vmatpush1.bf16.msra.mxu0 %v3085
    %3186 = vmatprep.subr.bf16.mxu0 0
    %3187 = vmatpush1.bf16.msra.mxu0 %v3086
    %3188 = vmatprep.subr.bf16.mxu0 0
    %3189 = vmatpush1.bf16.msra.mxu0 %v3087
    %3190 = vmatprep.subr.bf16.mxu0 0
    %3191 = vmatpush1.bf16.msra.mxu0 %v3088
    %3192 = vmatprep.subr.bf16.mxu0 0
    %3193 = vmatpush1.bf16.msra.mxu0 %v3089
    %3194 = vmatprep.subr.bf16.mxu0 0
    %3195 = vmatpush1.bf16.msra.mxu0 %v3090
    %3196 = vmatprep.mubr.bf16.mxu0 %v2859
    %3197 = vmatmul.mubr.bf16.gmra.mrb[0].mxu0 %v2858
    %v3198 = vpop.f32.mrb[0].mxu0
    %v3199 = vadd.f32 %v3158, %v3198
    %v3200 = vpop.f32.mrb[0].mxu0
    %v3201 = vpop.f32.mrb[0].mxu0
    %v3202 = vadd.f32 %v3161, %v3201
    %v3203 = vpop.f32.mrb[0].mxu0
    %3204 = vdwg.mxu0
    %v3205 = vpack.c.bf16 %v3202, %v3199
    %v3206 = vld [vmem:[#allocation11] sm:$0xff]
    %v3207 = vld [vmem:[#allocation11 + $0x8] sm:$0xff]
    %v3208 = vld [vmem:[#allocation11 + $0x10] sm:$0xff]
    %v3209 = vld [vmem:[#allocation11 + $0x18] sm:$0xff]
    %v3210 = vld [vmem:[#allocation11 + $0x20] sm:$0xff]
    %v3211 = vld [vmem:[#allocation11 + $0x28] sm:$0xff]
    %v3212 = vld [vmem:[#allocation11 + $0x30] sm:$0xff]
    %v3213 = vld [vmem:[#allocation11 + $0x38] sm:$0xff]
    %v3214 = vld [vmem:[#allocation11 + $0x40] sm:$0xff]
    %v3215 = vld [vmem:[#allocation11 + $0x48] sm:$0xff]
    %v3216 = vld [vmem:[#allocation11 + $0x50] sm:$0xff]
    %v3217 = vld [vmem:[#allocation11 + $0x58] sm:$0xff]
    %v3218 = vld [vmem:[#allocation11 + $0x60] sm:$0xff]
    %v3219 = vld [vmem:[#allocation11 + $0x68] sm:$0xff]
    %v3220 = vld [vmem:[#allocation11 + $0x70] sm:$0xff]
    %v3221 = vld [vmem:[#allocation11 + $0x78] sm:$0xff]
    %v3222 = vld [vmem:[#allocation11 + $0x80] sm:$0xff]
    %v3223 = vld [vmem:[#allocation11 + $0x88] sm:$0xff]
    %v3224 = vld [vmem:[#allocation11 + $0x90] sm:$0xff]
    %v3225 = vld [vmem:[#allocation11 + $0x98] sm:$0xff]
    %v3226 = vld [vmem:[#allocation11 + $0xa0] sm:$0xff]
    %v3227 = vld [vmem:[#allocation11 + $0xa8] sm:$0xff]
    %v3228 = vld [vmem:[#allocation11 + $0xb0] sm:$0xff]
    %v3229 = vld [vmem:[#allocation11 + $0xb8] sm:$0xff]
    %v3230 = vld [vmem:[#allocation11 + $0xc0] sm:$0xff]
    %v3231 = vld [vmem:[#allocation11 + $0xc8] sm:$0xff]
    %v3232 = vld [vmem:[#allocation11 + $0xd0] sm:$0xff]
    %v3233 = vld [vmem:[#allocation11 + $0xd8] sm:$0xff]
    %v3234 = vld [vmem:[#allocation11 + $0xe0] sm:$0xff]
    %v3235 = vld [vmem:[#allocation11 + $0xe8] sm:$0xff]
    %v3236 = vld [vmem:[#allocation11 + $0xf0] sm:$0xff]
    %v3237 = vld [vmem:[#allocation11 + $0xf8] sm:$0xff]
    %v3238 = vld [vmem:[#allocation11 + $0x100] sm:$0xff]
    %v3239 = vld [vmem:[#allocation11 + $0x108] sm:$0xff]
    %v3240 = vld [vmem:[#allocation11 + $0x110] sm:$0xff]
    %v3241 = vld [vmem:[#allocation11 + $0x118] sm:$0xff]
    %v3242 = vld [vmem:[#allocation11 + $0x120] sm:$0xff]
    %v3243 = vld [vmem:[#allocation11 + $0x128] sm:$0xff]
    %v3244 = vld [vmem:[#allocation11 + $0x130] sm:$0xff]
    %v3245 = vld [vmem:[#allocation11 + $0x138] sm:$0xff]
    %v3246 = vld [vmem:[#allocation11 + $0x140] sm:$0xff]
    %v3247 = vld [vmem:[#allocation11 + $0x148] sm:$0xff]
    %v3248 = vld [vmem:[#allocation11 + $0x150] sm:$0xff]
    %v3249 = vld [vmem:[#allocation11 + $0x158] sm:$0xff]
    %v3250 = vld [vmem:[#allocation11 + $0x160] sm:$0xff]
    %v3251 = vld [vmem:[#allocation11 + $0x168] sm:$0xff]
    %v3252 = vld [vmem:[#allocation11 + $0x170] sm:$0xff]
    %v3253 = vld [vmem:[#allocation11 + $0x178] sm:$0xff]
    %v3254 = vld [vmem:[#allocation11 + $0x180] sm:$0xff]
    %v3255 = vld [vmem:[#allocation11 + $0x188] sm:$0xff]
    %v3256 = vld [vmem:[#allocation11 + $0x190] sm:$0xff]
    %v3257 = vld [vmem:[#allocation11 + $0x198] sm:$0xff]
    %v3258 = vld [vmem:[#allocation11 + $0x1a0] sm:$0xff]
    %v3259 = vld [vmem:[#allocation11 + $0x1a8] sm:$0xff]
    %v3260 = vld [vmem:[#allocation11 + $0x1b0] sm:$0xff]
    %v3261 = vld [vmem:[#allocation11 + $0x1b8] sm:$0xff]
    %v3262 = vld [vmem:[#allocation11 + $0x1c0] sm:$0xff]
    %v3263 = vld [vmem:[#allocation11 + $0x1c8] sm:$0xff]
    %v3264 = vld [vmem:[#allocation11 + $0x1d0] sm:$0xff]
    %v3265 = vld [vmem:[#allocation11 + $0x1d8] sm:$0xff]
    %v3266 = vld [vmem:[#allocation11 + $0x1e0] sm:$0xff]
    %v3267 = vld [vmem:[#allocation11 + $0x1e8] sm:$0xff]
    %v3268 = vld [vmem:[#allocation11 + $0x1f0] sm:$0xff]
    %v3269 = vld [vmem:[#allocation11 + $0x1f8] sm:$0xff]
    %v3270 = vld [vmem:[%s8] sm:$0xff]
    %v3272 = vlaneseq
    %v3273 = vshrl.u32 %v3272, 7
    %v3274 = vsub.s32 0, %v3273
    %v3275 = vrot.slane %v3270, %v3274
    %v3276 = vlaneseq
    %v3277 = vshrl.u32 %v3276, 7
    %v3278 = vsub.s32 1, %v3277
    %v3279 = vrot.slane %v3270, %v3278
    %v3280 = vlaneseq
    %v3281 = vshrl.u32 %v3280, 7
    %v3282 = vsub.s32 2, %v3281
    %v3283 = vrot.slane %v3270, %v3282
    %v3284 = vlaneseq
    %v3285 = vshrl.u32 %v3284, 7
    %v3286 = vsub.s32 3, %v3285
    %v3287 = vrot.slane %v3270, %v3286
    %v3288 = vlaneseq
    %v3289 = vshrl.u32 %v3288, 7
    %v3290 = vsub.s32 4, %v3289
    %v3291 = vrot.slane %v3270, %v3290
    %v3292 = vlaneseq
    %v3293 = vshrl.u32 %v3292, 7
    %v3294 = vsub.s32 5, %v3293
    %v3295 = vrot.slane %v3270, %v3294
    %v3296 = vlaneseq
    %v3297 = vshrl.u32 %v3296, 7
    %v3298 = vsub.s32 6, %v3297
    %v3299 = vrot.slane %v3270, %v3298
    %v3300 = vlaneseq
    %v3301 = vshrl.u32 %v3300, 7
    %v3302 = vsub.s32 7, %v3301
    %v3303 = vrot.slane %v3270, %v3302
    %v3376 = vunpack.c.l.b16 %v3206
    %v3377 = vunpack.c.h.b16 %v3206
    %v3378 = vunpack.c.l.b16 %v3207
    %v3379 = vunpack.c.h.b16 %v3207
    %v3380 = vunpack.c.l.b16 %v3208
    %v3381 = vunpack.c.h.b16 %v3208
    %v3382 = vunpack.c.l.b16 %v3209
    %v3383 = vunpack.c.h.b16 %v3209
    %v3384 = vunpack.c.l.b16 %v3210
    %v3385 = vunpack.c.h.b16 %v3210
    %v3386 = vunpack.c.l.b16 %v3211
    %v3387 = vunpack.c.h.b16 %v3211
    %v3388 = vunpack.c.l.b16 %v3212
    %v3389 = vunpack.c.h.b16 %v3212
    %v3390 = vunpack.c.l.b16 %v3213
    %v3391 = vunpack.c.h.b16 %v3213
    %v3392 = vunpack.c.l.b16 %v3214
    %v3393 = vunpack.c.h.b16 %v3214
    %v3394 = vunpack.c.l.b16 %v3215
    %v3395 = vunpack.c.h.b16 %v3215
    %v3396 = vunpack.c.l.b16 %v3216
    %v3397 = vunpack.c.h.b16 %v3216
    %v3398 = vunpack.c.l.b16 %v3217
    %v3399 = vunpack.c.h.b16 %v3217
    %v3400 = vunpack.c.l.b16 %v3218
    %v3401 = vunpack.c.h.b16 %v3218
    %v3402 = vunpack.c.l.b16 %v3219
    %v3403 = vunpack.c.h.b16 %v3219
    %v3404 = vunpack.c.l.b16 %v3220
    %v3405 = vunpack.c.h.b16 %v3220
    %v3406 = vunpack.c.l.b16 %v3221
    %v3407 = vunpack.c.h.b16 %v3221
    %v3408 = vunpack.c.l.b16 %v3222
    %v3409 = vunpack.c.h.b16 %v3222
    %v3410 = vunpack.c.l.b16 %v3223
    %v3411 = vunpack.c.h.b16 %v3223
    %v3412 = vunpack.c.l.b16 %v3224
    %v3413 = vunpack.c.h.b16 %v3224
    %v3414 = vunpack.c.l.b16 %v3225
    %v3415 = vunpack.c.h.b16 %v3225
    %v3416 = vunpack.c.l.b16 %v3226
    %v3417 = vunpack.c.h.b16 %v3226
    %v3418 = vunpack.c.l.b16 %v3227
    %v3419 = vunpack.c.h.b16 %v3227
    %v3420 = vunpack.c.l.b16 %v3228
    %v3421 = vunpack.c.h.b16 %v3228
    %v3422 = vunpack.c.l.b16 %v3229
    %v3423 = vunpack.c.h.b16 %v3229
    %v3424 = vunpack.c.l.b16 %v3230
    %v3425 = vunpack.c.h.b16 %v3230
    %v3426 = vunpack.c.l.b16 %v3231
    %v3427 = vunpack.c.h.b16 %v3231
    %v3428 = vunpack.c.l.b16 %v3232
    %v3429 = vunpack.c.h.b16 %v3232
    %v3430 = vunpack.c.l.b16 %v3233
    %v3431 = vunpack.c.h.b16 %v3233
    %v3432 = vunpack.c.l.b16 %v3234
    %v3433 = vunpack.c.h.b16 %v3234
    %v3434 = vunpack.c.l.b16 %v3235
    %v3435 = vunpack.c.h.b16 %v3235
    %v3436 = vunpack.c.l.b16 %v3236
    %v3437 = vunpack.c.h.b16 %v3236
    %v3438 = vunpack.c.l.b16 %v3237
    %v3439 = vunpack.c.h.b16 %v3237
    %v3440 = vunpack.c.l.b16 %v3238
    %v3441 = vunpack.c.h.b16 %v3238
    %v3442 = vunpack.c.l.b16 %v3239
    %v3443 = vunpack.c.h.b16 %v3239
    %v3444 = vunpack.c.l.b16 %v3240
    %v3445 = vunpack.c.h.b16 %v3240
    %v3446 = vunpack.c.l.b16 %v3241
    %v3447 = vunpack.c.h.b16 %v3241
    %v3448 = vunpack.c.l.b16 %v3242
    %v3449 = vunpack.c.h.b16 %v3242
    %v3450 = vunpack.c.l.b16 %v3243
    %v3451 = vunpack.c.h.b16 %v3243
    %v3452 = vunpack.c.l.b16 %v3244
    %v3453 = vunpack.c.h.b16 %v3244
    %v3454 = vunpack.c.l.b16 %v3245
    %v3455 = vunpack.c.h.b16 %v3245
    %v3456 = vunpack.c.l.b16 %v3246
    %v3457 = vunpack.c.h.b16 %v3246
    %v3458 = vunpack.c.l.b16 %v3247
    %v3459 = vunpack.c.h.b16 %v3247
    %v3460 = vunpack.c.l.b16 %v3248
    %v3461 = vunpack.c.h.b16 %v3248
    %v3462 = vunpack.c.l.b16 %v3249
    %v3463 = vunpack.c.h.b16 %v3249
    %v3464 = vunpack.c.l.b16 %v3250
    %v3465 = vunpack.c.h.b16 %v3250
    %v3466 = vunpack.c.l.b16 %v3251
    %v3467 = vunpack.c.h.b16 %v3251
    %v3468 = vunpack.c.l.b16 %v3252
    %v3469 = vunpack.c.h.b16 %v3252
    %v3470 = vunpack.c.l.b16 %v3253
    %v3471 = vunpack.c.h.b16 %v3253
    %v3472 = vunpack.c.l.b16 %v3254
    %v3473 = vunpack.c.h.b16 %v3254
    %v3474 = vunpack.c.l.b16 %v3255
    %v3475 = vunpack.c.h.b16 %v3255
    %v3476 = vunpack.c.l.b16 %v3256
    %v3477 = vunpack.c.h.b16 %v3256
    %v3478 = vunpack.c.l.b16 %v3257
    %v3479 = vunpack.c.h.b16 %v3257
    %v3480 = vunpack.c.l.b16 %v3258
    %v3481 = vunpack.c.h.b16 %v3258
    %v3482 = vunpack.c.l.b16 %v3259
    %v3483 = vunpack.c.h.b16 %v3259
    %v3484 = vunpack.c.l.b16 %v3260
    %v3485 = vunpack.c.h.b16 %v3260
    %v3486 = vunpack.c.l.b16 %v3261
    %v3487 = vunpack.c.h.b16 %v3261
    %v3488 = vunpack.c.l.b16 %v3262
    %v3489 = vunpack.c.h.b16 %v3262
    %v3490 = vunpack.c.l.b16 %v3263
    %v3491 = vunpack.c.h.b16 %v3263
    %v3492 = vunpack.c.l.b16 %v3264
    %v3493 = vunpack.c.h.b16 %v3264
    %v3494 = vunpack.c.l.b16 %v3265
    %v3495 = vunpack.c.h.b16 %v3265
    %v3496 = vunpack.c.l.b16 %v3266
    %v3497 = vunpack.c.h.b16 %v3266
    %v3498 = vunpack.c.l.b16 %v3267
    %v3499 = vunpack.c.h.b16 %v3267
    %v3500 = vunpack.c.l.b16 %v3268
    %v3501 = vunpack.c.h.b16 %v3268
    %v3502 = vunpack.c.l.b16 %v3269
    %v3503 = vunpack.c.h.b16 %v3269
    %v3504 = vpack.c.b16 %v3384, %v3376
    %v3505 = vpack.c.b16 %v3385, %v3377
    %v3506 = vpack.c.b16 %v3386, %v3378
    %v3507 = vpack.c.b16 %v3387, %v3379
    %v3508 = vpack.c.b16 %v3388, %v3380
    %v3509 = vpack.c.b16 %v3389, %v3381
    %v3510 = vpack.c.b16 %v3390, %v3382
    %v3511 = vpack.c.b16 %v3391, %v3383
    %v3512 = vpack.c.b16 %v3400, %v3392
    %v3513 = vpack.c.b16 %v3401, %v3393
    %v3514 = vpack.c.b16 %v3402, %v3394
    %v3515 = vpack.c.b16 %v3403, %v3395
    %v3516 = vpack.c.b16 %v3404, %v3396
    %v3517 = vpack.c.b16 %v3405, %v3397
    %v3518 = vpack.c.b16 %v3406, %v3398
    %v3519 = vpack.c.b16 %v3407, %v3399
    %v3520 = vpack.c.b16 %v3416, %v3408
    %v3521 = vpack.c.b16 %v3417, %v3409
    %v3522 = vpack.c.b16 %v3418, %v3410
    %v3523 = vpack.c.b16 %v3419, %v3411
    %v3524 = vpack.c.b16 %v3420, %v3412
    %v3525 = vpack.c.b16 %v3421, %v3413
    %v3526 = vpack.c.b16 %v3422, %v3414
    %v3527 = vpack.c.b16 %v3423, %v3415
    %v3528 = vpack.c.b16 %v3432, %v3424
    %v3529 = vpack.c.b16 %v3433, %v3425
    %v3530 = vpack.c.b16 %v3434, %v3426
    %v3531 = vpack.c.b16 %v3435, %v3427
    %v3532 = vpack.c.b16 %v3436, %v3428
    %v3533 = vpack.c.b16 %v3437, %v3429
    %v3534 = vpack.c.b16 %v3438, %v3430
    %v3535 = vpack.c.b16 %v3439, %v3431
    %v3536 = vpack.c.b16 %v3448, %v3440
    %v3537 = vpack.c.b16 %v3449, %v3441
    %v3538 = vpack.c.b16 %v3450, %v3442
    %v3539 = vpack.c.b16 %v3451, %v3443
    %v3540 = vpack.c.b16 %v3452, %v3444
    %v3541 = vpack.c.b16 %v3453, %v3445
    %v3542 = vpack.c.b16 %v3454, %v3446
    %v3543 = vpack.c.b16 %v3455, %v3447
    %v3544 = vpack.c.b16 %v3464, %v3456
    %v3545 = vpack.c.b16 %v3465, %v3457
    %v3546 = vpack.c.b16 %v3466, %v3458
    %v3547 = vpack.c.b16 %v3467, %v3459
    %v3548 = vpack.c.b16 %v3468, %v3460
    %v3549 = vpack.c.b16 %v3469, %v3461
    %v3550 = vpack.c.b16 %v3470, %v3462
    %v3551 = vpack.c.b16 %v3471, %v3463
    %v3552 = vpack.c.b16 %v3480, %v3472
    %v3553 = vpack.c.b16 %v3481, %v3473
    %v3554 = vpack.c.b16 %v3482, %v3474
    %v3555 = vpack.c.b16 %v3483, %v3475
    %v3556 = vpack.c.b16 %v3484, %v3476
    %v3557 = vpack.c.b16 %v3485, %v3477
    %v3558 = vpack.c.b16 %v3486, %v3478
    %v3559 = vpack.c.b16 %v3487, %v3479
    %v3560 = vpack.c.b16 %v3496, %v3488
    %v3561 = vpack.c.b16 %v3497, %v3489
    %v3562 = vpack.c.b16 %v3498, %v3490
    %v3563 = vpack.c.b16 %v3499, %v3491
    %v3564 = vpack.c.b16 %v3500, %v3492
    %v3565 = vpack.c.b16 %v3501, %v3493
    %v3566 = vpack.c.b16 %v3502, %v3494
    %v3567 = vpack.c.b16 %v3503, %v3495
    %3632 = vmatprep.subr.bf16.mxu0 %v3505
    %3633 = vmatpush1.bf16.msra.mxu0 %v3504
    %3634 = vmatprep.subr.bf16.mxu0 %v3513
    %3635 = vmatpush1.bf16.msra.mxu0 %v3512
    %3636 = vmatprep.subr.bf16.mxu0 %v3521
    %3637 = vmatpush1.bf16.msra.mxu0 %v3520
    %3638 = vmatprep.subr.bf16.mxu0 %v3529
    %3639 = vmatpush1.bf16.msra.mxu0 %v3528
    %3640 = vmatprep.subr.bf16.mxu0 %v3537
    %3641 = vmatpush1.bf16.msra.mxu0 %v3536
    %3642 = vmatprep.subr.bf16.mxu0 %v3545
    %3643 = vmatpush1.bf16.msra.mxu0 %v3544
    %3644 = vmatprep.subr.bf16.mxu0 %v3553
    %3645 = vmatpush1.bf16.msra.mxu0 %v3552
    %3646 = vmatprep.subr.bf16.mxu0 %v3561
    %3647 = vmatpush1.bf16.msra.mxu0 %v3560
    %3648 = vmatprep.subr.bf16.mxu0 0
    %3649 = vmatpush1.bf16.msra.mxu0 0
    %3650 = vmatprep.subr.bf16.mxu0 0
    %3651 = vmatpush1.bf16.msra.mxu0 0
    %3652 = vmatprep.subr.bf16.mxu0 0
    %3653 = vmatpush1.bf16.msra.mxu0 0
    %3654 = vmatprep.subr.bf16.mxu0 0
    %3655 = vmatpush1.bf16.msra.mxu0 0
    %3656 = vmatprep.subr.bf16.mxu0 0
    %3657 = vmatpush1.bf16.msra.mxu0 0
    %3658 = vmatprep.subr.bf16.mxu0 0
    %3659 = vmatpush1.bf16.msra.mxu0 0
    %3660 = vmatprep.subr.bf16.mxu0 0
    %3661 = vmatpush1.bf16.msra.mxu0 0
    %3662 = vmatprep.subr.bf16.mxu0 0
    %3663 = vmatpush1.bf16.msra.mxu0 0
    %3664 = vmatprep.mubr.bf16.mxu0 0
    %3665 = vmatmul.mubr.bf16.gmra.mrb[0].mxu0 %v3205
    %v3666 = vpop.f32.mrb[0].mxu0
    %v3667 = vadd.f32 %v3275, %v3666
    %v3668 = vpop.f32.mrb[0].mxu0
    %v3669 = vadd.f32 %v3279, %v3668
    %v3670 = vpop.f32.mrb[0].mxu0
    %v3671 = vadd.f32 %v3275, %v3670
    %v3672 = vpop.f32.mrb[0].mxu0
    %v3673 = vadd.f32 %v3279, %v3672
    %3674 = vdwg.mxu0
    %3675 = vmatprep.subr.bf16.mxu0 %v3507
    %3676 = vmatpush1.bf16.msra.mxu0 %v3506
    %3677 = vmatprep.subr.bf16.mxu0 %v3515
    %3678 = vmatpush1.bf16.msra.mxu0 %v3514
    %3679 = vmatprep.subr.bf16.mxu0 %v3523
    %3680 = vmatpush1.bf16.msra.mxu0 %v3522
    %3681 = vmatprep.subr.bf16.mxu0 %v3531
    %3682 = vmatpush1.bf16.msra.mxu0 %v3530
    %3683 = vmatprep.subr.bf16.mxu0 %v3539
    %3684 = vmatpush1.bf16.msra.mxu0 %v3538
    %3685 = vmatprep.subr.bf16.mxu0 %v3547
    %3686 = vmatpush1.bf16.msra.mxu0 %v3546
    %3687 = vmatprep.subr.bf16.mxu0 %v3555
    %3688 = vmatpush1.bf16.msra.mxu0 %v3554
    %3689 = vmatprep.subr.bf16.mxu0 %v3563
    %3690 = vmatpush1.bf16.msra.mxu0 %v3562
    %3691 = vmatprep.subr.bf16.mxu0 0
    %3692 = vmatpush1.bf16.msra.mxu0 0
    %3693 = vmatprep.subr.bf16.mxu0 0
    %3694 = vmatpush1.bf16.msra.mxu0 0
    %3695 = vmatprep.subr.bf16.mxu0 0
    %3696 = vmatpush1.bf16.msra.mxu0 0
    %3697 = vmatprep.subr.bf16.mxu0 0
    %3698 = vmatpush1.bf16.msra.mxu0 0
    %3699 = vmatprep.subr.bf16.mxu0 0
    %3700 = vmatpush1.bf16.msra.mxu0 0
    %3701 = vmatprep.subr.bf16.mxu0 0
    %3702 = vmatpush1.bf16.msra.mxu0 0
    %3703 = vmatprep.subr.bf16.mxu0 0
    %3704 = vmatpush1.bf16.msra.mxu0 0
    %3705 = vmatprep.subr.bf16.mxu0 0
    %3706 = vmatpush1.bf16.msra.mxu0 0
    %3707 = vmatprep.mubr.bf16.mxu0 0
    %3708 = vmatmul.mubr.bf16.gmra.mrb[0].mxu0 %v3205
    %v3709 = vpop.f32.mrb[0].mxu0
    %v3710 = vadd.f32 %v3283, %v3709
    %v3711 = vpop.f32.mrb[0].mxu0
    %v3712 = vadd.f32 %v3287, %v3711
    %v3713 = vpop.f32.mrb[0].mxu0
    %v3714 = vadd.f32 %v3283, %v3713
    %v3715 = vpop.f32.mrb[0].mxu0
    %v3716 = vadd.f32 %v3287, %v3715
    %3717 = vdwg.mxu0
    %3718 = vmatprep.subr.bf16.mxu0 %v3509
    %3719 = vmatpush1.bf16.msra.mxu0 %v3508
    %3720 = vmatprep.subr.bf16.mxu0 %v3517
    %3721 = vmatpush1.bf16.msra.mxu0 %v3516
    %3722 = vmatprep.subr.bf16.mxu0 %v3525
    %3723 = vmatpush1.bf16.msra.mxu0 %v3524
    %3724 = vmatprep.subr.bf16.mxu0 %v3533
    %3725 = vmatpush1.bf16.msra.mxu0 %v3532
    %3726 = vmatprep.subr.bf16.mxu0 %v3541
    %3727 = vmatpush1.bf16.msra.mxu0 %v3540
    %3728 = vmatprep.subr.bf16.mxu0 %v3549
    %3729 = vmatpush1.bf16.msra.mxu0 %v3548
    %3730 = vmatprep.subr.bf16.mxu0 %v3557
    %3731 = vmatpush1.bf16.msra.mxu0 %v3556
    %3732 = vmatprep.subr.bf16.mxu0 %v3565
    %3733 = vmatpush1.bf16.msra.mxu0 %v3564
    %3734 = vmatprep.subr.bf16.mxu0 0
    %3735 = vmatpush1.bf16.msra.mxu0 0
    %3736 = vmatprep.subr.bf16.mxu0 0
    %3737 = vmatpush1.bf16.msra.mxu0 0
    %3738 = vmatprep.subr.bf16.mxu0 0
    %3739 = vmatpush1.bf16.msra.mxu0 0
    %3740 = vmatprep.subr.bf16.mxu0 0
    %3741 = vmatpush1.bf16.msra.mxu0 0
    %3742 = vmatprep.subr.bf16.mxu0 0
    %3743 = vmatpush1.bf16.msra.mxu0 0
    %3744 = vmatprep.subr.bf16.mxu0 0
    %3745 = vmatpush1.bf16.msra.mxu0 0
    %3746 = vmatprep.subr.bf16.mxu0 0
    %3747 = vmatpush1.bf16.msra.mxu0 0
    %3748 = vmatprep.subr.bf16.mxu0 0
    %3749 = vmatpush1.bf16.msra.mxu0 0
    %3750 = vmatprep.mubr.bf16.mxu0 0
    %3751 = vmatmul.mubr.bf16.gmra.mrb[0].mxu0 %v3205
    %v3752 = vpop.f32.mrb[0].mxu0
    %v3753 = vadd.f32 %v3291, %v3752
    %v3754 = vpop.f32.mrb[0].mxu0
    %v3755 = vadd.f32 %v3295, %v3754
    %v3756 = vpop.f32.mrb[0].mxu0
    %v3757 = vadd.f32 %v3291, %v3756
    %v3758 = vpop.f32.mrb[0].mxu0
    %v3759 = vadd.f32 %v3295, %v3758
    %3760 = vdwg.mxu0
    %3761 = vmatprep.subr.bf16.mxu0 %v3511
    %3762 = vmatpush1.bf16.msra.mxu0 %v3510
    %3763 = vmatprep.subr.bf16.mxu0 %v3519
    %3764 = vmatpush1.bf16.msra.mxu0 %v3518
    %3765 = vmatprep.subr.bf16.mxu0 %v3527
    %3766 = vmatpush1.bf16.msra.mxu0 %v3526
    %3767 = vmatprep.subr.bf16.mxu0 %v3535
    %3768 = vmatpush1.bf16.msra.mxu0 %v3534
    %3769 = vmatprep.subr.bf16.mxu0 %v3543
    %3770 = vmatpush1.bf16.msra.mxu0 %v3542
    %3771 = vmatprep.subr.bf16.mxu0 %v3551
    %3772 = vmatpush1.bf16.msra.mxu0 %v3550
    %3773 = vmatprep.subr.bf16.mxu0 %v3559
    %3774 = vmatpush1.bf16.msra.mxu0 %v3558
    %3775 = vmatprep.subr.bf16.mxu0 %v3567
    %3776 = vmatpush1.bf16.msra.mxu0 %v3566
    %3777 = vmatprep.subr.bf16.mxu0 0
    %3778 = vmatpush1.bf16.msra.mxu0 0
    %3779 = vmatprep.subr.bf16.mxu0 0
    %3780 = vmatpush1.bf16.msra.mxu0 0
    %3781 = vmatprep.subr.bf16.mxu0 0
    %3782 = vmatpush1.bf16.msra.mxu0 0
    %3783 = vmatprep.subr.bf16.mxu0 0
    %3784 = vmatpush1.bf16.msra.mxu0 0
    %3785 = vmatprep.subr.bf16.mxu0 0
    %3786 = vmatpush1.bf16.msra.mxu0 0
    %3787 = vmatprep.subr.bf16.mxu0 0
    %3788 = vmatpush1.bf16.msra.mxu0 0
    %3789 = vmatprep.subr.bf16.mxu0 0
    %3790 = vmatpush1.bf16.msra.mxu0 0
    %3791 = vmatprep.subr.bf16.mxu0 0
    %3792 = vmatpush1.bf16.msra.mxu0 0
    %3793 = vmatprep.mubr.bf16.mxu0 0
    %3794 = vmatmul.mubr.bf16.gmra.mrb[0].mxu0 %v3205
    %v3795 = vpop.f32.mrb[0].mxu0
    %v3796 = vadd.f32 %v3299, %v3795
    %v3797 = vpop.f32.mrb[0].mxu0
    %v3798 = vadd.f32 %v3303, %v3797
    %v3799 = vpop.f32.mrb[0].mxu0
    %v3800 = vadd.f32 %v3299, %v3799
    %v3801 = vpop.f32.mrb[0].mxu0
    %v3802 = vadd.f32 %v3303, %v3801
    %3803 = vdwg.mxu0
    %vm3804 = vcmp.gt.f32.partialorder %v3667, 0.0
    %vm3805 = vcmp.gt.f32.partialorder %v3669, 0.0
    %vm3806 = vcmp.gt.f32.partialorder %v3710, 0.0
    %vm3807 = vcmp.gt.f32.partialorder %v3712, 0.0
    %vm3808 = vcmp.gt.f32.partialorder %v3753, 0.0
    %vm3809 = vcmp.gt.f32.partialorder %v3755, 0.0
    %vm3810 = vcmp.gt.f32.partialorder %v3796, 0.0
    %vm3811 = vcmp.gt.f32.partialorder %v3798, 0.0
    %vm3812 = vcmp.gt.f32.partialorder %v3671, 0.0
    %vm3813 = vcmp.gt.f32.partialorder %v3673, 0.0
    %vm3814 = vcmp.gt.f32.partialorder %v3714, 0.0
    %vm3815 = vcmp.gt.f32.partialorder %v3716, 0.0
    %vm3816 = vcmp.gt.f32.partialorder %v3757, 0.0
    %vm3817 = vcmp.gt.f32.partialorder %v3759, 0.0
    %vm3818 = vcmp.gt.f32.partialorder %v3800, 0.0
    %vm3819 = vcmp.gt.f32.partialorder %v3802, 0.0
    %v3820 = vmin.f32 %v3667, 0.0
    %v3821 = vmin.f32 %v3669, 0.0
    %v3822 = vmin.f32 %v3710, 0.0
    %v3823 = vmin.f32 %v3712, 0.0
    %v3824 = vmin.f32 %v3753, 0.0
    %v3825 = vmin.f32 %v3755, 0.0
    %v3826 = vmin.f32 %v3796, 0.0
    %v3827 = vmin.f32 %v3798, 0.0
    %v3828 = vmin.f32 %v3671, 0.0
    %v3829 = vmin.f32 %v3673, 0.0
    %v3830 = vmin.f32 %v3714, 0.0
    %v3831 = vmin.f32 %v3716, 0.0
    %v3832 = vmin.f32 %v3757, 0.0
    %v3833 = vmin.f32 %v3759, 0.0
    %v3834 = vmin.f32 %v3800, 0.0
    %v3835 = vmin.f32 %v3802, 0.0
    %v3836 = vmul.f32 %v3820, 1.442695
    %v3837 = vpow.pop %v3836
    %v3838 = vmul.f32 %v3821, 1.442695
    %v3839 = vpow.pop %v3838
    %v3840 = vmul.f32 %v3822, 1.442695
    %v3841 = vpow.pop %v3840
    %v3842 = vmul.f32 %v3823, 1.442695
    %v3843 = vpow.pop %v3842
    %v3844 = vmul.f32 %v3824, 1.442695
    %v3845 = vpow.pop %v3844
    %v3846 = vmul.f32 %v3825, 1.442695
    %v3847 = vpow.pop %v3846
    %v3848 = vmul.f32 %v3826, 1.442695
    %v3849 = vpow.pop %v3848
    %v3850 = vmul.f32 %v3827, 1.442695
    %v3851 = vpow.pop %v3850
    %v3852 = vmul.f32 %v3828, 1.442695
    %v3853 = vpow.pop %v3852
    %v3854 = vmul.f32 %v3829, 1.442695
    %v3855 = vpow.pop %v3854
    %v3856 = vmul.f32 %v3830, 1.442695
    %v3857 = vpow.pop %v3856
    %v3858 = vmul.f32 %v3831, 1.442695
    %v3859 = vpow.pop %v3858
    %v3860 = vmul.f32 %v3832, 1.442695
    %v3861 = vpow.pop %v3860
    %v3862 = vmul.f32 %v3833, 1.442695
    %v3863 = vpow.pop %v3862
    %v3864 = vmul.f32 %v3834, 1.442695
    %v3865 = vpow.pop %v3864
    %v3866 = vmul.f32 %v3835, 1.442695
    %v3867 = vpow.pop %v3866
    %v3868 = vsub.f32 %v3837, 1.0
    %v3869 = vsub.f32 %v3839, 1.0
    %v3870 = vsub.f32 %v3841, 1.0
    %v3871 = vsub.f32 %v3843, 1.0
    %v3872 = vsub.f32 %v3845, 1.0
    %v3873 = vsub.f32 %v3847, 1.0
    %v3874 = vsub.f32 %v3849, 1.0
    %v3875 = vsub.f32 %v3851, 1.0
    %v3876 = vsub.f32 %v3853, 1.0
    %v3877 = vsub.f32 %v3855, 1.0
    %v3878 = vsub.f32 %v3857, 1.0
    %v3879 = vsub.f32 %v3859, 1.0
    %v3880 = vsub.f32 %v3861, 1.0
    %v3881 = vsub.f32 %v3863, 1.0
    %v3882 = vsub.f32 %v3865, 1.0
    %v3883 = vsub.f32 %v3867, 1.0
    %v3884 = vmul.f32 %v3868, 1.6732632
    %v3885 = vmul.f32 %v3869, 1.6732632
    %v3886 = vmul.f32 %v3870, 1.6732632
    %v3887 = vmul.f32 %v3871, 1.6732632
    %v3888 = vmul.f32 %v3872, 1.6732632
    %v3889 = vmul.f32 %v3873, 1.6732632
    %v3890 = vmul.f32 %v3874, 1.6732632
    %v3891 = vmul.f32 %v3875, 1.6732632
    %v3892 = vmul.f32 %v3876, 1.6732632
    %v3893 = vmul.f32 %v3877, 1.6732632
    %v3894 = vmul.f32 %v3878, 1.6732632
    %v3895 = vmul.f32 %v3879, 1.6732632
    %v3896 = vmul.f32 %v3880, 1.6732632
    %v3897 = vmul.f32 %v3881, 1.6732632
    %v3898 = vmul.f32 %v3882, 1.6732632
    %v3899 = vmul.f32 %v3883, 1.6732632
    %v3900 = vsel %vm3804, %v3667, %v3884
    %v3901 = vsel %vm3805, %v3669, %v3885
    %v3902 = vsel %vm3806, %v3710, %v3886
    %v3903 = vsel %vm3807, %v3712, %v3887
    %v3904 = vsel %vm3808, %v3753, %v3888
    %v3905 = vsel %vm3809, %v3755, %v3889
    %v3906 = vsel %vm3810, %v3796, %v3890
    %v3907 = vsel %vm3811, %v3798, %v3891
    %v3908 = vsel %vm3812, %v3671, %v3892
    %v3909 = vsel %vm3813, %v3673, %v3893
    %v3910 = vsel %vm3814, %v3714, %v3894
    %v3911 = vsel %vm3815, %v3716, %v3895
    %v3912 = vsel %vm3816, %v3757, %v3896
    %v3913 = vsel %vm3817, %v3759, %v3897
    %v3914 = vsel %vm3818, %v3800, %v3898
    %v3915 = vsel %vm3819, %v3802, %v3899
    %v3916 = vmul.f32 %v3900, 1.050701
    %v3917 = vmul.f32 %v3901, 1.050701
    %v3918 = vmul.f32 %v3902, 1.050701
    %v3919 = vmul.f32 %v3903, 1.050701
    %v3920 = vmul.f32 %v3904, 1.050701
    %v3921 = vmul.f32 %v3905, 1.050701
    %v3922 = vmul.f32 %v3906, 1.050701
    %v3923 = vmul.f32 %v3907, 1.050701
    %v3924 = vmul.f32 %v3908, 1.050701
    %v3925 = vmul.f32 %v3909, 1.050701
    %v3926 = vmul.f32 %v3910, 1.050701
    %v3927 = vmul.f32 %v3911, 1.050701
    %v3928 = vmul.f32 %v3912, 1.050701
    %v3929 = vmul.f32 %v3913, 1.050701
    %v3930 = vmul.f32 %v3914, 1.050701
    %v3931 = vmul.f32 %v3915, 1.050701
    %v3932 = vpack.c.bf16 %v3924, %v3916
    %v3933 = vpack.c.bf16 %v3925, %v3917
    %v3934 = vpack.c.bf16 %v3926, %v3918
    %v3935 = vpack.c.bf16 %v3927, %v3919
    %v3936 = vpack.c.bf16 %v3928, %v3920
    %v3937 = vpack.c.bf16 %v3929, %v3921
    %v3938 = vpack.c.bf16 %v3930, %v3922
    %v3939 = vpack.c.bf16 %v3931, %v3923
    %v3940 = vld [vmem:[#allocation13] sm:$0xff]
    %v3941 = vld [vmem:[#allocation13 + $0x8] sm:$0xff]
    %v3942 = vld [vmem:[#allocation13 + $0x10] sm:$0xff]
    %v3943 = vld [vmem:[#allocation13 + $0x18] sm:$0xff]
    %v3944 = vld [vmem:[#allocation13 + $0x20] sm:$0xff]
    %v3945 = vld [vmem:[#allocation13 + $0x28] sm:$0xff]
    %v3946 = vld [vmem:[#allocation13 + $0x30] sm:$0xff]
    %v3947 = vld [vmem:[#allocation13 + $0x38] sm:$0xff]
    %v3948 = vld [vmem:[#allocation13 + $0x40] sm:$0xff]
    %v3949 = vld [vmem:[#allocation13 + $0x48] sm:$0xff]
    %v3950 = vld [vmem:[#allocation13 + $0x50] sm:$0xff]
    %v3951 = vld [vmem:[#allocation13 + $0x58] sm:$0xff]
    %v3952 = vld [vmem:[#allocation13 + $0x60] sm:$0xff]
    %v3953 = vld [vmem:[#allocation13 + $0x68] sm:$0xff]
    %v3954 = vld [vmem:[#allocation13 + $0x70] sm:$0xff]
    %v3955 = vld [vmem:[#allocation13 + $0x78] sm:$0xff]
    %v3956 = vld [vmem:[#allocation13 + $0x80] sm:$0xff]
    %v3957 = vld [vmem:[#allocation13 + $0x88] sm:$0xff]
    %v3958 = vld [vmem:[#allocation13 + $0x90] sm:$0xff]
    %v3959 = vld [vmem:[#allocation13 + $0x98] sm:$0xff]
    %v3960 = vld [vmem:[#allocation13 + $0xa0] sm:$0xff]
    %v3961 = vld [vmem:[#allocation13 + $0xa8] sm:$0xff]
    %v3962 = vld [vmem:[#allocation13 + $0xb0] sm:$0xff]
    %v3963 = vld [vmem:[#allocation13 + $0xb8] sm:$0xff]
    %v3964 = vld [vmem:[#allocation13 + $0xc0] sm:$0xff]
    %v3965 = vld [vmem:[#allocation13 + $0xc8] sm:$0xff]
    %v3966 = vld [vmem:[#allocation13 + $0xd0] sm:$0xff]
    %v3967 = vld [vmem:[#allocation13 + $0xd8] sm:$0xff]
    %v3968 = vld [vmem:[#allocation13 + $0xe0] sm:$0xff]
    %v3969 = vld [vmem:[#allocation13 + $0xe8] sm:$0xff]
    %v3970 = vld [vmem:[#allocation13 + $0xf0] sm:$0xff]
    %v3971 = vld [vmem:[#allocation13 + $0xf8] sm:$0xff]
    %v3972 = vld [vmem:[#allocation13 + $0x100] sm:$0xff]
    %v3973 = vld [vmem:[#allocation13 + $0x108] sm:$0xff]
    %v3974 = vld [vmem:[#allocation13 + $0x110] sm:$0xff]
    %v3975 = vld [vmem:[#allocation13 + $0x118] sm:$0xff]
    %v3976 = vld [vmem:[#allocation13 + $0x120] sm:$0xff]
    %v3977 = vld [vmem:[#allocation13 + $0x128] sm:$0xff]
    %v3978 = vld [vmem:[#allocation13 + $0x130] sm:$0xff]
    %v3979 = vld [vmem:[#allocation13 + $0x138] sm:$0xff]
    %v3980 = vld [vmem:[#allocation13 + $0x140] sm:$0xff]
    %v3981 = vld [vmem:[#allocation13 + $0x148] sm:$0xff]
    %v3982 = vld [vmem:[#allocation13 + $0x150] sm:$0xff]
    %v3983 = vld [vmem:[#allocation13 + $0x158] sm:$0xff]
    %v3984 = vld [vmem:[#allocation13 + $0x160] sm:$0xff]
    %v3985 = vld [vmem:[#allocation13 + $0x168] sm:$0xff]
    %v3986 = vld [vmem:[#allocation13 + $0x170] sm:$0xff]
    %v3987 = vld [vmem:[#allocation13 + $0x178] sm:$0xff]
    %v3988 = vld [vmem:[#allocation13 + $0x180] sm:$0xff]
    %v3989 = vld [vmem:[#allocation13 + $0x188] sm:$0xff]
    %v3990 = vld [vmem:[#allocation13 + $0x190] sm:$0xff]
    %v3991 = vld [vmem:[#allocation13 + $0x198] sm:$0xff]
    %v3992 = vld [vmem:[#allocation13 + $0x1a0] sm:$0xff]
    %v3993 = vld [vmem:[#allocation13 + $0x1a8] sm:$0xff]
    %v3994 = vld [vmem:[#allocation13 + $0x1b0] sm:$0xff]
    %v3995 = vld [vmem:[#allocation13 + $0x1b8] sm:$0xff]
    %v3996 = vld [vmem:[#allocation13 + $0x1c0] sm:$0xff]
    %v3997 = vld [vmem:[#allocation13 + $0x1c8] sm:$0xff]
    %v3998 = vld [vmem:[#allocation13 + $0x1d0] sm:$0xff]
    %v3999 = vld [vmem:[#allocation13 + $0x1d8] sm:$0xff]
    %v4000 = vld [vmem:[#allocation13 + $0x1e0] sm:$0xff]
    %v4001 = vld [vmem:[#allocation13 + $0x1e8] sm:$0xff]
    %v4002 = vld [vmem:[#allocation13 + $0x1f0] sm:$0xff]
    %v4003 = vld [vmem:[#allocation13 + $0x1f8] sm:$0xff]
    %v4004 = vld [vmem:[#allocation13 + $0x200] sm:$0xff]
    %v4005 = vld [vmem:[#allocation13 + $0x208] sm:$0xff]
    %v4006 = vld [vmem:[#allocation13 + $0x210] sm:$0xff]
    %v4007 = vld [vmem:[#allocation13 + $0x218] sm:$0xff]
    %v4008 = vld [vmem:[#allocation13 + $0x220] sm:$0xff]
    %v4009 = vld [vmem:[#allocation13 + $0x228] sm:$0xff]
    %v4010 = vld [vmem:[#allocation13 + $0x230] sm:$0xff]
    %v4011 = vld [vmem:[#allocation13 + $0x238] sm:$0xff]
    %v4012 = vld [vmem:[#allocation13 + $0x240] sm:$0xff]
    %v4013 = vld [vmem:[#allocation13 + $0x248] sm:$0xff]
    %v4014 = vld [vmem:[#allocation13 + $0x250] sm:$0xff]
    %v4015 = vld [vmem:[#allocation13 + $0x258] sm:$0xff]
    %v4016 = vld [vmem:[#allocation13 + $0x260] sm:$0xff]
    %v4017 = vld [vmem:[#allocation13 + $0x268] sm:$0xff]
    %v4018 = vld [vmem:[#allocation13 + $0x270] sm:$0xff]
    %v4019 = vld [vmem:[#allocation13 + $0x278] sm:$0xff]
    %v4020 = vld [vmem:[#allocation13 + $0x280] sm:$0xff]
    %v4021 = vld [vmem:[#allocation13 + $0x288] sm:$0xff]
    %v4022 = vld [vmem:[#allocation13 + $0x290] sm:$0xff]
    %v4023 = vld [vmem:[#allocation13 + $0x298] sm:$0xff]
    %v4024 = vld [vmem:[#allocation13 + $0x2a0] sm:$0xff]
    %v4025 = vld [vmem:[#allocation13 + $0x2a8] sm:$0xff]
    %v4026 = vld [vmem:[#allocation13 + $0x2b0] sm:$0xff]
    %v4027 = vld [vmem:[#allocation13 + $0x2b8] sm:$0xff]
    %v4028 = vld [vmem:[#allocation13 + $0x2c0] sm:$0xff]
    %v4029 = vld [vmem:[#allocation13 + $0x2c8] sm:$0xff]
    %v4030 = vld [vmem:[#allocation13 + $0x2d0] sm:$0xff]
    %v4031 = vld [vmem:[#allocation13 + $0x2d8] sm:$0xff]
    %v4032 = vld [vmem:[#allocation13 + $0x2e0] sm:$0xff]
    %v4033 = vld [vmem:[#allocation13 + $0x2e8] sm:$0xff]
    %v4034 = vld [vmem:[#allocation13 + $0x2f0] sm:$0xff]
    %v4035 = vld [vmem:[#allocation13 + $0x2f8] sm:$0xff]
    %v4036 = vld [vmem:[#allocation13 + $0x300] sm:$0xff]
    %v4037 = vld [vmem:[#allocation13 + $0x308] sm:$0xff]
    %v4038 = vld [vmem:[#allocation13 + $0x310] sm:$0xff]
    %v4039 = vld [vmem:[#allocation13 + $0x318] sm:$0xff]
    %v4040 = vld [vmem:[#allocation13 + $0x320] sm:$0xff]
    %v4041 = vld [vmem:[#allocation13 + $0x328] sm:$0xff]
    %v4042 = vld [vmem:[#allocation13 + $0x330] sm:$0xff]
    %v4043 = vld [vmem:[#allocation13 + $0x338] sm:$0xff]
    %v4044 = vld [vmem:[#allocation13 + $0x340] sm:$0xff]
    %v4045 = vld [vmem:[#allocation13 + $0x348] sm:$0xff]
    %v4046 = vld [vmem:[#allocation13 + $0x350] sm:$0xff]
    %v4047 = vld [vmem:[#allocation13 + $0x358] sm:$0xff]
    %v4048 = vld [vmem:[#allocation13 + $0x360] sm:$0xff]
    %v4049 = vld [vmem:[#allocation13 + $0x368] sm:$0xff]
    %v4050 = vld [vmem:[#allocation13 + $0x370] sm:$0xff]
    %v4051 = vld [vmem:[#allocation13 + $0x378] sm:$0xff]
    %v4052 = vld [vmem:[#allocation13 + $0x380] sm:$0xff]
    %v4053 = vld [vmem:[#allocation13 + $0x388] sm:$0xff]
    %v4054 = vld [vmem:[#allocation13 + $0x390] sm:$0xff]
    %v4055 = vld [vmem:[#allocation13 + $0x398] sm:$0xff]
    %v4056 = vld [vmem:[#allocation13 + $0x3a0] sm:$0xff]
    %v4057 = vld [vmem:[#allocation13 + $0x3a8] sm:$0xff]
    %v4058 = vld [vmem:[#allocation13 + $0x3b0] sm:$0xff]
    %v4059 = vld [vmem:[#allocation13 + $0x3b8] sm:$0xff]
    %v4060 = vld [vmem:[#allocation13 + $0x3c0] sm:$0xff]
    %v4061 = vld [vmem:[#allocation13 + $0x3c8] sm:$0xff]
    %v4062 = vld [vmem:[#allocation13 + $0x3d0] sm:$0xff]
    %v4063 = vld [vmem:[#allocation13 + $0x3d8] sm:$0xff]
    %v4064 = vld [vmem:[#allocation13 + $0x3e0] sm:$0xff]
    %v4065 = vld [vmem:[#allocation13 + $0x3e8] sm:$0xff]
    %v4066 = vld [vmem:[#allocation13 + $0x3f0] sm:$0xff]
    %v4067 = vld [vmem:[#allocation13 + $0x3f8] sm:$0xff]
    %v4068 = vld [vmem:[#allocation13 + $0x400] sm:$0xff]
    %v4069 = vld [vmem:[#allocation13 + $0x408] sm:$0xff]
    %v4070 = vld [vmem:[#allocation13 + $0x410] sm:$0xff]
    %v4071 = vld [vmem:[#allocation13 + $0x418] sm:$0xff]
    %v4072 = vld [vmem:[#allocation13 + $0x420] sm:$0xff]
    %v4073 = vld [vmem:[#allocation13 + $0x428] sm:$0xff]
    %v4074 = vld [vmem:[#allocation13 + $0x430] sm:$0xff]
    %v4075 = vld [vmem:[#allocation13 + $0x438] sm:$0xff]
    %v4076 = vld [vmem:[#allocation13 + $0x440] sm:$0xff]
    %v4077 = vld [vmem:[#allocation13 + $0x448] sm:$0xff]
    %v4078 = vld [vmem:[#allocation13 + $0x450] sm:$0xff]
    %v4079 = vld [vmem:[#allocation13 + $0x458] sm:$0xff]
    %v4080 = vld [vmem:[#allocation13 + $0x460] sm:$0xff]
    %v4081 = vld [vmem:[#allocation13 + $0x468] sm:$0xff]
    %v4082 = vld [vmem:[#allocation13 + $0x470] sm:$0xff]
    %v4083 = vld [vmem:[#allocation13 + $0x478] sm:$0xff]
    %v4084 = vld [vmem:[#allocation13 + $0x480] sm:$0xff]
    %v4085 = vld [vmem:[#allocation13 + $0x488] sm:$0xff]
    %v4086 = vld [vmem:[#allocation13 + $0x490] sm:$0xff]
    %v4087 = vld [vmem:[#allocation13 + $0x498] sm:$0xff]
    %v4088 = vld [vmem:[#allocation13 + $0x4a0] sm:$0xff]
    %v4089 = vld [vmem:[#allocation13 + $0x4a8] sm:$0xff]
    %v4090 = vld [vmem:[#allocation13 + $0x4b0] sm:$0xff]
    %v4091 = vld [vmem:[#allocation13 + $0x4b8] sm:$0xff]
    %v4092 = vld [vmem:[#allocation13 + $0x4c0] sm:$0xff]
    %v4093 = vld [vmem:[#allocation13 + $0x4c8] sm:$0xff]
    %v4094 = vld [vmem:[#allocation13 + $0x4d0] sm:$0xff]
    %v4095 = vld [vmem:[#allocation13 + $0x4d8] sm:$0xff]
    %v4096 = vld [vmem:[#allocation13 + $0x4e0] sm:$0xff]
    %v4097 = vld [vmem:[#allocation13 + $0x4e8] sm:$0xff]
    %v4098 = vld [vmem:[#allocation13 + $0x4f0] sm:$0xff]
    %v4099 = vld [vmem:[#allocation13 + $0x4f8] sm:$0xff]
    %v4100 = vld [vmem:[#allocation13 + $0x500] sm:$0xff]
    %v4101 = vld [vmem:[#allocation13 + $0x508] sm:$0xff]
    %v4102 = vld [vmem:[#allocation13 + $0x510] sm:$0xff]
    %v4103 = vld [vmem:[#allocation13 + $0x518] sm:$0xff]
    %v4104 = vld [vmem:[#allocation13 + $0x520] sm:$0xff]
    %v4105 = vld [vmem:[#allocation13 + $0x528] sm:$0xff]
    %v4106 = vld [vmem:[#allocation13 + $0x530] sm:$0xff]
    %v4107 = vld [vmem:[#allocation13 + $0x538] sm:$0xff]
    %v4108 = vld [vmem:[#allocation13 + $0x540] sm:$0xff]
    %v4109 = vld [vmem:[#allocation13 + $0x548] sm:$0xff]
    %v4110 = vld [vmem:[#allocation13 + $0x550] sm:$0xff]
    %v4111 = vld [vmem:[#allocation13 + $0x558] sm:$0xff]
    %v4112 = vld [vmem:[#allocation13 + $0x560] sm:$0xff]
    %v4113 = vld [vmem:[#allocation13 + $0x568] sm:$0xff]
    %v4114 = vld [vmem:[#allocation13 + $0x570] sm:$0xff]
    %v4115 = vld [vmem:[#allocation13 + $0x578] sm:$0xff]
    %v4116 = vld [vmem:[#allocation13 + $0x580] sm:$0xff]
    %v4117 = vld [vmem:[#allocation13 + $0x588] sm:$0xff]
    %v4118 = vld [vmem:[#allocation13 + $0x590] sm:$0xff]
    %v4119 = vld [vmem:[#allocation13 + $0x598] sm:$0xff]
    %v4120 = vld [vmem:[#allocation13 + $0x5a0] sm:$0xff]
    %v4121 = vld [vmem:[#allocation13 + $0x5a8] sm:$0xff]
    %v4122 = vld [vmem:[#allocation13 + $0x5b0] sm:$0xff]
    %v4123 = vld [vmem:[#allocation13 + $0x5b8] sm:$0xff]
    %v4124 = vld [vmem:[#allocation13 + $0x5c0] sm:$0xff]
    %v4125 = vld [vmem:[#allocation13 + $0x5c8] sm:$0xff]
    %v4126 = vld [vmem:[#allocation13 + $0x5d0] sm:$0xff]
    %v4127 = vld [vmem:[#allocation13 + $0x5d8] sm:$0xff]
    %v4128 = vld [vmem:[#allocation13 + $0x5e0] sm:$0xff]
    %v4129 = vld [vmem:[#allocation13 + $0x5e8] sm:$0xff]
    %v4130 = vld [vmem:[#allocation13 + $0x5f0] sm:$0xff]
    %v4131 = vld [vmem:[#allocation13 + $0x5f8] sm:$0xff]
    %v4132 = vld [vmem:[#allocation13 + $0x600] sm:$0xff]
    %v4133 = vld [vmem:[#allocation13 + $0x608] sm:$0xff]
    %v4134 = vld [vmem:[#allocation13 + $0x610] sm:$0xff]
    %v4135 = vld [vmem:[#allocation13 + $0x618] sm:$0xff]
    %v4136 = vld [vmem:[#allocation13 + $0x620] sm:$0xff]
    %v4137 = vld [vmem:[#allocation13 + $0x628] sm:$0xff]
    %v4138 = vld [vmem:[#allocation13 + $0x630] sm:$0xff]
    %v4139 = vld [vmem:[#allocation13 + $0x638] sm:$0xff]
    %v4140 = vld [vmem:[#allocation13 + $0x640] sm:$0xff]
    %v4141 = vld [vmem:[#allocation13 + $0x648] sm:$0xff]
    %v4142 = vld [vmem:[#allocation13 + $0x650] sm:$0xff]
    %v4143 = vld [vmem:[#allocation13 + $0x658] sm:$0xff]
    %v4144 = vld [vmem:[#allocation13 + $0x660] sm:$0xff]
    %v4145 = vld [vmem:[#allocation13 + $0x668] sm:$0xff]
    %v4146 = vld [vmem:[#allocation13 + $0x670] sm:$0xff]
    %v4147 = vld [vmem:[#allocation13 + $0x678] sm:$0xff]
    %v4148 = vld [vmem:[#allocation13 + $0x680] sm:$0xff]
    %v4149 = vld [vmem:[#allocation13 + $0x688] sm:$0xff]
    %v4150 = vld [vmem:[#allocation13 + $0x690] sm:$0xff]
    %v4151 = vld [vmem:[#allocation13 + $0x698] sm:$0xff]
    %v4152 = vld [vmem:[#allocation13 + $0x6a0] sm:$0xff]
    %v4153 = vld [vmem:[#allocation13 + $0x6a8] sm:$0xff]
    %v4154 = vld [vmem:[#allocation13 + $0x6b0] sm:$0xff]
    %v4155 = vld [vmem:[#allocation13 + $0x6b8] sm:$0xff]
    %v4156 = vld [vmem:[#allocation13 + $0x6c0] sm:$0xff]
    %v4157 = vld [vmem:[#allocation13 + $0x6c8] sm:$0xff]
    %v4158 = vld [vmem:[#allocation13 + $0x6d0] sm:$0xff]
    %v4159 = vld [vmem:[#allocation13 + $0x6d8] sm:$0xff]
    %v4160 = vld [vmem:[#allocation13 + $0x6e0] sm:$0xff]
    %v4161 = vld [vmem:[#allocation13 + $0x6e8] sm:$0xff]
    %v4162 = vld [vmem:[#allocation13 + $0x6f0] sm:$0xff]
    %v4163 = vld [vmem:[#allocation13 + $0x6f8] sm:$0xff]
    %v4164 = vld [vmem:[#allocation13 + $0x700] sm:$0xff]
    %v4165 = vld [vmem:[#allocation13 + $0x708] sm:$0xff]
    %v4166 = vld [vmem:[#allocation13 + $0x710] sm:$0xff]
    %v4167 = vld [vmem:[#allocation13 + $0x718] sm:$0xff]
    %v4168 = vld [vmem:[#allocation13 + $0x720] sm:$0xff]
    %v4169 = vld [vmem:[#allocation13 + $0x728] sm:$0xff]
    %v4170 = vld [vmem:[#allocation13 + $0x730] sm:$0xff]
    %v4171 = vld [vmem:[#allocation13 + $0x738] sm:$0xff]
    %v4172 = vld [vmem:[#allocation13 + $0x740] sm:$0xff]
    %v4173 = vld [vmem:[#allocation13 + $0x748] sm:$0xff]
    %v4174 = vld [vmem:[#allocation13 + $0x750] sm:$0xff]
    %v4175 = vld [vmem:[#allocation13 + $0x758] sm:$0xff]
    %v4176 = vld [vmem:[#allocation13 + $0x760] sm:$0xff]
    %v4177 = vld [vmem:[#allocation13 + $0x768] sm:$0xff]
    %v4178 = vld [vmem:[#allocation13 + $0x770] sm:$0xff]
    %v4179 = vld [vmem:[#allocation13 + $0x778] sm:$0xff]
    %v4180 = vld [vmem:[#allocation13 + $0x780] sm:$0xff]
    %v4181 = vld [vmem:[#allocation13 + $0x788] sm:$0xff]
    %v4182 = vld [vmem:[#allocation13 + $0x790] sm:$0xff]
    %v4183 = vld [vmem:[#allocation13 + $0x798] sm:$0xff]
    %v4184 = vld [vmem:[#allocation13 + $0x7a0] sm:$0xff]
    %v4185 = vld [vmem:[#allocation13 + $0x7a8] sm:$0xff]
    %v4186 = vld [vmem:[#allocation13 + $0x7b0] sm:$0xff]
    %v4187 = vld [vmem:[#allocation13 + $0x7b8] sm:$0xff]
    %v4188 = vld [vmem:[#allocation13 + $0x7c0] sm:$0xff]
    %v4189 = vld [vmem:[#allocation13 + $0x7c8] sm:$0xff]
    %v4190 = vld [vmem:[#allocation13 + $0x7d0] sm:$0xff]
    %v4191 = vld [vmem:[#allocation13 + $0x7d8] sm:$0xff]
    %v4192 = vld [vmem:[#allocation13 + $0x7e0] sm:$0xff]
    %v4193 = vld [vmem:[#allocation13 + $0x7e8] sm:$0xff]
    %v4194 = vld [vmem:[#allocation13 + $0x7f0] sm:$0xff]
    %v4195 = vld [vmem:[#allocation13 + $0x7f8] sm:$0xff]
    %v4196 = vld [vmem:[%s10] sm:$0xf]
    %v4198 = vlaneseq
    %v4199 = vshrl.u32 %v4198, 7
    %v4200 = vsub.s32 0, %v4199
    %v4201 = vrot.slane %v4196, %v4200
    %v4202 = vlaneseq
    %v4203 = vshrl.u32 %v4202, 7
    %v4204 = vsub.s32 1, %v4203
    %v4205 = vrot.slane %v4196, %v4204
    %v4206 = vlaneseq
    %v4207 = vshrl.u32 %v4206, 7
    %v4208 = vsub.s32 2, %v4207
    %v4209 = vrot.slane %v4196, %v4208
    %v4210 = vlaneseq
    %v4211 = vshrl.u32 %v4210, 7
    %v4212 = vsub.s32 3, %v4211
    %v4213 = vrot.slane %v4196, %v4212
    %v4474 = vunpack.c.l.b16 %v3940
    %v4475 = vunpack.c.h.b16 %v3940
    %v4476 = vunpack.c.l.b16 %v3941
    %v4477 = vunpack.c.h.b16 %v3941
    %v4478 = vunpack.c.l.b16 %v3942
    %v4479 = vunpack.c.h.b16 %v3942
    %v4480 = vunpack.c.l.b16 %v3943
    %v4481 = vunpack.c.h.b16 %v3943
    %v4482 = vunpack.c.l.b16 %v3944
    %v4483 = vunpack.c.h.b16 %v3944
    %v4484 = vunpack.c.l.b16 %v3945
    %v4485 = vunpack.c.h.b16 %v3945
    %v4486 = vunpack.c.l.b16 %v3946
    %v4487 = vunpack.c.h.b16 %v3946
    %v4488 = vunpack.c.l.b16 %v3947
    %v4489 = vunpack.c.h.b16 %v3947
    %v4490 = vunpack.c.l.b16 %v3948
    %v4491 = vunpack.c.h.b16 %v3948
    %v4492 = vunpack.c.l.b16 %v3949
    %v4493 = vunpack.c.h.b16 %v3949
    %v4494 = vunpack.c.l.b16 %v3950
    %v4495 = vunpack.c.h.b16 %v3950
    %v4496 = vunpack.c.l.b16 %v3951
    %v4497 = vunpack.c.h.b16 %v3951
    %v4498 = vunpack.c.l.b16 %v3952
    %v4499 = vunpack.c.h.b16 %v3952
    %v4500 = vunpack.c.l.b16 %v3953
    %v4501 = vunpack.c.h.b16 %v3953
    %v4502 = vunpack.c.l.b16 %v3954
    %v4503 = vunpack.c.h.b16 %v3954
    %v4504 = vunpack.c.l.b16 %v3955
    %v4505 = vunpack.c.h.b16 %v3955
    %v4506 = vunpack.c.l.b16 %v3956
    %v4507 = vunpack.c.h.b16 %v3956
    %v4508 = vunpack.c.l.b16 %v3957
    %v4509 = vunpack.c.h.b16 %v3957
    %v4510 = vunpack.c.l.b16 %v3958
    %v4511 = vunpack.c.h.b16 %v3958
    %v4512 = vunpack.c.l.b16 %v3959
    %v4513 = vunpack.c.h.b16 %v3959
    %v4514 = vunpack.c.l.b16 %v3960
    %v4515 = vunpack.c.h.b16 %v3960
    %v4516 = vunpack.c.l.b16 %v3961
    %v4517 = vunpack.c.h.b16 %v3961
    %v4518 = vunpack.c.l.b16 %v3962
    %v4519 = vunpack.c.h.b16 %v3962
    %v4520 = vunpack.c.l.b16 %v3963
    %v4521 = vunpack.c.h.b16 %v3963
    %v4522 = vunpack.c.l.b16 %v3964
    %v4523 = vunpack.c.h.b16 %v3964
    %v4524 = vunpack.c.l.b16 %v3965
    %v4525 = vunpack.c.h.b16 %v3965
    %v4526 = vunpack.c.l.b16 %v3966
    %v4527 = vunpack.c.h.b16 %v3966
    %v4528 = vunpack.c.l.b16 %v3967
    %v4529 = vunpack.c.h.b16 %v3967
    %v4530 = vunpack.c.l.b16 %v3968
    %v4531 = vunpack.c.h.b16 %v3968
    %v4532 = vunpack.c.l.b16 %v3969
    %v4533 = vunpack.c.h.b16 %v3969
    %v4534 = vunpack.c.l.b16 %v3970
    %v4535 = vunpack.c.h.b16 %v3970
    %v4536 = vunpack.c.l.b16 %v3971
    %v4537 = vunpack.c.h.b16 %v3971
    %v4538 = vunpack.c.l.b16 %v3972
    %v4539 = vunpack.c.h.b16 %v3972
    %v4540 = vunpack.c.l.b16 %v3973
    %v4541 = vunpack.c.h.b16 %v3973
    %v4542 = vunpack.c.l.b16 %v3974
    %v4543 = vunpack.c.h.b16 %v3974
    %v4544 = vunpack.c.l.b16 %v3975
    %v4545 = vunpack.c.h.b16 %v3975
    %v4546 = vunpack.c.l.b16 %v3976
    %v4547 = vunpack.c.h.b16 %v3976
    %v4548 = vunpack.c.l.b16 %v3977
    %v4549 = vunpack.c.h.b16 %v3977
    %v4550 = vunpack.c.l.b16 %v3978
    %v4551 = vunpack.c.h.b16 %v3978
    %v4552 = vunpack.c.l.b16 %v3979
    %v4553 = vunpack.c.h.b16 %v3979
    %v4554 = vunpack.c.l.b16 %v3980
    %v4555 = vunpack.c.h.b16 %v3980
    %v4556 = vunpack.c.l.b16 %v3981
    %v4557 = vunpack.c.h.b16 %v3981
    %v4558 = vunpack.c.l.b16 %v3982
    %v4559 = vunpack.c.h.b16 %v3982
    %v4560 = vunpack.c.l.b16 %v3983
    %v4561 = vunpack.c.h.b16 %v3983
    %v4562 = vunpack.c.l.b16 %v3984
    %v4563 = vunpack.c.h.b16 %v3984
    %v4564 = vunpack.c.l.b16 %v3985
    %v4565 = vunpack.c.h.b16 %v3985
    %v4566 = vunpack.c.l.b16 %v3986
    %v4567 = vunpack.c.h.b16 %v3986
    %v4568 = vunpack.c.l.b16 %v3987
    %v4569 = vunpack.c.h.b16 %v3987
    %v4570 = vunpack.c.l.b16 %v3988
    %v4571 = vunpack.c.h.b16 %v3988
    %v4572 = vunpack.c.l.b16 %v3989
    %v4573 = vunpack.c.h.b16 %v3989
    %v4574 = vunpack.c.l.b16 %v3990
    %v4575 = vunpack.c.h.b16 %v3990
    %v4576 = vunpack.c.l.b16 %v3991
    %v4577 = vunpack.c.h.b16 %v3991
    %v4578 = vunpack.c.l.b16 %v3992
    %v4579 = vunpack.c.h.b16 %v3992
    %v4580 = vunpack.c.l.b16 %v3993
    %v4581 = vunpack.c.h.b16 %v3993
    %v4582 = vunpack.c.l.b16 %v3994
    %v4583 = vunpack.c.h.b16 %v3994
    %v4584 = vunpack.c.l.b16 %v3995
    %v4585 = vunpack.c.h.b16 %v3995
    %v4586 = vunpack.c.l.b16 %v3996
    %v4587 = vunpack.c.h.b16 %v3996
    %v4588 = vunpack.c.l.b16 %v3997
    %v4589 = vunpack.c.h.b16 %v3997
    %v4590 = vunpack.c.l.b16 %v3998
    %v4591 = vunpack.c.h.b16 %v3998
    %v4592 = vunpack.c.l.b16 %v3999
    %v4593 = vunpack.c.h.b16 %v3999
    %v4594 = vunpack.c.l.b16 %v4000
    %v4595 = vunpack.c.h.b16 %v4000
    %v4596 = vunpack.c.l.b16 %v4001
    %v4597 = vunpack.c.h.b16 %v4001
    %v4598 = vunpack.c.l.b16 %v4002
    %v4599 = vunpack.c.h.b16 %v4002
    %v4600 = vunpack.c.l.b16 %v4003
    %v4601 = vunpack.c.h.b16 %v4003
    %v4602 = vunpack.c.l.b16 %v4004
    %v4603 = vunpack.c.h.b16 %v4004
    %v4604 = vunpack.c.l.b16 %v4005
    %v4605 = vunpack.c.h.b16 %v4005
    %v4606 = vunpack.c.l.b16 %v4006
    %v4607 = vunpack.c.h.b16 %v4006
    %v4608 = vunpack.c.l.b16 %v4007
    %v4609 = vunpack.c.h.b16 %v4007
    %v4610 = vunpack.c.l.b16 %v4008
    %v4611 = vunpack.c.h.b16 %v4008
    %v4612 = vunpack.c.l.b16 %v4009
    %v4613 = vunpack.c.h.b16 %v4009
    %v4614 = vunpack.c.l.b16 %v4010
    %v4615 = vunpack.c.h.b16 %v4010
    %v4616 = vunpack.c.l.b16 %v4011
    %v4617 = vunpack.c.h.b16 %v4011
    %v4618 = vunpack.c.l.b16 %v4012
    %v4619 = vunpack.c.h.b16 %v4012
    %v4620 = vunpack.c.l.b16 %v4013
    %v4621 = vunpack.c.h.b16 %v4013
    %v4622 = vunpack.c.l.b16 %v4014
    %v4623 = vunpack.c.h.b16 %v4014
    %v4624 = vunpack.c.l.b16 %v4015
    %v4625 = vunpack.c.h.b16 %v4015
    %v4626 = vunpack.c.l.b16 %v4016
    %v4627 = vunpack.c.h.b16 %v4016
    %v4628 = vunpack.c.l.b16 %v4017
    %v4629 = vunpack.c.h.b16 %v4017
    %v4630 = vunpack.c.l.b16 %v4018
    %v4631 = vunpack.c.h.b16 %v4018
    %v4632 = vunpack.c.l.b16 %v4019
    %v4633 = vunpack.c.h.b16 %v4019
    %v4634 = vunpack.c.l.b16 %v4020
    %v4635 = vunpack.c.h.b16 %v4020
    %v4636 = vunpack.c.l.b16 %v4021
    %v4637 = vunpack.c.h.b16 %v4021
    %v4638 = vunpack.c.l.b16 %v4022
    %v4639 = vunpack.c.h.b16 %v4022
    %v4640 = vunpack.c.l.b16 %v4023
    %v4641 = vunpack.c.h.b16 %v4023
    %v4642 = vunpack.c.l.b16 %v4024
    %v4643 = vunpack.c.h.b16 %v4024
    %v4644 = vunpack.c.l.b16 %v4025
    %v4645 = vunpack.c.h.b16 %v4025
    %v4646 = vunpack.c.l.b16 %v4026
    %v4647 = vunpack.c.h.b16 %v4026
    %v4648 = vunpack.c.l.b16 %v4027
    %v4649 = vunpack.c.h.b16 %v4027
    %v4650 = vunpack.c.l.b16 %v4028
    %v4651 = vunpack.c.h.b16 %v4028
    %v4652 = vunpack.c.l.b16 %v4029
    %v4653 = vunpack.c.h.b16 %v4029
    %v4654 = vunpack.c.l.b16 %v4030
    %v4655 = vunpack.c.h.b16 %v4030
    %v4656 = vunpack.c.l.b16 %v4031
    %v4657 = vunpack.c.h.b16 %v4031
    %v4658 = vunpack.c.l.b16 %v4032
    %v4659 = vunpack.c.h.b16 %v4032
    %v4660 = vunpack.c.l.b16 %v4033
    %v4661 = vunpack.c.h.b16 %v4033
    %v4662 = vunpack.c.l.b16 %v4034
    %v4663 = vunpack.c.h.b16 %v4034
    %v4664 = vunpack.c.l.b16 %v4035
    %v4665 = vunpack.c.h.b16 %v4035
    %v4666 = vunpack.c.l.b16 %v4036
    %v4667 = vunpack.c.h.b16 %v4036
    %v4668 = vunpack.c.l.b16 %v4037
    %v4669 = vunpack.c.h.b16 %v4037
    %v4670 = vunpack.c.l.b16 %v4038
    %v4671 = vunpack.c.h.b16 %v4038
    %v4672 = vunpack.c.l.b16 %v4039
    %v4673 = vunpack.c.h.b16 %v4039
    %v4674 = vunpack.c.l.b16 %v4040
    %v4675 = vunpack.c.h.b16 %v4040
    %v4676 = vunpack.c.l.b16 %v4041
    %v4677 = vunpack.c.h.b16 %v4041
    %v4678 = vunpack.c.l.b16 %v4042
    %v4679 = vunpack.c.h.b16 %v4042
    %v4680 = vunpack.c.l.b16 %v4043
    %v4681 = vunpack.c.h.b16 %v4043
    %v4682 = vunpack.c.l.b16 %v4044
    %v4683 = vunpack.c.h.b16 %v4044
    %v4684 = vunpack.c.l.b16 %v4045
    %v4685 = vunpack.c.h.b16 %v4045
    %v4686 = vunpack.c.l.b16 %v4046
    %v4687 = vunpack.c.h.b16 %v4046
    %v4688 = vunpack.c.l.b16 %v4047
    %v4689 = vunpack.c.h.b16 %v4047
    %v4690 = vunpack.c.l.b16 %v4048
    %v4691 = vunpack.c.h.b16 %v4048
    %v4692 = vunpack.c.l.b16 %v4049
    %v4693 = vunpack.c.h.b16 %v4049
    %v4694 = vunpack.c.l.b16 %v4050
    %v4695 = vunpack.c.h.b16 %v4050
    %v4696 = vunpack.c.l.b16 %v4051
    %v4697 = vunpack.c.h.b16 %v4051
    %v4698 = vunpack.c.l.b16 %v4052
    %v4699 = vunpack.c.h.b16 %v4052
    %v4700 = vunpack.c.l.b16 %v4053
    %v4701 = vunpack.c.h.b16 %v4053
    %v4702 = vunpack.c.l.b16 %v4054
    %v4703 = vunpack.c.h.b16 %v4054
    %v4704 = vunpack.c.l.b16 %v4055
    %v4705 = vunpack.c.h.b16 %v4055
    %v4706 = vunpack.c.l.b16 %v4056
    %v4707 = vunpack.c.h.b16 %v4056
    %v4708 = vunpack.c.l.b16 %v4057
    %v4709 = vunpack.c.h.b16 %v4057
    %v4710 = vunpack.c.l.b16 %v4058
    %v4711 = vunpack.c.h.b16 %v4058
    %v4712 = vunpack.c.l.b16 %v4059
    %v4713 = vunpack.c.h.b16 %v4059
    %v4714 = vunpack.c.l.b16 %v4060
    %v4715 = vunpack.c.h.b16 %v4060
    %v4716 = vunpack.c.l.b16 %v4061
    %v4717 = vunpack.c.h.b16 %v4061
    %v4718 = vunpack.c.l.b16 %v4062
    %v4719 = vunpack.c.h.b16 %v4062
    %v4720 = vunpack.c.l.b16 %v4063
    %v4721 = vunpack.c.h.b16 %v4063
    %v4722 = vunpack.c.l.b16 %v4064
    %v4723 = vunpack.c.h.b16 %v4064
    %v4724 = vunpack.c.l.b16 %v4065
    %v4725 = vunpack.c.h.b16 %v4065
    %v4726 = vunpack.c.l.b16 %v4066
    %v4727 = vunpack.c.h.b16 %v4066
    %v4728 = vunpack.c.l.b16 %v4067
    %v4729 = vunpack.c.h.b16 %v4067
    %v4730 = vunpack.c.l.b16 %v4068
    %v4731 = vunpack.c.h.b16 %v4068
    %v4732 = vunpack.c.l.b16 %v4069
    %v4733 = vunpack.c.h.b16 %v4069
    %v4734 = vunpack.c.l.b16 %v4070
    %v4735 = vunpack.c.h.b16 %v4070
    %v4736 = vunpack.c.l.b16 %v4071
    %v4737 = vunpack.c.h.b16 %v4071
    %v4738 = vunpack.c.l.b16 %v4072
    %v4739 = vunpack.c.h.b16 %v4072
    %v4740 = vunpack.c.l.b16 %v4073
    %v4741 = vunpack.c.h.b16 %v4073
    %v4742 = vunpack.c.l.b16 %v4074
    %v4743 = vunpack.c.h.b16 %v4074
    %v4744 = vunpack.c.l.b16 %v4075
    %v4745 = vunpack.c.h.b16 %v4075
    %v4746 = vunpack.c.l.b16 %v4076
    %v4747 = vunpack.c.h.b16 %v4076
    %v4748 = vunpack.c.l.b16 %v4077
    %v4749 = vunpack.c.h.b16 %v4077
    %v4750 = vunpack.c.l.b16 %v4078
    %v4751 = vunpack.c.h.b16 %v4078
    %v4752 = vunpack.c.l.b16 %v4079
    %v4753 = vunpack.c.h.b16 %v4079
    %v4754 = vunpack.c.l.b16 %v4080
    %v4755 = vunpack.c.h.b16 %v4080
    %v4756 = vunpack.c.l.b16 %v4081
    %v4757 = vunpack.c.h.b16 %v4081
    %v4758 = vunpack.c.l.b16 %v4082
    %v4759 = vunpack.c.h.b16 %v4082
    %v4760 = vunpack.c.l.b16 %v4083
    %v4761 = vunpack.c.h.b16 %v4083
    %v4762 = vunpack.c.l.b16 %v4084
    %v4763 = vunpack.c.h.b16 %v4084
    %v4764 = vunpack.c.l.b16 %v4085
    %v4765 = vunpack.c.h.b16 %v4085
    %v4766 = vunpack.c.l.b16 %v4086
    %v4767 = vunpack.c.h.b16 %v4086
    %v4768 = vunpack.c.l.b16 %v4087
    %v4769 = vunpack.c.h.b16 %v4087
    %v4770 = vunpack.c.l.b16 %v4088
    %v4771 = vunpack.c.h.b16 %v4088
    %v4772 = vunpack.c.l.b16 %v4089
    %v4773 = vunpack.c.h.b16 %v4089
    %v4774 = vunpack.c.l.b16 %v4090
    %v4775 = vunpack.c.h.b16 %v4090
    %v4776 = vunpack.c.l.b16 %v4091
    %v4777 = vunpack.c.h.b16 %v4091
    %v4778 = vunpack.c.l.b16 %v4092
    %v4779 = vunpack.c.h.b16 %v4092
    %v4780 = vunpack.c.l.b16 %v4093
    %v4781 = vunpack.c.h.b16 %v4093
    %v4782 = vunpack.c.l.b16 %v4094
    %v4783 = vunpack.c.h.b16 %v4094
    %v4784 = vunpack.c.l.b16 %v4095
    %v4785 = vunpack.c.h.b16 %v4095
    %v4786 = vunpack.c.l.b16 %v4096
    %v4787 = vunpack.c.h.b16 %v4096
    %v4788 = vunpack.c.l.b16 %v4097
    %v4789 = vunpack.c.h.b16 %v4097
    %v4790 = vunpack.c.l.b16 %v4098
    %v4791 = vunpack.c.h.b16 %v4098
    %v4792 = vunpack.c.l.b16 %v4099
    %v4793 = vunpack.c.h.b16 %v4099
    %v4794 = vunpack.c.l.b16 %v4100
    %v4795 = vunpack.c.h.b16 %v4100
    %v4796 = vunpack.c.l.b16 %v4101
    %v4797 = vunpack.c.h.b16 %v4101
    %v4798 = vunpack.c.l.b16 %v4102
    %v4799 = vunpack.c.h.b16 %v4102
    %v4800 = vunpack.c.l.b16 %v4103
    %v4801 = vunpack.c.h.b16 %v4103
    %v4802 = vunpack.c.l.b16 %v4104
    %v4803 = vunpack.c.h.b16 %v4104
    %v4804 = vunpack.c.l.b16 %v4105
    %v4805 = vunpack.c.h.b16 %v4105
    %v4806 = vunpack.c.l.b16 %v4106
    %v4807 = vunpack.c.h.b16 %v4106
    %v4808 = vunpack.c.l.b16 %v4107
    %v4809 = vunpack.c.h.b16 %v4107
    %v4810 = vunpack.c.l.b16 %v4108
    %v4811 = vunpack.c.h.b16 %v4108
    %v4812 = vunpack.c.l.b16 %v4109
    %v4813 = vunpack.c.h.b16 %v4109
    %v4814 = vunpack.c.l.b16 %v4110
    %v4815 = vunpack.c.h.b16 %v4110
    %v4816 = vunpack.c.l.b16 %v4111
    %v4817 = vunpack.c.h.b16 %v4111
    %v4818 = vunpack.c.l.b16 %v4112
    %v4819 = vunpack.c.h.b16 %v4112
    %v4820 = vunpack.c.l.b16 %v4113
    %v4821 = vunpack.c.h.b16 %v4113
    %v4822 = vunpack.c.l.b16 %v4114
    %v4823 = vunpack.c.h.b16 %v4114
    %v4824 = vunpack.c.l.b16 %v4115
    %v4825 = vunpack.c.h.b16 %v4115
    %v4826 = vunpack.c.l.b16 %v4116
    %v4827 = vunpack.c.h.b16 %v4116
    %v4828 = vunpack.c.l.b16 %v4117
    %v4829 = vunpack.c.h.b16 %v4117
    %v4830 = vunpack.c.l.b16 %v4118
    %v4831 = vunpack.c.h.b16 %v4118
    %v4832 = vunpack.c.l.b16 %v4119
    %v4833 = vunpack.c.h.b16 %v4119
    %v4834 = vunpack.c.l.b16 %v4120
    %v4835 = vunpack.c.h.b16 %v4120
    %v4836 = vunpack.c.l.b16 %v4121
    %v4837 = vunpack.c.h.b16 %v4121
    %v4838 = vunpack.c.l.b16 %v4122
    %v4839 = vunpack.c.h.b16 %v4122
    %v4840 = vunpack.c.l.b16 %v4123
    %v4841 = vunpack.c.h.b16 %v4123
    %v4842 = vunpack.c.l.b16 %v4124
    %v4843 = vunpack.c.h.b16 %v4124
    %v4844 = vunpack.c.l.b16 %v4125
    %v4845 = vunpack.c.h.b16 %v4125
    %v4846 = vunpack.c.l.b16 %v4126
    %v4847 = vunpack.c.h.b16 %v4126
    %v4848 = vunpack.c.l.b16 %v4127
    %v4849 = vunpack.c.h.b16 %v4127
    %v4850 = vunpack.c.l.b16 %v4128
    %v4851 = vunpack.c.h.b16 %v4128
    %v4852 = vunpack.c.l.b16 %v4129
    %v4853 = vunpack.c.h.b16 %v4129
    %v4854 = vunpack.c.l.b16 %v4130
    %v4855 = vunpack.c.h.b16 %v4130
    %v4856 = vunpack.c.l.b16 %v4131
    %v4857 = vunpack.c.h.b16 %v4131
    %v4858 = vunpack.c.l.b16 %v4132
    %v4859 = vunpack.c.h.b16 %v4132
    %v4860 = vunpack.c.l.b16 %v4133
    %v4861 = vunpack.c.h.b16 %v4133
    %v4862 = vunpack.c.l.b16 %v4134
    %v4863 = vunpack.c.h.b16 %v4134
    %v4864 = vunpack.c.l.b16 %v4135
    %v4865 = vunpack.c.h.b16 %v4135
    %v4866 = vunpack.c.l.b16 %v4136
    %v4867 = vunpack.c.h.b16 %v4136
    %v4868 = vunpack.c.l.b16 %v4137
    %v4869 = vunpack.c.h.b16 %v4137
    %v4870 = vunpack.c.l.b16 %v4138
    %v4871 = vunpack.c.h.b16 %v4138
    %v4872 = vunpack.c.l.b16 %v4139
    %v4873 = vunpack.c.h.b16 %v4139
    %v4874 = vunpack.c.l.b16 %v4140
    %v4875 = vunpack.c.h.b16 %v4140
    %v4876 = vunpack.c.l.b16 %v4141
    %v4877 = vunpack.c.h.b16 %v4141
    %v4878 = vunpack.c.l.b16 %v4142
    %v4879 = vunpack.c.h.b16 %v4142
    %v4880 = vunpack.c.l.b16 %v4143
    %v4881 = vunpack.c.h.b16 %v4143
    %v4882 = vunpack.c.l.b16 %v4144
    %v4883 = vunpack.c.h.b16 %v4144
    %v4884 = vunpack.c.l.b16 %v4145
    %v4885 = vunpack.c.h.b16 %v4145
    %v4886 = vunpack.c.l.b16 %v4146
    %v4887 = vunpack.c.h.b16 %v4146
    %v4888 = vunpack.c.l.b16 %v4147
    %v4889 = vunpack.c.h.b16 %v4147
    %v4890 = vunpack.c.l.b16 %v4148
    %v4891 = vunpack.c.h.b16 %v4148
    %v4892 = vunpack.c.l.b16 %v4149
    %v4893 = vunpack.c.h.b16 %v4149
    %v4894 = vunpack.c.l.b16 %v4150
    %v4895 = vunpack.c.h.b16 %v4150
    %v4896 = vunpack.c.l.b16 %v4151
    %v4897 = vunpack.c.h.b16 %v4151
    %v4898 = vunpack.c.l.b16 %v4152
    %v4899 = vunpack.c.h.b16 %v4152
    %v4900 = vunpack.c.l.b16 %v4153
    %v4901 = vunpack.c.h.b16 %v4153
    %v4902 = vunpack.c.l.b16 %v4154
    %v4903 = vunpack.c.h.b16 %v4154
    %v4904 = vunpack.c.l.b16 %v4155
    %v4905 = vunpack.c.h.b16 %v4155
    %v4906 = vunpack.c.l.b16 %v4156
    %v4907 = vunpack.c.h.b16 %v4156
    %v4908 = vunpack.c.l.b16 %v4157
    %v4909 = vunpack.c.h.b16 %v4157
    %v4910 = vunpack.c.l.b16 %v4158
    %v4911 = vunpack.c.h.b16 %v4158
    %v4912 = vunpack.c.l.b16 %v4159
    %v4913 = vunpack.c.h.b16 %v4159
    %v4914 = vunpack.c.l.b16 %v4160
    %v4915 = vunpack.c.h.b16 %v4160
    %v4916 = vunpack.c.l.b16 %v4161
    %v4917 = vunpack.c.h.b16 %v4161
    %v4918 = vunpack.c.l.b16 %v4162
    %v4919 = vunpack.c.h.b16 %v4162
    %v4920 = vunpack.c.l.b16 %v4163
    %v4921 = vunpack.c.h.b16 %v4163
    %v4922 = vunpack.c.l.b16 %v4164
    %v4923 = vunpack.c.h.b16 %v4164
    %v4924 = vunpack.c.l.b16 %v4165
    %v4925 = vunpack.c.h.b16 %v4165
    %v4926 = vunpack.c.l.b16 %v4166
    %v4927 = vunpack.c.h.b16 %v4166
    %v4928 = vunpack.c.l.b16 %v4167
    %v4929 = vunpack.c.h.b16 %v4167
    %v4930 = vunpack.c.l.b16 %v4168
    %v4931 = vunpack.c.h.b16 %v4168
    %v4932 = vunpack.c.l.b16 %v4169
    %v4933 = vunpack.c.h.b16 %v4169
    %v4934 = vunpack.c.l.b16 %v4170
    %v4935 = vunpack.c.h.b16 %v4170
    %v4936 = vunpack.c.l.b16 %v4171
    %v4937 = vunpack.c.h.b16 %v4171
    %v4938 = vunpack.c.l.b16 %v4172
    %v4939 = vunpack.c.h.b16 %v4172
    %v4940 = vunpack.c.l.b16 %v4173
    %v4941 = vunpack.c.h.b16 %v4173
    %v4942 = vunpack.c.l.b16 %v4174
    %v4943 = vunpack.c.h.b16 %v4174
    %v4944 = vunpack.c.l.b16 %v4175
    %v4945 = vunpack.c.h.b16 %v4175
    %v4946 = vunpack.c.l.b16 %v4176
    %v4947 = vunpack.c.h.b16 %v4176
    %v4948 = vunpack.c.l.b16 %v4177
    %v4949 = vunpack.c.h.b16 %v4177
    %v4950 = vunpack.c.l.b16 %v4178
    %v4951 = vunpack.c.h.b16 %v4178
    %v4952 = vunpack.c.l.b16 %v4179
    %v4953 = vunpack.c.h.b16 %v4179
    %v4954 = vunpack.c.l.b16 %v4180
    %v4955 = vunpack.c.h.b16 %v4180
    %v4956 = vunpack.c.l.b16 %v4181
    %v4957 = vunpack.c.h.b16 %v4181
    %v4958 = vunpack.c.l.b16 %v4182
    %v4959 = vunpack.c.h.b16 %v4182
    %v4960 = vunpack.c.l.b16 %v4183
    %v4961 = vunpack.c.h.b16 %v4183
    %v4962 = vunpack.c.l.b16 %v4184
    %v4963 = vunpack.c.h.b16 %v4184
    %v4964 = vunpack.c.l.b16 %v4185
    %v4965 = vunpack.c.h.b16 %v4185
    %v4966 = vunpack.c.l.b16 %v4186
    %v4967 = vunpack.c.h.b16 %v4186
    %v4968 = vunpack.c.l.b16 %v4187
    %v4969 = vunpack.c.h.b16 %v4187
    %v4970 = vunpack.c.l.b16 %v4188
    %v4971 = vunpack.c.h.b16 %v4188
    %v4972 = vunpack.c.l.b16 %v4189
    %v4973 = vunpack.c.h.b16 %v4189
    %v4974 = vunpack.c.l.b16 %v4190
    %v4975 = vunpack.c.h.b16 %v4190
    %v4976 = vunpack.c.l.b16 %v4191
    %v4977 = vunpack.c.h.b16 %v4191
    %v4978 = vunpack.c.l.b16 %v4192
    %v4979 = vunpack.c.h.b16 %v4192
    %v4980 = vunpack.c.l.b16 %v4193
    %v4981 = vunpack.c.h.b16 %v4193
    %v4982 = vunpack.c.l.b16 %v4194
    %v4983 = vunpack.c.h.b16 %v4194
    %v4984 = vunpack.c.l.b16 %v4195
    %v4985 = vunpack.c.h.b16 %v4195
    %v4986 = vpack.c.b16 %v4478, %v4474
    %v4987 = vpack.c.b16 %v4479, %v4475
    %v4988 = vpack.c.b16 %v4480, %v4476
    %v4989 = vpack.c.b16 %v4481, %v4477
    %v4990 = vpack.c.b16 %v4486, %v4482
    %v4991 = vpack.c.b16 %v4487, %v4483
    %v4992 = vpack.c.b16 %v4488, %v4484
    %v4993 = vpack.c.b16 %v4489, %v4485
    %v4994 = vpack.c.b16 %v4494, %v4490
    %v4995 = vpack.c.b16 %v4495, %v4491
    %v4996 = vpack.c.b16 %v4496, %v4492
    %v4997 = vpack.c.b16 %v4497, %v4493
    %v4998 = vpack.c.b16 %v4502, %v4498
    %v4999 = vpack.c.b16 %v4503, %v4499
    %v5000 = vpack.c.b16 %v4504, %v4500
    %v5001 = vpack.c.b16 %v4505, %v4501
    %v5002 = vpack.c.b16 %v4510, %v4506
    %v5003 = vpack.c.b16 %v4511, %v4507
    %v5004 = vpack.c.b16 %v4512, %v4508
    %v5005 = vpack.c.b16 %v4513, %v4509
    %v5006 = vpack.c.b16 %v4518, %v4514
    %v5007 = vpack.c.b16 %v4519, %v4515
    %v5008 = vpack.c.b16 %v4520, %v4516
    %v5009 = vpack.c.b16 %v4521, %v4517
    %v5010 = vpack.c.b16 %v4526, %v4522
    %v5011 = vpack.c.b16 %v4527, %v4523
    %v5012 = vpack.c.b16 %v4528, %v4524
    %v5013 = vpack.c.b16 %v4529, %v4525
    %v5014 = vpack.c.b16 %v4534, %v4530
    %v5015 = vpack.c.b16 %v4535, %v4531
    %v5016 = vpack.c.b16 %v4536, %v4532
    %v5017 = vpack.c.b16 %v4537, %v4533
    %v5018 = vpack.c.b16 %v4542, %v4538
    %v5019 = vpack.c.b16 %v4543, %v4539
    %v5020 = vpack.c.b16 %v4544, %v4540
    %v5021 = vpack.c.b16 %v4545, %v4541
    %v5022 = vpack.c.b16 %v4550, %v4546
    %v5023 = vpack.c.b16 %v4551, %v4547
    %v5024 = vpack.c.b16 %v4552, %v4548
    %v5025 = vpack.c.b16 %v4553, %v4549
    %v5026 = vpack.c.b16 %v4558, %v4554
    %v5027 = vpack.c.b16 %v4559, %v4555
    %v5028 = vpack.c.b16 %v4560, %v4556
    %v5029 = vpack.c.b16 %v4561, %v4557
    %v5030 = vpack.c.b16 %v4566, %v4562
    %v5031 = vpack.c.b16 %v4567, %v4563
    %v5032 = vpack.c.b16 %v4568, %v4564
    %v5033 = vpack.c.b16 %v4569, %v4565
    %v5034 = vpack.c.b16 %v4574, %v4570
    %v5035 = vpack.c.b16 %v4575, %v4571
    %v5036 = vpack.c.b16 %v4576, %v4572
    %v5037 = vpack.c.b16 %v4577, %v4573
    %v5038 = vpack.c.b16 %v4582, %v4578
    %v5039 = vpack.c.b16 %v4583, %v4579
    %v5040 = vpack.c.b16 %v4584, %v4580
    %v5041 = vpack.c.b16 %v4585, %v4581
    %v5042 = vpack.c.b16 %v4590, %v4586
    %v5043 = vpack.c.b16 %v4591, %v4587
    %v5044 = vpack.c.b16 %v4592, %v4588
    %v5045 = vpack.c.b16 %v4593, %v4589
    %v5046 = vpack.c.b16 %v4598, %v4594
    %v5047 = vpack.c.b16 %v4599, %v4595
    %v5048 = vpack.c.b16 %v4600, %v4596
    %v5049 = vpack.c.b16 %v4601, %v4597
    %v5050 = vpack.c.b16 %v4606, %v4602
    %v5051 = vpack.c.b16 %v4607, %v4603
    %v5052 = vpack.c.b16 %v4608, %v4604
    %v5053 = vpack.c.b16 %v4609, %v4605
    %v5054 = vpack.c.b16 %v4614, %v4610
    %v5055 = vpack.c.b16 %v4615, %v4611
    %v5056 = vpack.c.b16 %v4616, %v4612
    %v5057 = vpack.c.b16 %v4617, %v4613
    %v5058 = vpack.c.b16 %v4622, %v4618
    %v5059 = vpack.c.b16 %v4623, %v4619
    %v5060 = vpack.c.b16 %v4624, %v4620
    %v5061 = vpack.c.b16 %v4625, %v4621
    %v5062 = vpack.c.b16 %v4630, %v4626
    %v5063 = vpack.c.b16 %v4631, %v4627
    %v5064 = vpack.c.b16 %v4632, %v4628
    %v5065 = vpack.c.b16 %v4633, %v4629
    %v5066 = vpack.c.b16 %v4638, %v4634
    %v5067 = vpack.c.b16 %v4639, %v4635
    %v5068 = vpack.c.b16 %v4640, %v4636
    %v5069 = vpack.c.b16 %v4641, %v4637
    %v5070 = vpack.c.b16 %v4646, %v4642
    %v5071 = vpack.c.b16 %v4647, %v4643
    %v5072 = vpack.c.b16 %v4648, %v4644
    %v5073 = vpack.c.b16 %v4649, %v4645
    %v5074 = vpack.c.b16 %v4654, %v4650
    %v5075 = vpack.c.b16 %v4655, %v4651
    %v5076 = vpack.c.b16 %v4656, %v4652
    %v5077 = vpack.c.b16 %v4657, %v4653
    %v5078 = vpack.c.b16 %v4662, %v4658
    %v5079 = vpack.c.b16 %v4663, %v4659
    %v5080 = vpack.c.b16 %v4664, %v4660
    %v5081 = vpack.c.b16 %v4665, %v4661
    %v5082 = vpack.c.b16 %v4670, %v4666
    %v5083 = vpack.c.b16 %v4671, %v4667
    %v5084 = vpack.c.b16 %v4672, %v4668
    %v5085 = vpack.c.b16 %v4673, %v4669
    %v5086 = vpack.c.b16 %v4678, %v4674
    %v5087 = vpack.c.b16 %v4679, %v4675
    %v5088 = vpack.c.b16 %v4680, %v4676
    %v5089 = vpack.c.b16 %v4681, %v4677
    %v5090 = vpack.c.b16 %v4686, %v4682
    %v5091 = vpack.c.b16 %v4687, %v4683
    %v5092 = vpack.c.b16 %v4688, %v4684
    %v5093 = vpack.c.b16 %v4689, %v4685
    %v5094 = vpack.c.b16 %v4694, %v4690
    %v5095 = vpack.c.b16 %v4695, %v4691
    %v5096 = vpack.c.b16 %v4696, %v4692
    %v5097 = vpack.c.b16 %v4697, %v4693
    %v5098 = vpack.c.b16 %v4702, %v4698
    %v5099 = vpack.c.b16 %v4703, %v4699
    %v5100 = vpack.c.b16 %v4704, %v4700
    %v5101 = vpack.c.b16 %v4705, %v4701
    %v5102 = vpack.c.b16 %v4710, %v4706
    %v5103 = vpack.c.b16 %v4711, %v4707
    %v5104 = vpack.c.b16 %v4712, %v4708
    %v5105 = vpack.c.b16 %v4713, %v4709
    %v5106 = vpack.c.b16 %v4718, %v4714
    %v5107 = vpack.c.b16 %v4719, %v4715
    %v5108 = vpack.c.b16 %v4720, %v4716
    %v5109 = vpack.c.b16 %v4721, %v4717
    %v5110 = vpack.c.b16 %v4726, %v4722
    %v5111 = vpack.c.b16 %v4727, %v4723
    %v5112 = vpack.c.b16 %v4728, %v4724
    %v5113 = vpack.c.b16 %v4729, %v4725
    %v5114 = vpack.c.b16 %v4734, %v4730
    %v5115 = vpack.c.b16 %v4735, %v4731
    %v5116 = vpack.c.b16 %v4736, %v4732
    %v5117 = vpack.c.b16 %v4737, %v4733
    %v5118 = vpack.c.b16 %v4742, %v4738
    %v5119 = vpack.c.b16 %v4743, %v4739
    %v5120 = vpack.c.b16 %v4744, %v4740
    %v5121 = vpack.c.b16 %v4745, %v4741
    %v5122 = vpack.c.b16 %v4750, %v4746
    %v5123 = vpack.c.b16 %v4751, %v4747
    %v5124 = vpack.c.b16 %v4752, %v4748
    %v5125 = vpack.c.b16 %v4753, %v4749
    %v5126 = vpack.c.b16 %v4758, %v4754
    %v5127 = vpack.c.b16 %v4759, %v4755
    %v5128 = vpack.c.b16 %v4760, %v4756
    %v5129 = vpack.c.b16 %v4761, %v4757
    %v5130 = vpack.c.b16 %v4766, %v4762
    %v5131 = vpack.c.b16 %v4767, %v4763
    %v5132 = vpack.c.b16 %v4768, %v4764
    %v5133 = vpack.c.b16 %v4769, %v4765
    %v5134 = vpack.c.b16 %v4774, %v4770
    %v5135 = vpack.c.b16 %v4775, %v4771
    %v5136 = vpack.c.b16 %v4776, %v4772
    %v5137 = vpack.c.b16 %v4777, %v4773
    %v5138 = vpack.c.b16 %v4782, %v4778
    %v5139 = vpack.c.b16 %v4783, %v4779
    %v5140 = vpack.c.b16 %v4784, %v4780
    %v5141 = vpack.c.b16 %v4785, %v4781
    %v5142 = vpack.c.b16 %v4790, %v4786
    %v5143 = vpack.c.b16 %v4791, %v4787
    %v5144 = vpack.c.b16 %v4792, %v4788
    %v5145 = vpack.c.b16 %v4793, %v4789
    %v5146 = vpack.c.b16 %v4798, %v4794
    %v5147 = vpack.c.b16 %v4799, %v4795
    %v5148 = vpack.c.b16 %v4800, %v4796
    %v5149 = vpack.c.b16 %v4801, %v4797
    %v5150 = vpack.c.b16 %v4806, %v4802
    %v5151 = vpack.c.b16 %v4807, %v4803
    %v5152 = vpack.c.b16 %v4808, %v4804
    %v5153 = vpack.c.b16 %v4809, %v4805
    %v5154 = vpack.c.b16 %v4814, %v4810
    %v5155 = vpack.c.b16 %v4815, %v4811
    %v5156 = vpack.c.b16 %v4816, %v4812
    %v5157 = vpack.c.b16 %v4817, %v4813
    %v5158 = vpack.c.b16 %v4822, %v4818
    %v5159 = vpack.c.b16 %v4823, %v4819
    %v5160 = vpack.c.b16 %v4824, %v4820
    %v5161 = vpack.c.b16 %v4825, %v4821
    %v5162 = vpack.c.b16 %v4830, %v4826
    %v5163 = vpack.c.b16 %v4831, %v4827
    %v5164 = vpack.c.b16 %v4832, %v4828
    %v5165 = vpack.c.b16 %v4833, %v4829
    %v5166 = vpack.c.b16 %v4838, %v4834
    %v5167 = vpack.c.b16 %v4839, %v4835
    %v5168 = vpack.c.b16 %v4840, %v4836
    %v5169 = vpack.c.b16 %v4841, %v4837
    %v5170 = vpack.c.b16 %v4846, %v4842
    %v5171 = vpack.c.b16 %v4847, %v4843
    %v5172 = vpack.c.b16 %v4848, %v4844
    %v5173 = vpack.c.b16 %v4849, %v4845
    %v5174 = vpack.c.b16 %v4854, %v4850
    %v5175 = vpack.c.b16 %v4855, %v4851
    %v5176 = vpack.c.b16 %v4856, %v4852
    %v5177 = vpack.c.b16 %v4857, %v4853
    %v5178 = vpack.c.b16 %v4862, %v4858
    %v5179 = vpack.c.b16 %v4863, %v4859
    %v5180 = vpack.c.b16 %v4864, %v4860
    %v5181 = vpack.c.b16 %v4865, %v4861
    %v5182 = vpack.c.b16 %v4870, %v4866
    %v5183 = vpack.c.b16 %v4871, %v4867
    %v5184 = vpack.c.b16 %v4872, %v4868
    %v5185 = vpack.c.b16 %v4873, %v4869
    %v5186 = vpack.c.b16 %v4878, %v4874
    %v5187 = vpack.c.b16 %v4879, %v4875
    %v5188 = vpack.c.b16 %v4880, %v4876
    %v5189 = vpack.c.b16 %v4881, %v4877
    %v5190 = vpack.c.b16 %v4886, %v4882
    %v5191 = vpack.c.b16 %v4887, %v4883
    %v5192 = vpack.c.b16 %v4888, %v4884
    %v5193 = vpack.c.b16 %v4889, %v4885
    %v5194 = vpack.c.b16 %v4894, %v4890
    %v5195 = vpack.c.b16 %v4895, %v4891
    %v5196 = vpack.c.b16 %v4896, %v4892
    %v5197 = vpack.c.b16 %v4897, %v4893
    %v5198 = vpack.c.b16 %v4902, %v4898
    %v5199 = vpack.c.b16 %v4903, %v4899
    %v5200 = vpack.c.b16 %v4904, %v4900
    %v5201 = vpack.c.b16 %v4905, %v4901
    %v5202 = vpack.c.b16 %v4910, %v4906
    %v5203 = vpack.c.b16 %v4911, %v4907
    %v5204 = vpack.c.b16 %v4912, %v4908
    %v5205 = vpack.c.b16 %v4913, %v4909
    %v5206 = vpack.c.b16 %v4918, %v4914
    %v5207 = vpack.c.b16 %v4919, %v4915
    %v5208 = vpack.c.b16 %v4920, %v4916
    %v5209 = vpack.c.b16 %v4921, %v4917
    %v5210 = vpack.c.b16 %v4926, %v4922
    %v5211 = vpack.c.b16 %v4927, %v4923
    %v5212 = vpack.c.b16 %v4928, %v4924
    %v5213 = vpack.c.b16 %v4929, %v4925
    %v5214 = vpack.c.b16 %v4934, %v4930
    %v5215 = vpack.c.b16 %v4935, %v4931
    %v5216 = vpack.c.b16 %v4936, %v4932
    %v5217 = vpack.c.b16 %v4937, %v4933
    %v5218 = vpack.c.b16 %v4942, %v4938
    %v5219 = vpack.c.b16 %v4943, %v4939
    %v5220 = vpack.c.b16 %v4944, %v4940
    %v5221 = vpack.c.b16 %v4945, %v4941
    %v5222 = vpack.c.b16 %v4950, %v4946
    %v5223 = vpack.c.b16 %v4951, %v4947
    %v5224 = vpack.c.b16 %v4952, %v4948
    %v5225 = vpack.c.b16 %v4953, %v4949
    %v5226 = vpack.c.b16 %v4958, %v4954
    %v5227 = vpack.c.b16 %v4959, %v4955
    %v5228 = vpack.c.b16 %v4960, %v4956
    %v5229 = vpack.c.b16 %v4961, %v4957
    %v5230 = vpack.c.b16 %v4966, %v4962
    %v5231 = vpack.c.b16 %v4967, %v4963
    %v5232 = vpack.c.b16 %v4968, %v4964
    %v5233 = vpack.c.b16 %v4969, %v4965
    %v5234 = vpack.c.b16 %v4974, %v4970
    %v5235 = vpack.c.b16 %v4975, %v4971
    %v5236 = vpack.c.b16 %v4976, %v4972
    %v5237 = vpack.c.b16 %v4977, %v4973
    %v5238 = vpack.c.b16 %v4982, %v4978
    %v5239 = vpack.c.b16 %v4983, %v4979
    %v5240 = vpack.c.b16 %v4984, %v4980
    %v5241 = vpack.c.b16 %v4985, %v4981
    %5498 = vmatprep.subr.bf16.mxu0 %v4987
    %5499 = vmatpush1.bf16.msra.mxu0 %v4986
    %5500 = vmatprep.subr.bf16.mxu0 %v4991
    %5501 = vmatpush1.bf16.msra.mxu0 %v4990
    %5502 = vmatprep.subr.bf16.mxu0 %v4995
    %5503 = vmatpush1.bf16.msra.mxu0 %v4994
    %5504 = vmatprep.subr.bf16.mxu0 %v4999
    %5505 = vmatpush1.bf16.msra.mxu0 %v4998
    %5506 = vmatprep.subr.bf16.mxu0 %v5003
    %5507 = vmatpush1.bf16.msra.mxu0 %v5002
    %5508 = vmatprep.subr.bf16.mxu0 %v5007
    %5509 = vmatpush1.bf16.msra.mxu0 %v5006
    %5510 = vmatprep.subr.bf16.mxu0 %v5011
    %5511 = vmatpush1.bf16.msra.mxu0 %v5010
    %5512 = vmatprep.subr.bf16.mxu0 %v5015
    %5513 = vmatpush1.bf16.msra.mxu0 %v5014
    %5514 = vmatprep.subr.bf16.mxu0 %v5019
    %5515 = vmatpush1.bf16.msra.mxu0 %v5018
    %5516 = vmatprep.subr.bf16.mxu0 %v5023
    %5517 = vmatpush1.bf16.msra.mxu0 %v5022
    %5518 = vmatprep.subr.bf16.mxu0 %v5027
    %5519 = vmatpush1.bf16.msra.mxu0 %v5026
    %5520 = vmatprep.subr.bf16.mxu0 %v5031
    %5521 = vmatpush1.bf16.msra.mxu0 %v5030
    %5522 = vmatprep.subr.bf16.mxu0 %v5035
    %5523 = vmatpush1.bf16.msra.mxu0 %v5034
    %5524 = vmatprep.subr.bf16.mxu0 %v5039
    %5525 = vmatpush1.bf16.msra.mxu0 %v5038
    %5526 = vmatprep.subr.bf16.mxu0 %v5043
    %5527 = vmatpush1.bf16.msra.mxu0 %v5042
    %5528 = vmatprep.subr.bf16.mxu0 %v5047
    %5529 = vmatpush1.bf16.msra.mxu0 %v5046
    %5530 = vmatprep.mubr.bf16.mxu0 %v3933
    %5531 = vmatmul.mubr.bf16.gmra.mrb[0].mxu0 %v3932
    %v5532 = vpop.f32.mrb[0].mxu0
    %v5533 = vadd.f32 %v4201, %v5532
    %v5534 = vpop.f32.mrb[0].mxu0
    %v5535 = vadd.f32 %v4205, %v5534
    %v5536 = vpop.f32.mrb[0].mxu0
    %v5537 = vadd.f32 %v4201, %v5536
    %v5538 = vpop.f32.mrb[0].mxu0
    %v5539 = vadd.f32 %v4205, %v5538
    %5540 = vdwg.mxu0
    %5541 = vmatprep.subr.bf16.mxu0 %v5051
    %5542 = vmatpush1.bf16.msra.mxu0 %v5050
    %5543 = vmatprep.subr.bf16.mxu0 %v5055
    %5544 = vmatpush1.bf16.msra.mxu0 %v5054
    %5545 = vmatprep.subr.bf16.mxu0 %v5059
    %5546 = vmatpush1.bf16.msra.mxu0 %v5058
    %5547 = vmatprep.subr.bf16.mxu0 %v5063
    %5548 = vmatpush1.bf16.msra.mxu0 %v5062
    %5549 = vmatprep.subr.bf16.mxu0 %v5067
    %5550 = vmatpush1.bf16.msra.mxu0 %v5066
    %5551 = vmatprep.subr.bf16.mxu0 %v5071
    %5552 = vmatpush1.bf16.msra.mxu0 %v5070
    %5553 = vmatprep.subr.bf16.mxu0 %v5075
    %5554 = vmatpush1.bf16.msra.mxu0 %v5074
    %5555 = vmatprep.subr.bf16.mxu0 %v5079
    %5556 = vmatpush1.bf16.msra.mxu0 %v5078
    %5557 = vmatprep.subr.bf16.mxu0 %v5083
    %5558 = vmatpush1.bf16.msra.mxu0 %v5082
    %5559 = vmatprep.subr.bf16.mxu0 %v5087
    %5560 = vmatpush1.bf16.msra.mxu0 %v5086
    %5561 = vmatprep.subr.bf16.mxu0 %v5091
    %5562 = vmatpush1.bf16.msra.mxu0 %v5090
    %5563 = vmatprep.subr.bf16.mxu0 %v5095
    %5564 = vmatpush1.bf16.msra.mxu0 %v5094
    %5565 = vmatprep.subr.bf16.mxu0 %v5099
    %5566 = vmatpush1.bf16.msra.mxu0 %v5098
    %5567 = vmatprep.subr.bf16.mxu0 %v5103
    %5568 = vmatpush1.bf16.msra.mxu0 %v5102
    %5569 = vmatprep.subr.bf16.mxu0 %v5107
    %5570 = vmatpush1.bf16.msra.mxu0 %v5106
    %5571 = vmatprep.subr.bf16.mxu0 %v5111
    %5572 = vmatpush1.bf16.msra.mxu0 %v5110
    %5573 = vmatprep.mubr.bf16.mxu0 %v3935
    %5574 = vmatmul.mubr.bf16.gmra.mrb[0].mxu0 %v3934
    %v5575 = vpop.f32.mrb[0].mxu0
    %v5576 = vadd.f32 %v5533, %v5575
    %v5577 = vpop.f32.mrb[0].mxu0
    %v5578 = vadd.f32 %v5535, %v5577
    %v5579 = vpop.f32.mrb[0].mxu0
    %v5580 = vadd.f32 %v5537, %v5579
    %v5581 = vpop.f32.mrb[0].mxu0
    %v5582 = vadd.f32 %v5539, %v5581
    %5583 = vdwg.mxu0
    %5584 = vmatprep.subr.bf16.mxu0 %v5115
    %5585 = vmatpush1.bf16.msra.mxu0 %v5114
    %5586 = vmatprep.subr.bf16.mxu0 %v5119
    %5587 = vmatpush1.bf16.msra.mxu0 %v5118
    %5588 = vmatprep.subr.bf16.mxu0 %v5123
    %5589 = vmatpush1.bf16.msra.mxu0 %v5122
    %5590 = vmatprep.subr.bf16.mxu0 %v5127
    %5591 = vmatpush1.bf16.msra.mxu0 %v5126
    %5592 = vmatprep.subr.bf16.mxu0 %v5131
    %5593 = vmatpush1.bf16.msra.mxu0 %v5130
    %5594 = vmatprep.subr.bf16.mxu0 %v5135
    %5595 = vmatpush1.bf16.msra.mxu0 %v5134
    %5596 = vmatprep.subr.bf16.mxu0 %v5139
    %5597 = vmatpush1.bf16.msra.mxu0 %v5138
    %5598 = vmatprep.subr.bf16.mxu0 %v5143
    %5599 = vmatpush1.bf16.msra.mxu0 %v5142
    %5600 = vmatprep.subr.bf16.mxu0 %v5147
    %5601 = vmatpush1.bf16.msra.mxu0 %v5146
    %5602 = vmatprep.subr.bf16.mxu0 %v5151
    %5603 = vmatpush1.bf16.msra.mxu0 %v5150
    %5604 = vmatprep.subr.bf16.mxu0 %v5155
    %5605 = vmatpush1.bf16.msra.mxu0 %v5154
    %5606 = vmatprep.subr.bf16.mxu0 %v5159
    %5607 = vmatpush1.bf16.msra.mxu0 %v5158
    %5608 = vmatprep.subr.bf16.mxu0 %v5163
    %5609 = vmatpush1.bf16.msra.mxu0 %v5162
    %5610 = vmatprep.subr.bf16.mxu0 %v5167
    %5611 = vmatpush1.bf16.msra.mxu0 %v5166
    %5612 = vmatprep.subr.bf16.mxu0 %v5171
    %5613 = vmatpush1.bf16.msra.mxu0 %v5170
    %5614 = vmatprep.subr.bf16.mxu0 %v5175
    %5615 = vmatpush1.bf16.msra.mxu0 %v5174
    %5616 = vmatprep.mubr.bf16.mxu0 %v3937
    %5617 = vmatmul.mubr.bf16.gmra.mrb[0].mxu0 %v3936
    %v5618 = vpop.f32.mrb[0].mxu0
    %v5619 = vadd.f32 %v5576, %v5618
    %v5620 = vpop.f32.mrb[0].mxu0
    %v5621 = vadd.f32 %v5578, %v5620
    %v5622 = vpop.f32.mrb[0].mxu0
    %v5623 = vadd.f32 %v5580, %v5622
    %v5624 = vpop.f32.mrb[0].mxu0
    %v5625 = vadd.f32 %v5582, %v5624
    %5626 = vdwg.mxu0
    %5627 = vmatprep.subr.bf16.mxu0 %v5179
    %5628 = vmatpush1.bf16.msra.mxu0 %v5178
    %5629 = vmatprep.subr.bf16.mxu0 %v5183
    %5630 = vmatpush1.bf16.msra.mxu0 %v5182
    %5631 = vmatprep.subr.bf16.mxu0 %v5187
    %5632 = vmatpush1.bf16.msra.mxu0 %v5186
    %5633 = vmatprep.subr.bf16.mxu0 %v5191
    %5634 = vmatpush1.bf16.msra.mxu0 %v5190
    %5635 = vmatprep.subr.bf16.mxu0 %v5195
    %5636 = vmatpush1.bf16.msra.mxu0 %v5194
    %5637 = vmatprep.subr.bf16.mxu0 %v5199
    %5638 = vmatpush1.bf16.msra.mxu0 %v5198
    %5639 = vmatprep.subr.bf16.mxu0 %v5203
    %5640 = vmatpush1.bf16.msra.mxu0 %v5202
    %5641 = vmatprep.subr.bf16.mxu0 %v5207
    %5642 = vmatpush1.bf16.msra.mxu0 %v5206
    %5643 = vmatprep.subr.bf16.mxu0 %v5211
    %5644 = vmatpush1.bf16.msra.mxu0 %v5210
    %5645 = vmatprep.subr.bf16.mxu0 %v5215
    %5646 = vmatpush1.bf16.msra.mxu0 %v5214
    %5647 = vmatprep.subr.bf16.mxu0 %v5219
    %5648 = vmatpush1.bf16.msra.mxu0 %v5218
    %5649 = vmatprep.subr.bf16.mxu0 %v5223
    %5650 = vmatpush1.bf16.msra.mxu0 %v5222
    %5651 = vmatprep.subr.bf16.mxu0 %v5227
    %5652 = vmatpush1.bf16.msra.mxu0 %v5226
    %5653 = vmatprep.subr.bf16.mxu0 %v5231
    %5654 = vmatpush1.bf16.msra.mxu0 %v5230
    %5655 = vmatprep.subr.bf16.mxu0 %v5235
    %5656 = vmatpush1.bf16.msra.mxu0 %v5234
    %5657 = vmatprep.subr.bf16.mxu0 %v5239
    %5658 = vmatpush1.bf16.msra.mxu0 %v5238
    %5659 = vmatprep.mubr.bf16.mxu0 %v3939
    %5660 = vmatmul.mubr.bf16.gmra.mrb[0].mxu0 %v3938
    %v5661 = vpop.f32.mrb[0].mxu0
    %v5662 = vadd.f32 %v5619, %v5661
    %v5663 = vpop.f32.mrb[0].mxu0
    %v5664 = vadd.f32 %v5621, %v5663
    %v5665 = vpop.f32.mrb[0].mxu0
    %v5666 = vadd.f32 %v5623, %v5665
    %v5667 = vpop.f32.mrb[0].mxu0
    %v5668 = vadd.f32 %v5625, %v5667
    %5669 = vdwg.mxu0
    %5670 = vmatprep.subr.bf16.mxu0 %v4989
    %5671 = vmatpush1.bf16.msra.mxu0 %v4988
    %5672 = vmatprep.subr.bf16.mxu0 %v4993
    %5673 = vmatpush1.bf16.msra.mxu0 %v4992
    %5674 = vmatprep.subr.bf16.mxu0 %v4997
    %5675 = vmatpush1.bf16.msra.mxu0 %v4996
    %5676 = vmatprep.subr.bf16.mxu0 %v5001
    %5677 = vmatpush1.bf16.msra.mxu0 %v5000
    %5678 = vmatprep.subr.bf16.mxu0 %v5005
    %5679 = vmatpush1.bf16.msra.mxu0 %v5004
    %5680 = vmatprep.subr.bf16.mxu0 %v5009
    %5681 = vmatpush1.bf16.msra.mxu0 %v5008
    %5682 = vmatprep.subr.bf16.mxu0 %v5013
    %5683 = vmatpush1.bf16.msra.mxu0 %v5012
    %5684 = vmatprep.subr.bf16.mxu0 %v5017
    %5685 = vmatpush1.bf16.msra.mxu0 %v5016
    %5686 = vmatprep.subr.bf16.mxu0 %v5021
    %5687 = vmatpush1.bf16.msra.mxu0 %v5020
    %5688 = vmatprep.subr.bf16.mxu0 %v5025
    %5689 = vmatpush1.bf16.msra.mxu0 %v5024
    %5690 = vmatprep.subr.bf16.mxu0 %v5029
    %5691 = vmatpush1.bf16.msra.mxu0 %v5028
    %5692 = vmatprep.subr.bf16.mxu0 %v5033
    %5693 = vmatpush1.bf16.msra.mxu0 %v5032
    %5694 = vmatprep.subr.bf16.mxu0 %v5037
    %5695 = vmatpush1.bf16.msra.mxu0 %v5036
    %5696 = vmatprep.subr.bf16.mxu0 %v5041
    %5697 = vmatpush1.bf16.msra.mxu0 %v5040
    %5698 = vmatprep.subr.bf16.mxu0 %v5045
    %5699 = vmatpush1.bf16.msra.mxu0 %v5044
    %5700 = vmatprep.subr.bf16.mxu0 %v5049
    %5701 = vmatpush1.bf16.msra.mxu0 %v5048
    %5702 = vmatprep.mubr.bf16.mxu0 %v3933
    %5703 = vmatmul.mubr.bf16.gmra.mrb[0].mxu0 %v3932
    %v5704 = vpop.f32.mrb[0].mxu0
    %v5705 = vadd.f32 %v4209, %v5704
    %v5706 = vpop.f32.mrb[0].mxu0
    %v5707 = vadd.f32 %v4213, %v5706
    %v5708 = vpop.f32.mrb[0].mxu0
    %v5709 = vadd.f32 %v4209, %v5708
    %v5710 = vpop.f32.mrb[0].mxu0
    %v5711 = vadd.f32 %v4213, %v5710
    %5712 = vdwg.mxu0
    %5713 = vmatprep.subr.bf16.mxu0 %v5053
    %5714 = vmatpush1.bf16.msra.mxu0 %v5052
    %5715 = vmatprep.subr.bf16.mxu0 %v5057
    %5716 = vmatpush1.bf16.msra.mxu0 %v5056
    %5717 = vmatprep.subr.bf16.mxu0 %v5061
    %5718 = vmatpush1.bf16.msra.mxu0 %v5060
    %5719 = vmatprep.subr.bf16.mxu0 %v5065
    %5720 = vmatpush1.bf16.msra.mxu0 %v5064
    %5721 = vmatprep.subr.bf16.mxu0 %v5069
    %5722 = vmatpush1.bf16.msra.mxu0 %v5068
    %5723 = vmatprep.subr.bf16.mxu0 %v5073
    %5724 = vmatpush1.bf16.msra.mxu0 %v5072
    %5725 = vmatprep.subr.bf16.mxu0 %v5077
    %5726 = vmatpush1.bf16.msra.mxu0 %v5076
    %5727 = vmatprep.subr.bf16.mxu0 %v5081
    %5728 = vmatpush1.bf16.msra.mxu0 %v5080
    %5729 = vmatprep.subr.bf16.mxu0 %v5085
    %5730 = vmatpush1.bf16.msra.mxu0 %v5084
    %5731 = vmatprep.subr.bf16.mxu0 %v5089
    %5732 = vmatpush1.bf16.msra.mxu0 %v5088
    %5733 = vmatprep.subr.bf16.mxu0 %v5093
    %5734 = vmatpush1.bf16.msra.mxu0 %v5092
    %5735 = vmatprep.subr.bf16.mxu0 %v5097
    %5736 = vmatpush1.bf16.msra.mxu0 %v5096
    %5737 = vmatprep.subr.bf16.mxu0 %v5101
    %5738 = vmatpush1.bf16.msra.mxu0 %v5100
    %5739 = vmatprep.subr.bf16.mxu0 %v5105
    %5740 = vmatpush1.bf16.msra.mxu0 %v5104
    %5741 = vmatprep.subr.bf16.mxu0 %v5109
    %5742 = vmatpush1.bf16.msra.mxu0 %v5108
    %5743 = vmatprep.subr.bf16.mxu0 %v5113
    %5744 = vmatpush1.bf16.msra.mxu0 %v5112
    %5745 = vmatprep.mubr.bf16.mxu0 %v3935
    %5746 = vmatmul.mubr.bf16.gmra.mrb[0].mxu0 %v3934
    %v5747 = vpop.f32.mrb[0].mxu0
    %v5748 = vadd.f32 %v5705, %v5747
    %v5749 = vpop.f32.mrb[0].mxu0
    %v5750 = vadd.f32 %v5707, %v5749
    %v5751 = vpop.f32.mrb[0].mxu0
    %v5752 = vadd.f32 %v5709, %v5751
    %v5753 = vpop.f32.mrb[0].mxu0
    %v5754 = vadd.f32 %v5711, %v5753
    %5755 = vdwg.mxu0
    %5756 = vmatprep.subr.bf16.mxu0 %v5117
    %5757 = vmatpush1.bf16.msra.mxu0 %v5116
    %5758 = vmatprep.subr.bf16.mxu0 %v5121
    %5759 = vmatpush1.bf16.msra.mxu0 %v5120
    %5760 = vmatprep.subr.bf16.mxu0 %v5125
    %5761 = vmatpush1.bf16.msra.mxu0 %v5124
    %5762 = vmatprep.subr.bf16.mxu0 %v5129
    %5763 = vmatpush1.bf16.msra.mxu0 %v5128
    %5764 = vmatprep.subr.bf16.mxu0 %v5133
    %5765 = vmatpush1.bf16.msra.mxu0 %v5132
    %5766 = vmatprep.subr.bf16.mxu0 %v5137
    %5767 = vmatpush1.bf16.msra.mxu0 %v5136
    %5768 = vmatprep.subr.bf16.mxu0 %v5141
    %5769 = vmatpush1.bf16.msra.mxu0 %v5140
    %5770 = vmatprep.subr.bf16.mxu0 %v5145
    %5771 = vmatpush1.bf16.msra.mxu0 %v5144
    %5772 = vmatprep.subr.bf16.mxu0 %v5149
    %5773 = vmatpush1.bf16.msra.mxu0 %v5148
    %5774 = vmatprep.subr.bf16.mxu0 %v5153
    %5775 = vmatpush1.bf16.msra.mxu0 %v5152
    %5776 = vmatprep.subr.bf16.mxu0 %v5157
    %5777 = vmatpush1.bf16.msra.mxu0 %v5156
    %5778 = vmatprep.subr.bf16.mxu0 %v5161
    %5779 = vmatpush1.bf16.msra.mxu0 %v5160
    %5780 = vmatprep.subr.bf16.mxu0 %v5165
    %5781 = vmatpush1.bf16.msra.mxu0 %v5164
    %5782 = vmatprep.subr.bf16.mxu0 %v5169
    %5783 = vmatpush1.bf16.msra.mxu0 %v5168
    %5784 = vmatprep.subr.bf16.mxu0 %v5173
    %5785 = vmatpush1.bf16.msra.mxu0 %v5172
    %5786 = vmatprep.subr.bf16.mxu0 %v5177
    %5787 = vmatpush1.bf16.msra.mxu0 %v5176
    %5788 = vmatprep.mubr.bf16.mxu0 %v3937
    %5789 = vmatmul.mubr.bf16.gmra.mrb[0].mxu0 %v3936
    %v5790 = vpop.f32.mrb[0].mxu0
    %v5791 = vadd.f32 %v5748, %v5790
    %v5792 = vpop.f32.mrb[0].mxu0
    %v5793 = vadd.f32 %v5750, %v5792
    %v5794 = vpop.f32.mrb[0].mxu0
    %v5795 = vadd.f32 %v5752, %v5794
    %v5796 = vpop.f32.mrb[0].mxu0
    %v5797 = vadd.f32 %v5754, %v5796
    %5798 = vdwg.mxu0
    %5799 = vmatprep.subr.bf16.mxu0 %v5181
    %5800 = vmatpush1.bf16.msra.mxu0 %v5180
    %5801 = vmatprep.subr.bf16.mxu0 %v5185
    %5802 = vmatpush1.bf16.msra.mxu0 %v5184
    %5803 = vmatprep.subr.bf16.mxu0 %v5189
    %5804 = vmatpush1.bf16.msra.mxu0 %v5188
    %5805 = vmatprep.subr.bf16.mxu0 %v5193
    %5806 = vmatpush1.bf16.msra.mxu0 %v5192
    %5807 = vmatprep.subr.bf16.mxu0 %v5197
    %5808 = vmatpush1.bf16.msra.mxu0 %v5196
    %5809 = vmatprep.subr.bf16.mxu0 %v5201
    %5810 = vmatpush1.bf16.msra.mxu0 %v5200
    %5811 = vmatprep.subr.bf16.mxu0 %v5205
    %5812 = vmatpush1.bf16.msra.mxu0 %v5204
    %5813 = vmatprep.subr.bf16.mxu0 %v5209
    %5814 = vmatpush1.bf16.msra.mxu0 %v5208
    %5815 = vmatprep.subr.bf16.mxu0 %v5213
    %5816 = vmatpush1.bf16.msra.mxu0 %v5212
    %5817 = vmatprep.subr.bf16.mxu0 %v5217
    %5818 = vmatpush1.bf16.msra.mxu0 %v5216
    %5819 = vmatprep.subr.bf16.mxu0 %v5221
    %5820 = vmatpush1.bf16.msra.mxu0 %v5220
    %5821 = vmatprep.subr.bf16.mxu0 %v5225
    %5822 = vmatpush1.bf16.msra.mxu0 %v5224
    %5823 = vmatprep.subr.bf16.mxu0 %v5229
    %5824 = vmatpush1.bf16.msra.mxu0 %v5228
    %5825 = vmatprep.subr.bf16.mxu0 %v5233
    %5826 = vmatpush1.bf16.msra.mxu0 %v5232
    %5827 = vmatprep.subr.bf16.mxu0 %v5237
    %5828 = vmatpush1.bf16.msra.mxu0 %v5236
    %5829 = vmatprep.subr.bf16.mxu0 %v5241
    %5830 = vmatpush1.bf16.msra.mxu0 %v5240
    %5831 = vmatprep.mubr.bf16.mxu0 %v3939
    %5832 = vmatmul.mubr.bf16.gmra.mrb[0].mxu0 %v3938
    %v5833 = vpop.f32.mrb[0].mxu0
    %v5834 = vadd.f32 %v5791, %v5833
    %v5835 = vpop.f32.mrb[0].mxu0
    %v5836 = vadd.f32 %v5793, %v5835
    %v5837 = vpop.f32.mrb[0].mxu0
    %v5838 = vadd.f32 %v5795, %v5837
    %v5839 = vpop.f32.mrb[0].mxu0
    %v5840 = vadd.f32 %v5797, %v5839
    %5841 = vdwg.mxu0
    %vm5842 = vcmp.gt.f32.partialorder %v5662, 0.0
    %vm5843 = vcmp.gt.f32.partialorder %v5664, 0.0
    %vm5844 = vcmp.gt.f32.partialorder %v5834, 0.0
    %vm5845 = vcmp.gt.f32.partialorder %v5836, 0.0
    %vm5846 = vcmp.gt.f32.partialorder %v5666, 0.0
    %vm5847 = vcmp.gt.f32.partialorder %v5668, 0.0
    %vm5848 = vcmp.gt.f32.partialorder %v5838, 0.0
    %vm5849 = vcmp.gt.f32.partialorder %v5840, 0.0
    %v5850 = vmin.f32 %v5662, 0.0
    %v5851 = vmin.f32 %v5664, 0.0
    %v5852 = vmin.f32 %v5834, 0.0
    %v5853 = vmin.f32 %v5836, 0.0
    %v5854 = vmin.f32 %v5666, 0.0
    %v5855 = vmin.f32 %v5668, 0.0
    %v5856 = vmin.f32 %v5838, 0.0
    %v5857 = vmin.f32 %v5840, 0.0
    %v5858 = vmul.f32 %v5850, 1.442695
    %v5859 = vpow.pop %v5858
    %v5860 = vmul.f32 %v5851, 1.442695
    %v5861 = vpow.pop %v5860
    %v5862 = vmul.f32 %v5852, 1.442695
    %v5863 = vpow.pop %v5862
    %v5864 = vmul.f32 %v5853, 1.442695
    %v5865 = vpow.pop %v5864
    %v5866 = vmul.f32 %v5854, 1.442695
    %v5867 = vpow.pop %v5866
    %v5868 = vmul.f32 %v5855, 1.442695
    %v5869 = vpow.pop %v5868
    %v5870 = vmul.f32 %v5856, 1.442695
    %v5871 = vpow.pop %v5870
    %v5872 = vmul.f32 %v5857, 1.442695
    %v5873 = vpow.pop %v5872
    %v5874 = vsub.f32 %v5859, 1.0
    %v5875 = vsub.f32 %v5861, 1.0
    %v5876 = vsub.f32 %v5863, 1.0
    %v5877 = vsub.f32 %v5865, 1.0
    %v5878 = vsub.f32 %v5867, 1.0
    %v5879 = vsub.f32 %v5869, 1.0
    %v5880 = vsub.f32 %v5871, 1.0
    %v5881 = vsub.f32 %v5873, 1.0
    %v5882 = vmul.f32 %v5874, 1.6732632
    %v5883 = vmul.f32 %v5875, 1.6732632
    %v5884 = vmul.f32 %v5876, 1.6732632
    %v5885 = vmul.f32 %v5877, 1.6732632
    %v5886 = vmul.f32 %v5878, 1.6732632
    %v5887 = vmul.f32 %v5879, 1.6732632
    %v5888 = vmul.f32 %v5880, 1.6732632
    %v5889 = vmul.f32 %v5881, 1.6732632
    %v5890 = vsel %vm5842, %v5662, %v5882
    %v5891 = vsel %vm5843, %v5664, %v5883
    %v5892 = vsel %vm5844, %v5834, %v5884
    %v5893 = vsel %vm5845, %v5836, %v5885
    %v5894 = vsel %vm5846, %v5666, %v5886
    %v5895 = vsel %vm5847, %v5668, %v5887
    %v5896 = vsel %vm5848, %v5838, %v5888
    %v5897 = vsel %vm5849, %v5840, %v5889
    %v5898 = vmul.f32 %v5890, 1.050701
    %v5899 = vmul.f32 %v5891, 1.050701
    %v5900 = vmul.f32 %v5892, 1.050701
    %v5901 = vmul.f32 %v5893, 1.050701
    %v5902 = vmul.f32 %v5894, 1.050701
    %v5903 = vmul.f32 %v5895, 1.050701
    %v5904 = vmul.f32 %v5896, 1.050701
    %v5905 = vmul.f32 %v5897, 1.050701
    %v5906 = vpack.c.bf16 %v5902, %v5898
    %v5907 = vpack.c.bf16 %v5903, %v5899
    %v5908 = vpack.c.bf16 %v5904, %v5900
    %v5909 = vpack.c.bf16 %v5905, %v5901
    %v5910 = vld [vmem:[#allocation14] sm:$0xf]
    %v5911 = vld [vmem:[#allocation14 + $0x4] sm:$0xf]
    %v5912 = vld [vmem:[#allocation14 + $0x8] sm:$0xf]
    %v5913 = vld [vmem:[#allocation14 + $0xc] sm:$0xf]
    %v5914 = vld [vmem:[#allocation14 + $0x10] sm:$0xf]
    %v5915 = vld [vmem:[#allocation14 + $0x14] sm:$0xf]
    %v5916 = vld [vmem:[#allocation14 + $0x18] sm:$0xf]
    %v5917 = vld [vmem:[#allocation14 + $0x1c] sm:$0xf]
    %v5918 = vld [vmem:[#allocation14 + $0x20] sm:$0xf]
    %v5919 = vld [vmem:[#allocation14 + $0x24] sm:$0xf]
    %v5920 = vld [vmem:[#allocation14 + $0x28] sm:$0xf]
    %v5921 = vld [vmem:[#allocation14 + $0x2c] sm:$0xf]
    %v5922 = vld [vmem:[#allocation14 + $0x30] sm:$0xf]
    %v5923 = vld [vmem:[#allocation14 + $0x34] sm:$0xf]
    %v5924 = vld [vmem:[#allocation14 + $0x38] sm:$0xf]
    %v5925 = vld [vmem:[#allocation14 + $0x3c] sm:$0xf]
    %v5926 = vld [vmem:[#allocation14 + $0x40] sm:$0xf]
    %v5927 = vld [vmem:[#allocation14 + $0x44] sm:$0xf]
    %v5928 = vld [vmem:[#allocation14 + $0x48] sm:$0xf]
    %v5929 = vld [vmem:[#allocation14 + $0x4c] sm:$0xf]
    %v5930 = vld [vmem:[#allocation14 + $0x50] sm:$0xf]
    %v5931 = vld [vmem:[#allocation14 + $0x54] sm:$0xf]
    %v5932 = vld [vmem:[#allocation14 + $0x58] sm:$0xf]
    %v5933 = vld [vmem:[#allocation14 + $0x5c] sm:$0xf]
    %v5934 = vld [vmem:[#allocation14 + $0x60] sm:$0xf]
    %v5935 = vld [vmem:[#allocation14 + $0x64] sm:$0xf]
    %v5936 = vld [vmem:[#allocation14 + $0x68] sm:$0xf]
    %v5937 = vld [vmem:[#allocation14 + $0x6c] sm:$0xf]
    %v5938 = vld [vmem:[#allocation14 + $0x70] sm:$0xf]
    %v5939 = vld [vmem:[#allocation14 + $0x74] sm:$0xf]
    %v5940 = vld [vmem:[#allocation14 + $0x78] sm:$0xf]
    %v5941 = vld [vmem:[#allocation14 + $0x7c] sm:$0xf]
    %v5942 = vld [vmem:[#allocation14 + $0x80] sm:$0xf]
    %v5943 = vld [vmem:[#allocation14 + $0x84] sm:$0xf]
    %v5944 = vld [vmem:[#allocation14 + $0x88] sm:$0xf]
    %v5945 = vld [vmem:[#allocation14 + $0x8c] sm:$0xf]
    %v5946 = vld [vmem:[#allocation14 + $0x90] sm:$0xf]
    %v5947 = vld [vmem:[#allocation14 + $0x94] sm:$0xf]
    %v5948 = vld [vmem:[#allocation14 + $0x98] sm:$0xf]
    %v5949 = vld [vmem:[#allocation14 + $0x9c] sm:$0xf]
    %v5950 = vld [vmem:[#allocation14 + $0xa0] sm:$0xf]
    %v5951 = vld [vmem:[#allocation14 + $0xa4] sm:$0xf]
    %v5952 = vld [vmem:[#allocation14 + $0xa8] sm:$0xf]
    %v5953 = vld [vmem:[#allocation14 + $0xac] sm:$0xf]
    %v5954 = vld [vmem:[#allocation14 + $0xb0] sm:$0xf]
    %v5955 = vld [vmem:[#allocation14 + $0xb4] sm:$0xf]
    %v5956 = vld [vmem:[#allocation14 + $0xb8] sm:$0xf]
    %v5957 = vld [vmem:[#allocation14 + $0xbc] sm:$0xf]
    %v5958 = vld [vmem:[#allocation14 + $0xc0] sm:$0xf]
    %v5959 = vld [vmem:[#allocation14 + $0xc4] sm:$0xf]
    %v5960 = vld [vmem:[#allocation14 + $0xc8] sm:$0xf]
    %v5961 = vld [vmem:[#allocation14 + $0xcc] sm:$0xf]
    %v5962 = vld [vmem:[#allocation14 + $0xd0] sm:$0xf]
    %v5963 = vld [vmem:[#allocation14 + $0xd4] sm:$0xf]
    %v5964 = vld [vmem:[#allocation14 + $0xd8] sm:$0xf]
    %v5965 = vld [vmem:[#allocation14 + $0xdc] sm:$0xf]
    %v5966 = vld [vmem:[#allocation14 + $0xe0] sm:$0xf]
    %v5967 = vld [vmem:[#allocation14 + $0xe4] sm:$0xf]
    %v5968 = vld [vmem:[#allocation14 + $0xe8] sm:$0xf]
    %v5969 = vld [vmem:[#allocation14 + $0xec] sm:$0xf]
    %v5970 = vld [vmem:[#allocation14 + $0xf0] sm:$0xf]
    %v5971 = vld [vmem:[#allocation14 + $0xf4] sm:$0xf]
    %v5972 = vld [vmem:[#allocation14 + $0xf8] sm:$0xf]
    %v5973 = vld [vmem:[#allocation14 + $0xfc] sm:$0xf]
    %v5974 = vld [vmem:[%s12] sm:$0x1]
    %v5976 = vlaneseq
    %v5977 = vshrl.u32 %v5976, 7
    %v5978 = vsub.s32 0, %v5977
    %v5979 = vrot.slane %v5974, %v5978
    %v6045 = vunpack.c.l.b16 %v5910
    %v6046 = vunpack.c.l.b16 %v5911
    %v6047 = vunpack.c.l.b16 %v5912
    %v6048 = vunpack.c.l.b16 %v5913
    %v6049 = vunpack.c.l.b16 %v5914
    %v6050 = vunpack.c.l.b16 %v5915
    %v6051 = vunpack.c.l.b16 %v5916
    %v6052 = vunpack.c.l.b16 %v5917
    %v6053 = vunpack.c.l.b16 %v5918
    %v6054 = vunpack.c.l.b16 %v5919
    %v6055 = vunpack.c.l.b16 %v5920
    %v6056 = vunpack.c.l.b16 %v5921
    %v6057 = vunpack.c.l.b16 %v5922
    %v6058 = vunpack.c.l.b16 %v5923
    %v6059 = vunpack.c.l.b16 %v5924
    %v6060 = vunpack.c.l.b16 %v5925
    %v6061 = vunpack.c.l.b16 %v5926
    %v6062 = vunpack.c.l.b16 %v5927
    %v6063 = vunpack.c.l.b16 %v5928
    %v6064 = vunpack.c.l.b16 %v5929
    %v6065 = vunpack.c.l.b16 %v5930
    %v6066 = vunpack.c.l.b16 %v5931
    %v6067 = vunpack.c.l.b16 %v5932
    %v6068 = vunpack.c.l.b16 %v5933
    %v6069 = vunpack.c.l.b16 %v5934
    %v6070 = vunpack.c.l.b16 %v5935
    %v6071 = vunpack.c.l.b16 %v5936
    %v6072 = vunpack.c.l.b16 %v5937
    %v6073 = vunpack.c.l.b16 %v5938
    %v6074 = vunpack.c.l.b16 %v5939
    %v6075 = vunpack.c.l.b16 %v5940
    %v6076 = vunpack.c.l.b16 %v5941
    %v6077 = vunpack.c.l.b16 %v5942
    %v6078 = vunpack.c.l.b16 %v5943
    %v6079 = vunpack.c.l.b16 %v5944
    %v6080 = vunpack.c.l.b16 %v5945
    %v6081 = vunpack.c.l.b16 %v5946
    %v6082 = vunpack.c.l.b16 %v5947
    %v6083 = vunpack.c.l.b16 %v5948
    %v6084 = vunpack.c.l.b16 %v5949
    %v6085 = vunpack.c.l.b16 %v5950
    %v6086 = vunpack.c.l.b16 %v5951
    %v6087 = vunpack.c.l.b16 %v5952
    %v6088 = vunpack.c.l.b16 %v5953
    %v6089 = vunpack.c.l.b16 %v5954
    %v6090 = vunpack.c.l.b16 %v5955
    %v6091 = vunpack.c.l.b16 %v5956
    %v6092 = vunpack.c.l.b16 %v5957
    %v6093 = vunpack.c.l.b16 %v5958
    %v6094 = vunpack.c.l.b16 %v5959
    %v6095 = vunpack.c.l.b16 %v5960
    %v6096 = vunpack.c.l.b16 %v5961
    %v6097 = vunpack.c.l.b16 %v5962
    %v6098 = vunpack.c.l.b16 %v5963
    %v6099 = vunpack.c.l.b16 %v5964
    %v6100 = vunpack.c.l.b16 %v5965
    %v6101 = vunpack.c.l.b16 %v5966
    %v6102 = vunpack.c.l.b16 %v5967
    %v6103 = vunpack.c.l.b16 %v5968
    %v6104 = vunpack.c.l.b16 %v5969
    %v6105 = vunpack.c.l.b16 %v5970
    %v6106 = vunpack.c.l.b16 %v5971
    %v6107 = vunpack.c.l.b16 %v5972
    %v6108 = vunpack.c.l.b16 %v5973
    %v6109 = vpack.c.b16 %v6046, %v6045
    %v6110 = vpack.c.b16 %v6048, %v6047
    %v6111 = vpack.c.b16 %v6050, %v6049
    %v6112 = vpack.c.b16 %v6052, %v6051
    %v6113 = vpack.c.b16 %v6054, %v6053
    %v6114 = vpack.c.b16 %v6056, %v6055
    %v6115 = vpack.c.b16 %v6058, %v6057
    %v6116 = vpack.c.b16 %v6060, %v6059
    %v6117 = vpack.c.b16 %v6062, %v6061
    %v6118 = vpack.c.b16 %v6064, %v6063
    %v6119 = vpack.c.b16 %v6066, %v6065
    %v6120 = vpack.c.b16 %v6068, %v6067
    %v6121 = vpack.c.b16 %v6070, %v6069
    %v6122 = vpack.c.b16 %v6072, %v6071
    %v6123 = vpack.c.b16 %v6074, %v6073
    %v6124 = vpack.c.b16 %v6076, %v6075
    %v6125 = vpack.c.b16 %v6078, %v6077
    %v6126 = vpack.c.b16 %v6080, %v6079
    %v6127 = vpack.c.b16 %v6082, %v6081
    %v6128 = vpack.c.b16 %v6084, %v6083
    %v6129 = vpack.c.b16 %v6086, %v6085
    %v6130 = vpack.c.b16 %v6088, %v6087
    %v6131 = vpack.c.b16 %v6090, %v6089
    %v6132 = vpack.c.b16 %v6092, %v6091
    %v6133 = vpack.c.b16 %v6094, %v6093
    %v6134 = vpack.c.b16 %v6096, %v6095
    %v6135 = vpack.c.b16 %v6098, %v6097
    %v6136 = vpack.c.b16 %v6100, %v6099
    %v6137 = vpack.c.b16 %v6102, %v6101
    %v6138 = vpack.c.b16 %v6104, %v6103
    %v6139 = vpack.c.b16 %v6106, %v6105
    %v6140 = vpack.c.b16 %v6108, %v6107
    %6173 = vmatprep.subr.bf16.mxu0 0
    %6174 = vmatpush1.bf16.msra.mxu0 %v6109
    %6175 = vmatprep.subr.bf16.mxu0 0
    %6176 = vmatpush1.bf16.msra.mxu0 %v6110
    %6177 = vmatprep.subr.bf16.mxu0 0
    %6178 = vmatpush1.bf16.msra.mxu0 %v6111
    %6179 = vmatprep.subr.bf16.mxu0 0
    %6180 = vmatpush1.bf16.msra.mxu0 %v6112
    %6181 = vmatprep.subr.bf16.mxu0 0
    %6182 = vmatpush1.bf16.msra.mxu0 %v6113
    %6183 = vmatprep.subr.bf16.mxu0 0
    %6184 = vmatpush1.bf16.msra.mxu0 %v6114
    %6185 = vmatprep.subr.bf16.mxu0 0
    %6186 = vmatpush1.bf16.msra.mxu0 %v6115
    %6187 = vmatprep.subr.bf16.mxu0 0
    %6188 = vmatpush1.bf16.msra.mxu0 %v6116
    %6189 = vmatprep.subr.bf16.mxu0 0
    %6190 = vmatpush1.bf16.msra.mxu0 %v6117
    %6191 = vmatprep.subr.bf16.mxu0 0
    %6192 = vmatpush1.bf16.msra.mxu0 %v6118
    %6193 = vmatprep.subr.bf16.mxu0 0
    %6194 = vmatpush1.bf16.msra.mxu0 %v6119
    %6195 = vmatprep.subr.bf16.mxu0 0
    %6196 = vmatpush1.bf16.msra.mxu0 %v6120
    %6197 = vmatprep.subr.bf16.mxu0 0
    %6198 = vmatpush1.bf16.msra.mxu0 %v6121
    %6199 = vmatprep.subr.bf16.mxu0 0
    %6200 = vmatpush1.bf16.msra.mxu0 %v6122
    %6201 = vmatprep.subr.bf16.mxu0 0
    %6202 = vmatpush1.bf16.msra.mxu0 %v6123
    %6203 = vmatprep.subr.bf16.mxu0 0
    %6204 = vmatpush1.bf16.msra.mxu0 %v6124
    %6205 = vmatprep.mubr.bf16.mxu0 %v5907
    %6206 = vmatmul.mubr.bf16.gmra.mrb[0].mxu0 %v5906
    %v6207 = vpop.f32.mrb[0].mxu0
    %v6208 = vadd.f32 %v5979, %v6207
    %v6209 = vpop.f32.mrb[0].mxu0
    %v6210 = vpop.f32.mrb[0].mxu0
    %v6211 = vadd.f32 %v5979, %v6210
    %v6212 = vpop.f32.mrb[0].mxu0
    %6213 = vdwg.mxu0
    %6214 = vmatprep.subr.bf16.mxu0 0
    %6215 = vmatpush1.bf16.msra.mxu0 %v6125
    %6216 = vmatprep.subr.bf16.mxu0 0
    %6217 = vmatpush1.bf16.msra.mxu0 %v6126
    %6218 = vmatprep.subr.bf16.mxu0 0
    %6219 = vmatpush1.bf16.msra.mxu0 %v6127
    %6220 = vmatprep.subr.bf16.mxu0 0
    %6221 = vmatpush1.bf16.msra.mxu0 %v6128
    %6222 = vmatprep.subr.bf16.mxu0 0
    %6223 = vmatpush1.bf16.msra.mxu0 %v6129
    %6224 = vmatprep.subr.bf16.mxu0 0
    %6225 = vmatpush1.bf16.msra.mxu0 %v6130
    %6226 = vmatprep.subr.bf16.mxu0 0
    %6227 = vmatpush1.bf16.msra.mxu0 %v6131
    %6228 = vmatprep.subr.bf16.mxu0 0
    %6229 = vmatpush1.bf16.msra.mxu0 %v6132
    %6230 = vmatprep.subr.bf16.mxu0 0
    %6231 = vmatpush1.bf16.msra.mxu0 %v6133
    %6232 = vmatprep.subr.bf16.mxu0 0
    %6233 = vmatpush1.bf16.msra.mxu0 %v6134
    %6234 = vmatprep.subr.bf16.mxu0 0
    %6235 = vmatpush1.bf16.msra.mxu0 %v6135
    %6236 = vmatprep.subr.bf16.mxu0 0
    %6237 = vmatpush1.bf16.msra.mxu0 %v6136
    %6238 = vmatprep.subr.bf16.mxu0 0
    %6239 = vmatpush1.bf16.msra.mxu0 %v6137
    %6240 = vmatprep.subr.bf16.mxu0 0
    %6241 = vmatpush1.bf16.msra.mxu0 %v6138
    %6242 = vmatprep.subr.bf16.mxu0 0
    %6243 = vmatpush1.bf16.msra.mxu0 %v6139
    %6244 = vmatprep.subr.bf16.mxu0 0
    %6245 = vmatpush1.bf16.msra.mxu0 %v6140
    %6246 = vmatprep.mubr.bf16.mxu0 %v5909
    %6247 = vmatmul.mubr.bf16.gmra.mrb[0].mxu0 %v5908
    %v6248 = vpop.f32.mrb[0].mxu0
    %v6249 = vadd.f32 %v6208, %v6248
    %v6250 = vpop.f32.mrb[0].mxu0
    %v6251 = vpop.f32.mrb[0].mxu0
    %v6252 = vadd.f32 %v6211, %v6251
    %v6253 = vpop.f32.mrb[0].mxu0
    %6254 = vdwg.mxu0
    %6255 = vst [vmem:[#allocation16] sm:$0xff] %v6249
    %6256 = vst [vmem:[#allocation16 + $0x8] sm:$0xff] %v6252
    // Predicated region
    $region86: #{tpu_custom_call.1} parent=1 // pred_check
      _
    $region87: #{tpu_custom_call.1} parent=1 // pred_check_branch
      %6258 = sbr.rel (0) target = $region89
    $region88: #{tpu_custom_call.1} parent=1 // pred_region
      %s6260 = ssub.s32 256, 256
      %6261 = vsyncadd [#allocation4], %s6260
      %s6262 = sshll.u32 [#allocation16], 4
      %s6263 = int_to_ptr.vmem [resolvable:$true] %s6262
      %6268 = dma.vmem_to_hbm [thread:$0]  %s6263, 256, %s13, [#allocation4], 128, 128, 8
    $region89: #{tpu_custom_call.1} parent=1 // pred_fallthru
      _
    // Predicated region
    $region90: #{tpu_custom_call.1} parent=1 // pred_check
      _
    $region91: #{tpu_custom_call.1} parent=1 // pred_check_branch
      %6270 = sbr.rel (0) target = $region93
    $region92: #{tpu_custom_call.1} parent=1 // pred_region
      %6271 = dma.done [#allocation4], 256
    $region93: #{tpu_custom_call.1} parent=1 // pred_fallthru
      _
    %6272 = vsyncpa [#allocation3], 1
    %6273 = vsyncpa [#allocation6], 1
    %6274 = vsyncpa [#allocation9], 1
    %6275 = vsyncpa [#allocation12], 1
    %6276 = vsyncpa [#allocation15], 1
    %6277 = vsyncpa [#allocation4], 1

</llo_original>
